<compile_context>
chip_gen: v6e
topology: v6e:2x2x1
jax: 0.10.0
libtpu: 0.0.40
codegen_flags: <defaults>
</compile_context>

<pallas_src>
import functools
import numpy as np
import jax
import jax.numpy as jnp
from jax import lax
from jax.experimental import pallas as pl
from jax.experimental.pallas import tpu as pltpu


# ----------------------------------------------------------------------------
# Pallas kernel (B images packed into the lane axis per grid step)
# ----------------------------------------------------------------------------
def _glam_kernel(x_ref, bandw_ref, bandb_ref, wbig_ref, bbig_ref,
                 mask27_ref, vrow_ref, watt2_ref, batt2_ref, sc_ref, o_ref,
                 *, W, HW, HWp, Cr, B, T):
    f32, bf16 = jnp.float32, jnp.bfloat16
    x = x_ref[...]                                     # (C, B*HWp) f32
    C = x.shape[0]
    xb = x.astype(bf16)
    valid = vrow_ref[...]                              # (1, B*HWp) 1/0 lane mask
    fw0, fw1, b2_eff = sc_ref[0], sc_ref[1], sc_ref[2]

    # ---- q / k / v + folded (w2 . dil-conv . 1x1) rows: ONE stacked matmul --
    feats = jnp.dot(wbig_ref[...], xb, preferred_element_type=f32) + bbig_ref[...]
    qs = feats[0:Cr]
    ks = feats[Cr:2 * Cr]
    vs = feats[2 * Cr:3 * Cr]
    rows27 = feats[3 * Cr:3 * Cr + 27]                 # (27, B*HWp)

    # ---- local spatial attention: 27 shift / mask / accumulate passes -------
    m27 = mask27_ref[...]
    spat_pre = jnp.zeros_like(valid)
    idx = 0
    for d in (1, 2, 3):                                # three dilations, summed
        for ky in range(3):
            for kx in range(3):
                s = (ky - 1) * d * W + (kx - 1) * d
                row = rows27[idx:idx + 1]
                if s != 0:
                    row = jnp.roll(row, -s, axis=1)
                spat_pre = spat_pre + row * m27[idx:idx + 1]
                idx += 1
    spat = jax.nn.sigmoid(spat_pre + b2_eff)           # (1, B*HWp)

    # masked value rows with a leading validity row (row 0 of the value matmul
    # gives the valid-p column sums of e2 -> softmax denominator for free)
    vsm = jnp.concatenate([valid, vs * valid], axis=0).astype(bf16)  # (Cr+1, ·)
    qsb = qs.astype(bf16)
    ksb = ks.astype(bf16)
    bandw = bandw_ref[...]
    bandb = bandb_ref[...]
    watt2 = watt2_ref[...]
    batt2 = batt2_ref[...]

    n_chunks = (HWp + T - 1) // T
    for i in range(B):                                 # static, B small
        lo = i * HWp
        x_i = x[:, lo:lo + HWp]                        # (C, HWp)

        # ---- local + global channel attention (per image) -------------------
        gap = jnp.sum(x_i, axis=1, keepdims=True) * (1.0 / float(HW))   # (C,1)
        r = jax.nn.sigmoid(jnp.dot(bandw, gap, preferred_element_type=f32)
                           + bandb)                                     # (3C,1)
        att_lc = r[0:C]
        q_c = r[C:2 * C]
        k_c = r[2 * C:3 * C]
        outer = lax.dot_general(k_c, q_c, (((1,), (1,)), ((), ())),
                                preferred_element_type=f32)             # (C,C)
        e = jnp.exp(outer - jnp.max(outer))
        att_gc = lax.dot_general(e, x_i, (((0,), (0,)), ((), ())),
                                 preferred_element_type=f32) * (1.0 / jnp.sum(e))

        # ---- global spatial attention, chunked over the second HW axis ------
        ks_i = ksb[:, lo:lo + HWp]
        vsm_i = vsm[:, lo:lo + HWp]
        val_i = valid[:, lo:lo + HWp]
        m_c, z_c, av_c = [], [], []
        for j in range(n_chunks):
            c0 = j * T
            cw = min(T, HWp - c0)
            qk = lax.dot_general(ks_i, qsb[:, lo + c0:lo + c0 + cw],
                                 (((0,), (0,)), ((), ())),
                                 preferred_element_type=f32)            # (HWp,cw)
            m_j = jnp.max(qk)
            e2 = jnp.exp(qk - m_j)
            av = jnp.dot(vsm_i, e2.astype(bf16),
                         preferred_element_type=f32)                    # (Cr+1,cw)
            m_c.append(m_j)
            z_c.append(jnp.sum(av[0:1] * val_i[:, c0:c0 + cw]))
            av_c.append(av[1:])
        m_glob = m_c[0]
        for m_j in m_c[1:]:
            m_glob = jnp.maximum(m_glob, m_j)
        corr = [jnp.exp(m_j - m_glob) for m_j in m_c]
        z_tot = z_c[0] * corr[0]
        for j in range(1, n_chunks):
            z_tot = z_tot + z_c[j] * corr[j]
        inv = 1.0 / z_tot
        scaled = [av_c[j] * (corr[j] * inv) for j in range(n_chunks)]
        attv = scaled[0] if n_chunks == 1 else jnp.concatenate(scaled, axis=1)
        atts2 = jnp.dot(watt2, attv.astype(bf16),
                        preferred_element_type=f32) + batt2             # (C,HWp)
        # atts2 == fw2 * (1 + conv1x1_att(attv))  (fw2 folded on the host)

        # ---- fused residual + fusion weights: o = x * multiplier ------------
        loc = (fw0 * (1.0 + att_lc)) * (1.0 + spat[:, lo:lo + HWp]) + fw1
        glb = (1.0 + att_gc) * atts2
        o_ref[:, pl.ds(lo, HWp)] = x_i * (loc + glb)


# ----------------------------------------------------------------------------
# Parameter glue + pallas_call wrapper
# ----------------------------------------------------------------------------
def _band_matrix(w, C):
    """Fold Conv1d(1,1,k,padding=(k-1)//2) over channels into a (C,C) band matrix."""
    K = w.shape[0]
    pad = (K - 1) // 2
    co = jnp.arange(C)[:, None]
    ci = jnp.arange(C)[None, :]
    idx = ci - co + pad
    ok = (idx >= 0) & (idx < K)
    return jnp.where(ok, w[jnp.clip(idx, 0, K - 1)], 0.0).astype(jnp.float32)


def _images_per_step(n, hwp, max_lanes):
    """Largest divisor B of n with B*HWp within the lane budget, keeping at
    least two grid steps when n > 1 (both v7x TensorCores stay busy)."""
    best = 1
    for b in range(1, n + 1):
        if n % b:
            continue
        if b * hwp > max_lanes:
            continue
        if n > 1 and n // b < 2:
            continue
        best = b
    return best


def glam_pallas(x, P, *, r_chunk=2048, max_lanes_per_step=32768):
    N, C, H, W = x.shape
    HW = H * W
    HWp = ((HW + 127) // 128) * 128
    Cr = P['w_ls1'].shape[0]
    f32, bf16 = jnp.float32, jnp.bfloat16

    B = _images_per_step(N, HWp, max_lanes_per_step)
    G = N // B
    L = B * HWp
    T = min(HWp, ((max(r_chunk, 128) + 127) // 128) * 128)

    # --- stacked channel band matrices + biases (local / global-q / global-k)
    band_w = jnp.concatenate([_band_matrix(P['w_lc'], C),
                              _band_matrix(P['w_gq'], C),
                              _band_matrix(P['w_gk'], C)], axis=0)          # (3C,C)
    band_b = jnp.concatenate([jnp.full((C, 1), P['b_lc']),
                              jnp.full((C, 1), P['b_gq']),
                              jnp.full((C, 1), P['b_gk'])], axis=0).astype(f32)

    # --- fold conv1x1_2 and conv1x1_1 into the dilated convs ------------------
    # dil_w axes: (dilation, out, in, ky, kx) -> (out, dilation, ky, kx, in)
    dilw = jnp.transpose(P['dil_w'].astype(f32), (1, 0, 3, 4, 2)).reshape(Cr, 27 * Cr)
    w2 = P['w_ls2'].astype(f32)                                             # (1,Cr)
    w2dil27 = (w2 @ dilw).reshape(27, Cr)                                   # (27,Cr)
    W27 = w2dil27 @ P['w_ls1'].astype(f32)                                  # (27,C)
    b27 = w2dil27 @ P['b_ls1'].astype(f32)[:, None]                         # (27,1)
    b2_eff = (w2 @ P['dil_b'].astype(f32).sum(0)[:, None])[0, 0] \
        + P['b_ls2'].astype(f32)[0]

    # --- stacked q / k / v / folded-tap weights (bf16 for the MXU) ------------
    wbig = jnp.concatenate([P['w_gsq'].astype(f32), P['w_gsk'].astype(f32),
                            P['w_gsv'].astype(f32), W27], axis=0).astype(bf16)
    bbig = jnp.concatenate([P['b_gsq'][:, None], P['b_gsk'][:, None],
                            P['b_gsv'][:, None], b27], axis=0).astype(f32)  # (3Cr+27,1)

    fw = jax.nn.softmax(P['fusion'].astype(f32))                            # (3,)
    watt2 = (fw[2] * P['w_att'].astype(f32)).astype(bf16)                   # (C,Cr)
    batt2 = (fw[2] * (P['b_att'].astype(f32)[:, None] + 1.0)).astype(f32)   # (C,1)
    sc = jnp.stack([fw[0], fw[1], b2_eff]).astype(f32)                      # SMEM (3,)

    # --- host-built boundary masks for the 27 taps + valid-lane mask ----------
    pp = np.arange(HWp)
    hh, ww = pp // W, pp % W
    masks = []
    for d in (1, 2, 3):
        for ky in range(3):
            for kx in range(3):
                dy, dx = (ky - 1) * d, (kx - 1) * d
                masks.append((pp < HW) & (hh + dy >= 0) & (hh + dy < H) &
                             (ww + dx >= 0) & (ww + dx < W))
    m27_img = np.stack(masks).astype(np.float32)                            # (27,HWp)
    mask27 = jnp.asarray(np.tile(m27_img, (1, B)))                          # (27,L)
    vrow = jnp.asarray(np.tile((pp < HW).astype(np.float32)[None, :], (1, B)))

    # --- pack batch into the lane axis: (C, N*HWp) -----------------------------
    x_flat = x.reshape(N, C, HW).astype(f32)
    if HWp != HW:
        x_flat = jnp.pad(x_flat, ((0, 0), (0, 0), (0, HWp - HW)))
    x_packed = jnp.transpose(x_flat, (1, 0, 2)).reshape(C, N * HWp)

    kernel = functools.partial(_glam_kernel, W=W, HW=HW, HWp=HWp, Cr=Cr, B=B, T=T)
    smem = pl.BlockSpec(memory_space=pltpu.MemorySpace.SMEM)
    nbig = 3 * Cr + 27

    flops = int(N * (2 * Cr * HWp * HWp + 2 * (Cr + 1) * HWp * HWp
                     + 2 * C * Cr * HWp + 2 * nbig * C * HWp + 2 * C * C * HWp))
    transc = int(N * (HWp * HWp + HWp + C * C + 3 * C))
    bytes_acc = int(2 * N * C * HWp * 4 + G * 28 * L * 4
                    + (3 * C * C + nbig * C + nbig + C * Cr + C + 3) * 4)

    out = pl.pallas_call(
        kernel,
        out_shape=jax.ShapeDtypeStruct((C, N * HWp), f32),
        grid_spec=pltpu.PrefetchScalarGridSpec(
            num_scalar_prefetch=0,
            grid=(G,),
            in_specs=[
                pl.BlockSpec((C, L), lambda g: (0, g)),          # packed x
                pl.BlockSpec((3 * C, C), lambda g: (0, 0)),      # band matrices
                pl.BlockSpec((3 * C, 1), lambda g: (0, 0)),      # band biases
                pl.BlockSpec((nbig, C), lambda g: (0, 0)),       # q/k/v + folded taps
                pl.BlockSpec((nbig, 1), lambda g: (0, 0)),       # their biases
                pl.BlockSpec((27, L), lambda g: (0, 0)),         # tap boundary masks
                pl.BlockSpec((1, L), lambda g: (0, 0)),          # valid-lane mask
                pl.BlockSpec((C, Cr), lambda g: (0, 0)),         # fw2 * conv1x1_att W
                pl.BlockSpec((C, 1), lambda g: (0, 0)),          # fw2 * (bias + 1)
                smem,                                            # [fw0, fw1, b2_eff]
            ],
            out_specs=pl.BlockSpec((C, L), lambda g: (0, g)),
        ),
        compiler_params=pltpu.CompilerParams(
            dimension_semantics=("parallel",),
            vmem_limit_bytes=48 * 1024 * 1024),
        cost_estimate=pl.CostEstimate(flops=flops, transcendentals=transc,
                                      bytes_accessed=bytes_acc),
    )(x_packed, band_w, band_b, wbig, bbig, mask27, vrow, watt2, batt2, sc)

    out = out.reshape(C, N, HWp)[:, :, :HW]
    return jnp.transpose(out, (1, 0, 2)).reshape(N, C, H, W)


# ----------------------------------------------------------------------------
# Pure-JAX reference (mirrors the PyTorch GLAM forward) for validation
# ----------------------------------------------------------------------------
def glam_reference(x, P):
    N, C, H, W = x.shape
    Cr = P['w_ls1'].shape[0]
    HW = H * W
    gap = x.mean(axis=(2, 3))                                   # (N, C)

    def conv1d(g, w, b):
        k = w.shape[0]
        pad = (k - 1) // 2
        gp = jnp.pad(g, ((0, 0), (pad, pad)))
        return sum(w[j] * gp[:, j:j + C] for j in range(k)) + b

    def conv1x1(z, w, b):
        return jnp.einsum('oc,nchw->nohw', w, z) + b[None, :, None, None]

    # local channel attention
    att_lc = jax.nn.sigmoid(conv1d(gap, P['w_lc'], P['b_lc']))
    lc = x * att_lc[:, :, None, None] + x

    # global channel attention
    q = jax.nn.sigmoid(conv1d(gap, P['w_gq'], P['b_gq']))
    kk = jax.nn.sigmoid(conv1d(gap, P['w_gk'], P['b_gk']))
    outer = kk[:, :, None] * q[:, None, :]
    A = jax.nn.softmax(outer.reshape(N, -1), -1).reshape(N, C, C)
    xv = x.reshape(N, C, HW)
    att_g = jnp.einsum('nic,nip->ncp', A, xv).reshape(N, C, H, W)
    gc = x * att_g + x

    # local spatial attention
    att0 = conv1x1(x, P['w_ls1'], P['b_ls1'])
    dsum = jnp.zeros_like(att0)
    for i, d in enumerate((1, 2, 3)):
        dsum = dsum + lax.conv_general_dilated(
            att0, P['dil_w'][i], (1, 1), [(d, d), (d, d)], rhs_dilation=(d, d),
            dimension_numbers=('NCHW', 'OIHW', 'NCHW')) + P['dil_b'][i][None, :, None, None]
    spat = jax.nn.sigmoid(conv1x1(dsum, P['w_ls2'], P['b_ls2']))
    local_att = lc * spat + lc

    # global spatial attention
    qs = conv1x1(x, P['w_gsq'], P['b_gsq']).reshape(N, Cr, HW)
    ksp = conv1x1(x, P['w_gsk'], P['b_gsk']).reshape(N, Cr, HW)
    vs = conv1x1(x, P['w_gsv'], P['b_gsv']).reshape(N, Cr, HW)
    qk = jnp.einsum('ncp,ncr->npr', ksp, qs)
    A2 = jax.nn.softmax(qk.reshape(N, -1), -1).reshape(N, HW, HW)
    attv = jnp.einsum('ncp,npr->ncr', vs, A2).reshape(N, Cr, H, W)
    atts = conv1x1(attv, P['w_att'], P['b_att'])
    global_att = gc * atts + gc

    fw = jax.nn.softmax(P['fusion'])
    return fw[0] * local_att + fw[1] * x + fw[2] * global_att


# ----------------------------------------------------------------------------
if __name__ == "__main__":
    # N=4 exercises batch lane-packing (2 images / grid step, 2 parallel steps);
    # H=W=14 exercises the padded-lane path (HW=196 -> HWp=256); r_chunk=128
    # exercises the chunked global-spatial softmax (2 chunks).
    N, C, Cr, H, W, K = 4, 8, 4, 14, 14, 3
    key = jax.random.PRNGKey(0)
    keys = jax.random.split(key, 24)
    _it = iter(keys)

    def nrm(shape, scale=0.2):
        return (scale * jax.random.normal(next(_it), shape)).astype(jnp.float32)

    P = {
        'w_lc': nrm((K,)), 'b_lc': nrm(()),
        'w_gq': nrm((K,)), 'b_gq': nrm(()),
        'w_gk': nrm((K,)), 'b_gk': nrm(()),
        'w_ls1': nrm((Cr, C)), 'b_ls1': nrm((Cr,)),
        'w_ls2': nrm((1, Cr)), 'b_ls2': nrm((1,)),
        'dil_w': nrm((3, Cr, Cr, 3, 3)), 'dil_b': nrm((3, Cr)),
        'w_gsq': nrm((Cr, C)), 'b_gsq': nrm((Cr,)),
        'w_gsk': nrm((Cr, C)), 'b_gsk': nrm((Cr,)),
        'w_gsv': nrm((Cr, C)), 'b_gsv': nrm((Cr,)),
        'w_att': nrm((C, Cr)), 'b_att': nrm((C,)),
        'fusion': jnp.array([0.333, 0.333, 0.333], jnp.float32),
    }
    x = jax.random.normal(next(_it), (N, C, H, W), dtype=jnp.float32)

    out = glam_pallas(x, P, r_chunk=128)
    out = jax.block_until_ready(out)

    ref = glam_reference(x, P)
    # bf16 MXU operands -> tolerance loosened vs. the pure-f32 reference.
    np.testing.assert_allclose(np.asarray(out), np.asarray(ref), rtol=3e-2, atol=3e-2)
    print("KERNEL_OK")
</pallas_src>

<mosaic_0001>
module attributes {stable_mosaic.version = 11 : i64} {
  func.func @_glam_kernel(%arg0: i32, %arg1: memref<8x512xf32, #tpu.memory_space<vmem>>, %arg2: memref<24x8xf32, #tpu.memory_space<vmem>>, %arg3: memref<24x1xf32, #tpu.memory_space<vmem>>, %arg4: memref<39x8xbf16, #tpu.memory_space<vmem>>, %arg5: memref<39x1xf32, #tpu.memory_space<vmem>>, %arg6: memref<27x512xf32, #tpu.memory_space<vmem>>, %arg7: memref<1x512xf32, #tpu.memory_space<vmem>>, %arg8: memref<8x4xbf16, #tpu.memory_space<vmem>>, %arg9: memref<8x1xf32, #tpu.memory_space<vmem>>, %arg10: memref<3xf32, #tpu.memory_space<smem>>, %arg11: memref<8x512xf32, #tpu.memory_space<vmem>>) attributes {dimension_semantics = [#tpu.dimension_semantics<parallel>], iteration_bounds = array<i64: 2>, scalar_prefetch = 0 : i64, scratch_operands = 0 : i64, tpu.core_type = #tpu.core_type<tc>, window_params = [{transform_indices = @transform_0, window_bounds = array<i64: 8, 512>}, {pipeline_mode = #tpu.pipeline_mode<synchronous>, transform_indices = @transform_1, window_bounds = array<i64: 24, 8>}, {pipeline_mode = #tpu.pipeline_mode<synchronous>, transform_indices = @transform_2, window_bounds = array<i64: 24, 1>}, {pipeline_mode = #tpu.pipeline_mode<synchronous>, transform_indices = @transform_3, window_bounds = array<i64: 39, 8>}, {pipeline_mode = #tpu.pipeline_mode<synchronous>, transform_indices = @transform_4, window_bounds = array<i64: 39, 1>}, {pipeline_mode = #tpu.pipeline_mode<synchronous>, transform_indices = @transform_5, window_bounds = array<i64: 27, 512>}, {pipeline_mode = #tpu.pipeline_mode<synchronous>, transform_indices = @transform_6, window_bounds = array<i64: 1, 512>}, {pipeline_mode = #tpu.pipeline_mode<synchronous>, transform_indices = @transform_7, window_bounds = array<i64: 8, 4>}, {pipeline_mode = #tpu.pipeline_mode<synchronous>, transform_indices = @transform_8, window_bounds = array<i64: 8, 1>}, {transform_indices = @transform_9, window_bounds = array<i64: 3>}, {transform_indices = @transform_10, window_bounds = array<i64: 8, 512>}]} {
    %c0 = arith.constant 0 : index
    %c0_0 = arith.constant 0 : index
    %0 = vector.load %arg1[%c0, %c0_0] : memref<8x512xf32, #tpu.memory_space<vmem>>, vector<8x512xf32>
    %1 = arith.truncf %0 : vector<8x512xf32> to vector<8x512xbf16>
    %c0_1 = arith.constant 0 : index
    %c0_2 = arith.constant 0 : index
    %2 = vector.load %arg7[%c0_1, %c0_2] : memref<1x512xf32, #tpu.memory_space<vmem>>, vector<1x512xf32>
    %c0_3 = arith.constant 0 : index
    %3 = memref.load %arg10[%c0_3] : memref<3xf32, #tpu.memory_space<smem>>
    %c1 = arith.constant 1 : index
    %4 = memref.load %arg10[%c1] : memref<3xf32, #tpu.memory_space<smem>>
    %c2 = arith.constant 2 : index
    %5 = memref.load %arg10[%c2] : memref<3xf32, #tpu.memory_space<smem>>
    %c0_4 = arith.constant 0 : index
    %c0_5 = arith.constant 0 : index
    %6 = vector.load %arg4[%c0_4, %c0_5] : memref<39x8xbf16, #tpu.memory_space<vmem>>, vector<39x8xbf16>
    %cst = arith.constant dense<0.000000e+00> : vector<39x512xf32>
    %7 = tpu.matmul %6, %1, %cst {dimension_numbers = #tpu.dot_dimension_numbers<[1], [0], [0], [1], [0, 0, 1, 1], [], []>} : vector<39x8xbf16>, vector<8x512xbf16>, vector<39x512xf32> -> vector<39x512xf32>
    %c0_6 = arith.constant 0 : index
    %c0_7 = arith.constant 0 : index
    %8 = vector.load %arg5[%c0_6, %c0_7] : memref<39x1xf32, #tpu.memory_space<vmem>>, vector<39x1xf32>
    %9 = vector.broadcast %8 : vector<39x1xf32> to vector<39x512xf32>
    %10 = arith.addf %7, %9 : vector<39x512xf32>
    %11 = vector.extract_strided_slice %10 {offsets = [0, 0], sizes = [4, 512], strides = [1, 1]} : vector<39x512xf32> to vector<4x512xf32>
    %12 = vector.extract_strided_slice %10 {offsets = [4, 0], sizes = [4, 512], strides = [1, 1]} : vector<39x512xf32> to vector<4x512xf32>
    %13 = vector.extract_strided_slice %10 {offsets = [8, 0], sizes = [4, 512], strides = [1, 1]} : vector<39x512xf32> to vector<4x512xf32>
    %14 = vector.extract_strided_slice %10 {offsets = [12, 0], sizes = [27, 512], strides = [1, 1]} : vector<39x512xf32> to vector<27x512xf32>
    %c0_8 = arith.constant 0 : index
    %c0_9 = arith.constant 0 : index
    %15 = vector.load %arg6[%c0_8, %c0_9] : memref<27x512xf32, #tpu.memory_space<vmem>>, vector<27x512xf32>
    %cst_10 = arith.constant 0.000000e+00 : f32
    %16 = vector.broadcast %cst_10 : f32 to vector<1x512xf32>
    %17 = vector.extract_strided_slice %14 {offsets = [0, 0], sizes = [1, 512], strides = [1, 1]} : vector<27x512xf32> to vector<1x512xf32>
    %18 = vector.extract_strided_slice %17 {offsets = [0, 497], sizes = [1, 15], strides = [1, 1]} : vector<1x512xf32> to vector<1x15xf32>
    %19 = vector.extract_strided_slice %17 {offsets = [0, 0], sizes = [1, 497], strides = [1, 1]} : vector<1x512xf32> to vector<1x497xf32>
    %20 = tpu.concatenate %18, %19 in 1 : vector<1x15xf32>, vector<1x497xf32> -> vector<1x512xf32>
    %21 = vector.extract_strided_slice %15 {offsets = [0, 0], sizes = [1, 512], strides = [1, 1]} : vector<27x512xf32> to vector<1x512xf32>
    %22 = arith.mulf %20, %21 : vector<1x512xf32>
    %23 = arith.addf %16, %22 : vector<1x512xf32>
    %24 = vector.extract_strided_slice %14 {offsets = [1, 0], sizes = [1, 512], strides = [1, 1]} : vector<27x512xf32> to vector<1x512xf32>
    %25 = vector.extract_strided_slice %24 {offsets = [0, 498], sizes = [1, 14], strides = [1, 1]} : vector<1x512xf32> to vector<1x14xf32>
    %26 = vector.extract_strided_slice %24 {offsets = [0, 0], sizes = [1, 498], strides = [1, 1]} : vector<1x512xf32> to vector<1x498xf32>
    %27 = tpu.concatenate %25, %26 in 1 : vector<1x14xf32>, vector<1x498xf32> -> vector<1x512xf32>
    %28 = vector.extract_strided_slice %15 {offsets = [1, 0], sizes = [1, 512], strides = [1, 1]} : vector<27x512xf32> to vector<1x512xf32>
    %29 = arith.mulf %27, %28 : vector<1x512xf32>
    %30 = arith.addf %23, %29 : vector<1x512xf32>
    %31 = vector.extract_strided_slice %14 {offsets = [2, 0], sizes = [1, 512], strides = [1, 1]} : vector<27x512xf32> to vector<1x512xf32>
    %32 = vector.extract_strided_slice %31 {offsets = [0, 499], sizes = [1, 13], strides = [1, 1]} : vector<1x512xf32> to vector<1x13xf32>
    %33 = vector.extract_strided_slice %31 {offsets = [0, 0], sizes = [1, 499], strides = [1, 1]} : vector<1x512xf32> to vector<1x499xf32>
    %34 = tpu.concatenate %32, %33 in 1 : vector<1x13xf32>, vector<1x499xf32> -> vector<1x512xf32>
    %35 = vector.extract_strided_slice %15 {offsets = [2, 0], sizes = [1, 512], strides = [1, 1]} : vector<27x512xf32> to vector<1x512xf32>
    %36 = arith.mulf %34, %35 : vector<1x512xf32>
    %37 = arith.addf %30, %36 : vector<1x512xf32>
    %38 = vector.extract_strided_slice %14 {offsets = [3, 0], sizes = [1, 512], strides = [1, 1]} : vector<27x512xf32> to vector<1x512xf32>
    %39 = vector.extract_strided_slice %38 {offsets = [0, 511], sizes = [1, 1], strides = [1, 1]} : vector<1x512xf32> to vector<1x1xf32>
    %40 = vector.extract_strided_slice %38 {offsets = [0, 0], sizes = [1, 511], strides = [1, 1]} : vector<1x512xf32> to vector<1x511xf32>
    %41 = tpu.concatenate %39, %40 in 1 : vector<1x1xf32>, vector<1x511xf32> -> vector<1x512xf32>
    %42 = vector.extract_strided_slice %15 {offsets = [3, 0], sizes = [1, 512], strides = [1, 1]} : vector<27x512xf32> to vector<1x512xf32>
    %43 = arith.mulf %41, %42 : vector<1x512xf32>
    %44 = arith.addf %37, %43 : vector<1x512xf32>
    %45 = vector.extract_strided_slice %14 {offsets = [4, 0], sizes = [1, 512], strides = [1, 1]} : vector<27x512xf32> to vector<1x512xf32>
    %46 = vector.extract_strided_slice %15 {offsets = [4, 0], sizes = [1, 512], strides = [1, 1]} : vector<27x512xf32> to vector<1x512xf32>
    %47 = arith.mulf %45, %46 : vector<1x512xf32>
    %48 = arith.addf %44, %47 : vector<1x512xf32>
    %49 = vector.extract_strided_slice %14 {offsets = [5, 0], sizes = [1, 512], strides = [1, 1]} : vector<27x512xf32> to vector<1x512xf32>
    %50 = vector.extract_strided_slice %49 {offsets = [0, 1], sizes = [1, 511], strides = [1, 1]} : vector<1x512xf32> to vector<1x511xf32>
    %51 = vector.extract_strided_slice %49 {offsets = [0, 0], sizes = [1, 1], strides = [1, 1]} : vector<1x512xf32> to vector<1x1xf32>
    %52 = tpu.concatenate %50, %51 in 1 : vector<1x511xf32>, vector<1x1xf32> -> vector<1x512xf32>
    %53 = vector.extract_strided_slice %15 {offsets = [5, 0], sizes = [1, 512], strides = [1, 1]} : vector<27x512xf32> to vector<1x512xf32>
    %54 = arith.mulf %52, %53 : vector<1x512xf32>
    %55 = arith.addf %48, %54 : vector<1x512xf32>
    %56 = vector.extract_strided_slice %14 {offsets = [6, 0], sizes = [1, 512], strides = [1, 1]} : vector<27x512xf32> to vector<1x512xf32>
    %57 = vector.extract_strided_slice %56 {offsets = [0, 13], sizes = [1, 499], strides = [1, 1]} : vector<1x512xf32> to vector<1x499xf32>
    %58 = vector.extract_strided_slice %56 {offsets = [0, 0], sizes = [1, 13], strides = [1, 1]} : vector<1x512xf32> to vector<1x13xf32>
    %59 = tpu.concatenate %57, %58 in 1 : vector<1x499xf32>, vector<1x13xf32> -> vector<1x512xf32>
    %60 = vector.extract_strided_slice %15 {offsets = [6, 0], sizes = [1, 512], strides = [1, 1]} : vector<27x512xf32> to vector<1x512xf32>
    %61 = arith.mulf %59, %60 : vector<1x512xf32>
    %62 = arith.addf %55, %61 : vector<1x512xf32>
    %63 = vector.extract_strided_slice %14 {offsets = [7, 0], sizes = [1, 512], strides = [1, 1]} : vector<27x512xf32> to vector<1x512xf32>
    %64 = vector.extract_strided_slice %63 {offsets = [0, 14], sizes = [1, 498], strides = [1, 1]} : vector<1x512xf32> to vector<1x498xf32>
    %65 = vector.extract_strided_slice %63 {offsets = [0, 0], sizes = [1, 14], strides = [1, 1]} : vector<1x512xf32> to vector<1x14xf32>
    %66 = tpu.concatenate %64, %65 in 1 : vector<1x498xf32>, vector<1x14xf32> -> vector<1x512xf32>
    %67 = vector.extract_strided_slice %15 {offsets = [7, 0], sizes = [1, 512], strides = [1, 1]} : vector<27x512xf32> to vector<1x512xf32>
    %68 = arith.mulf %66, %67 : vector<1x512xf32>
    %69 = arith.addf %62, %68 : vector<1x512xf32>
    %70 = vector.extract_strided_slice %14 {offsets = [8, 0], sizes = [1, 512], strides = [1, 1]} : vector<27x512xf32> to vector<1x512xf32>
    %71 = vector.extract_strided_slice %70 {offsets = [0, 15], sizes = [1, 497], strides = [1, 1]} : vector<1x512xf32> to vector<1x497xf32>
    %72 = vector.extract_strided_slice %70 {offsets = [0, 0], sizes = [1, 15], strides = [1, 1]} : vector<1x512xf32> to vector<1x15xf32>
    %73 = tpu.concatenate %71, %72 in 1 : vector<1x497xf32>, vector<1x15xf32> -> vector<1x512xf32>
    %74 = vector.extract_strided_slice %15 {offsets = [8, 0], sizes = [1, 512], strides = [1, 1]} : vector<27x512xf32> to vector<1x512xf32>
    %75 = arith.mulf %73, %74 : vector<1x512xf32>
    %76 = arith.addf %69, %75 : vector<1x512xf32>
    %77 = vector.extract_strided_slice %14 {offsets = [9, 0], sizes = [1, 512], strides = [1, 1]} : vector<27x512xf32> to vector<1x512xf32>
    %78 = vector.extract_strided_slice %77 {offsets = [0, 482], sizes = [1, 30], strides = [1, 1]} : vector<1x512xf32> to vector<1x30xf32>
    %79 = vector.extract_strided_slice %77 {offsets = [0, 0], sizes = [1, 482], strides = [1, 1]} : vector<1x512xf32> to vector<1x482xf32>
    %80 = tpu.concatenate %78, %79 in 1 : vector<1x30xf32>, vector<1x482xf32> -> vector<1x512xf32>
    %81 = vector.extract_strided_slice %15 {offsets = [9, 0], sizes = [1, 512], strides = [1, 1]} : vector<27x512xf32> to vector<1x512xf32>
    %82 = arith.mulf %80, %81 : vector<1x512xf32>
    %83 = arith.addf %76, %82 : vector<1x512xf32>
    %84 = vector.extract_strided_slice %14 {offsets = [10, 0], sizes = [1, 512], strides = [1, 1]} : vector<27x512xf32> to vector<1x512xf32>
    %85 = vector.extract_strided_slice %84 {offsets = [0, 484], sizes = [1, 28], strides = [1, 1]} : vector<1x512xf32> to vector<1x28xf32>
    %86 = vector.extract_strided_slice %84 {offsets = [0, 0], sizes = [1, 484], strides = [1, 1]} : vector<1x512xf32> to vector<1x484xf32>
    %87 = tpu.concatenate %85, %86 in 1 : vector<1x28xf32>, vector<1x484xf32> -> vector<1x512xf32>
    %88 = vector.extract_strided_slice %15 {offsets = [10, 0], sizes = [1, 512], strides = [1, 1]} : vector<27x512xf32> to vector<1x512xf32>
    %89 = arith.mulf %87, %88 : vector<1x512xf32>
    %90 = arith.addf %83, %89 : vector<1x512xf32>
    %91 = vector.extract_strided_slice %14 {offsets = [11, 0], sizes = [1, 512], strides = [1, 1]} : vector<27x512xf32> to vector<1x512xf32>
    %92 = vector.extract_strided_slice %91 {offsets = [0, 486], sizes = [1, 26], strides = [1, 1]} : vector<1x512xf32> to vector<1x26xf32>
    %93 = vector.extract_strided_slice %91 {offsets = [0, 0], sizes = [1, 486], strides = [1, 1]} : vector<1x512xf32> to vector<1x486xf32>
    %94 = tpu.concatenate %92, %93 in 1 : vector<1x26xf32>, vector<1x486xf32> -> vector<1x512xf32>
    %95 = vector.extract_strided_slice %15 {offsets = [11, 0], sizes = [1, 512], strides = [1, 1]} : vector<27x512xf32> to vector<1x512xf32>
    %96 = arith.mulf %94, %95 : vector<1x512xf32>
    %97 = arith.addf %90, %96 : vector<1x512xf32>
    %98 = vector.extract_strided_slice %14 {offsets = [12, 0], sizes = [1, 512], strides = [1, 1]} : vector<27x512xf32> to vector<1x512xf32>
    %99 = vector.extract_strided_slice %98 {offsets = [0, 510], sizes = [1, 2], strides = [1, 1]} : vector<1x512xf32> to vector<1x2xf32>
    %100 = vector.extract_strided_slice %98 {offsets = [0, 0], sizes = [1, 510], strides = [1, 1]} : vector<1x512xf32> to vector<1x510xf32>
    %101 = tpu.concatenate %99, %100 in 1 : vector<1x2xf32>, vector<1x510xf32> -> vector<1x512xf32>
    %102 = vector.extract_strided_slice %15 {offsets = [12, 0], sizes = [1, 512], strides = [1, 1]} : vector<27x512xf32> to vector<1x512xf32>
    %103 = arith.mulf %101, %102 : vector<1x512xf32>
    %104 = arith.addf %97, %103 : vector<1x512xf32>
    %105 = vector.extract_strided_slice %14 {offsets = [13, 0], sizes = [1, 512], strides = [1, 1]} : vector<27x512xf32> to vector<1x512xf32>
    %106 = vector.extract_strided_slice %15 {offsets = [13, 0], sizes = [1, 512], strides = [1, 1]} : vector<27x512xf32> to vector<1x512xf32>
    %107 = arith.mulf %105, %106 : vector<1x512xf32>
    %108 = arith.addf %104, %107 : vector<1x512xf32>
    %109 = vector.extract_strided_slice %14 {offsets = [14, 0], sizes = [1, 512], strides = [1, 1]} : vector<27x512xf32> to vector<1x512xf32>
    %110 = vector.extract_strided_slice %109 {offsets = [0, 2], sizes = [1, 510], strides = [1, 1]} : vector<1x512xf32> to vector<1x510xf32>
    %111 = vector.extract_strided_slice %109 {offsets = [0, 0], sizes = [1, 2], strides = [1, 1]} : vector<1x512xf32> to vector<1x2xf32>
    %112 = tpu.concatenate %110, %111 in 1 : vector<1x510xf32>, vector<1x2xf32> -> vector<1x512xf32>
    %113 = vector.extract_strided_slice %15 {offsets = [14, 0], sizes = [1, 512], strides = [1, 1]} : vector<27x512xf32> to vector<1x512xf32>
    %114 = arith.mulf %112, %113 : vector<1x512xf32>
    %115 = arith.addf %108, %114 : vector<1x512xf32>
    %116 = vector.extract_strided_slice %14 {offsets = [15, 0], sizes = [1, 512], strides = [1, 1]} : vector<27x512xf32> to vector<1x512xf32>
    %117 = vector.extract_strided_slice %116 {offsets = [0, 26], sizes = [1, 486], strides = [1, 1]} : vector<1x512xf32> to vector<1x486xf32>
    %118 = vector.extract_strided_slice %116 {offsets = [0, 0], sizes = [1, 26], strides = [1, 1]} : vector<1x512xf32> to vector<1x26xf32>
    %119 = tpu.concatenate %117, %118 in 1 : vector<1x486xf32>, vector<1x26xf32> -> vector<1x512xf32>
    %120 = vector.extract_strided_slice %15 {offsets = [15, 0], sizes = [1, 512], strides = [1, 1]} : vector<27x512xf32> to vector<1x512xf32>
    %121 = arith.mulf %119, %120 : vector<1x512xf32>
    %122 = arith.addf %115, %121 : vector<1x512xf32>
    %123 = vector.extract_strided_slice %14 {offsets = [16, 0], sizes = [1, 512], strides = [1, 1]} : vector<27x512xf32> to vector<1x512xf32>
    %124 = vector.extract_strided_slice %123 {offsets = [0, 28], sizes = [1, 484], strides = [1, 1]} : vector<1x512xf32> to vector<1x484xf32>
    %125 = vector.extract_strided_slice %123 {offsets = [0, 0], sizes = [1, 28], strides = [1, 1]} : vector<1x512xf32> to vector<1x28xf32>
    %126 = tpu.concatenate %124, %125 in 1 : vector<1x484xf32>, vector<1x28xf32> -> vector<1x512xf32>
    %127 = vector.extract_strided_slice %15 {offsets = [16, 0], sizes = [1, 512], strides = [1, 1]} : vector<27x512xf32> to vector<1x512xf32>
    %128 = arith.mulf %126, %127 : vector<1x512xf32>
    %129 = arith.addf %122, %128 : vector<1x512xf32>
    %130 = vector.extract_strided_slice %14 {offsets = [17, 0], sizes = [1, 512], strides = [1, 1]} : vector<27x512xf32> to vector<1x512xf32>
    %131 = vector.extract_strided_slice %130 {offsets = [0, 30], sizes = [1, 482], strides = [1, 1]} : vector<1x512xf32> to vector<1x482xf32>
    %132 = vector.extract_strided_slice %130 {offsets = [0, 0], sizes = [1, 30], strides = [1, 1]} : vector<1x512xf32> to vector<1x30xf32>
    %133 = tpu.concatenate %131, %132 in 1 : vector<1x482xf32>, vector<1x30xf32> -> vector<1x512xf32>
    %134 = vector.extract_strided_slice %15 {offsets = [17, 0], sizes = [1, 512], strides = [1, 1]} : vector<27x512xf32> to vector<1x512xf32>
    %135 = arith.mulf %133, %134 : vector<1x512xf32>
    %136 = arith.addf %129, %135 : vector<1x512xf32>
    %137 = vector.extract_strided_slice %14 {offsets = [18, 0], sizes = [1, 512], strides = [1, 1]} : vector<27x512xf32> to vector<1x512xf32>
    %138 = vector.extract_strided_slice %137 {offsets = [0, 467], sizes = [1, 45], strides = [1, 1]} : vector<1x512xf32> to vector<1x45xf32>
    %139 = vector.extract_strided_slice %137 {offsets = [0, 0], sizes = [1, 467], strides = [1, 1]} : vector<1x512xf32> to vector<1x467xf32>
    %140 = tpu.concatenate %138, %139 in 1 : vector<1x45xf32>, vector<1x467xf32> -> vector<1x512xf32>
    %141 = vector.extract_strided_slice %15 {offsets = [18, 0], sizes = [1, 512], strides = [1, 1]} : vector<27x512xf32> to vector<1x512xf32>
    %142 = arith.mulf %140, %141 : vector<1x512xf32>
    %143 = arith.addf %136, %142 : vector<1x512xf32>
    %144 = vector.extract_strided_slice %14 {offsets = [19, 0], sizes = [1, 512], strides = [1, 1]} : vector<27x512xf32> to vector<1x512xf32>
    %145 = vector.extract_strided_slice %144 {offsets = [0, 470], sizes = [1, 42], strides = [1, 1]} : vector<1x512xf32> to vector<1x42xf32>
    %146 = vector.extract_strided_slice %144 {offsets = [0, 0], sizes = [1, 470], strides = [1, 1]} : vector<1x512xf32> to vector<1x470xf32>
    %147 = tpu.concatenate %145, %146 in 1 : vector<1x42xf32>, vector<1x470xf32> -> vector<1x512xf32>
    %148 = vector.extract_strided_slice %15 {offsets = [19, 0], sizes = [1, 512], strides = [1, 1]} : vector<27x512xf32> to vector<1x512xf32>
    %149 = arith.mulf %147, %148 : vector<1x512xf32>
    %150 = arith.addf %143, %149 : vector<1x512xf32>
    %151 = vector.extract_strided_slice %14 {offsets = [20, 0], sizes = [1, 512], strides = [1, 1]} : vector<27x512xf32> to vector<1x512xf32>
    %152 = vector.extract_strided_slice %151 {offsets = [0, 473], sizes = [1, 39], strides = [1, 1]} : vector<1x512xf32> to vector<1x39xf32>
    %153 = vector.extract_strided_slice %151 {offsets = [0, 0], sizes = [1, 473], strides = [1, 1]} : vector<1x512xf32> to vector<1x473xf32>
    %154 = tpu.concatenate %152, %153 in 1 : vector<1x39xf32>, vector<1x473xf32> -> vector<1x512xf32>
    %155 = vector.extract_strided_slice %15 {offsets = [20, 0], sizes = [1, 512], strides = [1, 1]} : vector<27x512xf32> to vector<1x512xf32>
    %156 = arith.mulf %154, %155 : vector<1x512xf32>
    %157 = arith.addf %150, %156 : vector<1x512xf32>
    %158 = vector.extract_strided_slice %14 {offsets = [21, 0], sizes = [1, 512], strides = [1, 1]} : vector<27x512xf32> to vector<1x512xf32>
    %159 = vector.extract_strided_slice %158 {offsets = [0, 509], sizes = [1, 3], strides = [1, 1]} : vector<1x512xf32> to vector<1x3xf32>
    %160 = vector.extract_strided_slice %158 {offsets = [0, 0], sizes = [1, 509], strides = [1, 1]} : vector<1x512xf32> to vector<1x509xf32>
    %161 = tpu.concatenate %159, %160 in 1 : vector<1x3xf32>, vector<1x509xf32> -> vector<1x512xf32>
    %162 = vector.extract_strided_slice %15 {offsets = [21, 0], sizes = [1, 512], strides = [1, 1]} : vector<27x512xf32> to vector<1x512xf32>
    %163 = arith.mulf %161, %162 : vector<1x512xf32>
    %164 = arith.addf %157, %163 : vector<1x512xf32>
    %165 = vector.extract_strided_slice %14 {offsets = [22, 0], sizes = [1, 512], strides = [1, 1]} : vector<27x512xf32> to vector<1x512xf32>
    %166 = vector.extract_strided_slice %15 {offsets = [22, 0], sizes = [1, 512], strides = [1, 1]} : vector<27x512xf32> to vector<1x512xf32>
    %167 = arith.mulf %165, %166 : vector<1x512xf32>
    %168 = arith.addf %164, %167 : vector<1x512xf32>
    %169 = vector.extract_strided_slice %14 {offsets = [23, 0], sizes = [1, 512], strides = [1, 1]} : vector<27x512xf32> to vector<1x512xf32>
    %170 = vector.extract_strided_slice %169 {offsets = [0, 3], sizes = [1, 509], strides = [1, 1]} : vector<1x512xf32> to vector<1x509xf32>
    %171 = vector.extract_strided_slice %169 {offsets = [0, 0], sizes = [1, 3], strides = [1, 1]} : vector<1x512xf32> to vector<1x3xf32>
    %172 = tpu.concatenate %170, %171 in 1 : vector<1x509xf32>, vector<1x3xf32> -> vector<1x512xf32>
    %173 = vector.extract_strided_slice %15 {offsets = [23, 0], sizes = [1, 512], strides = [1, 1]} : vector<27x512xf32> to vector<1x512xf32>
    %174 = arith.mulf %172, %173 : vector<1x512xf32>
    %175 = arith.addf %168, %174 : vector<1x512xf32>
    %176 = vector.extract_strided_slice %14 {offsets = [24, 0], sizes = [1, 512], strides = [1, 1]} : vector<27x512xf32> to vector<1x512xf32>
    %177 = vector.extract_strided_slice %176 {offsets = [0, 39], sizes = [1, 473], strides = [1, 1]} : vector<1x512xf32> to vector<1x473xf32>
    %178 = vector.extract_strided_slice %176 {offsets = [0, 0], sizes = [1, 39], strides = [1, 1]} : vector<1x512xf32> to vector<1x39xf32>
    %179 = tpu.concatenate %177, %178 in 1 : vector<1x473xf32>, vector<1x39xf32> -> vector<1x512xf32>
    %180 = vector.extract_strided_slice %15 {offsets = [24, 0], sizes = [1, 512], strides = [1, 1]} : vector<27x512xf32> to vector<1x512xf32>
    %181 = arith.mulf %179, %180 : vector<1x512xf32>
    %182 = arith.addf %175, %181 : vector<1x512xf32>
    %183 = vector.extract_strided_slice %14 {offsets = [25, 0], sizes = [1, 512], strides = [1, 1]} : vector<27x512xf32> to vector<1x512xf32>
    %184 = vector.extract_strided_slice %183 {offsets = [0, 42], sizes = [1, 470], strides = [1, 1]} : vector<1x512xf32> to vector<1x470xf32>
    %185 = vector.extract_strided_slice %183 {offsets = [0, 0], sizes = [1, 42], strides = [1, 1]} : vector<1x512xf32> to vector<1x42xf32>
    %186 = tpu.concatenate %184, %185 in 1 : vector<1x470xf32>, vector<1x42xf32> -> vector<1x512xf32>
    %187 = vector.extract_strided_slice %15 {offsets = [25, 0], sizes = [1, 512], strides = [1, 1]} : vector<27x512xf32> to vector<1x512xf32>
    %188 = arith.mulf %186, %187 : vector<1x512xf32>
    %189 = arith.addf %182, %188 : vector<1x512xf32>
    %190 = vector.extract_strided_slice %14 {offsets = [26, 0], sizes = [1, 512], strides = [1, 1]} : vector<27x512xf32> to vector<1x512xf32>
    %191 = vector.extract_strided_slice %190 {offsets = [0, 45], sizes = [1, 467], strides = [1, 1]} : vector<1x512xf32> to vector<1x467xf32>
    %192 = vector.extract_strided_slice %190 {offsets = [0, 0], sizes = [1, 45], strides = [1, 1]} : vector<1x512xf32> to vector<1x45xf32>
    %193 = tpu.concatenate %191, %192 in 1 : vector<1x467xf32>, vector<1x45xf32> -> vector<1x512xf32>
    %194 = vector.extract_strided_slice %15 {offsets = [26, 0], sizes = [1, 512], strides = [1, 1]} : vector<27x512xf32> to vector<1x512xf32>
    %195 = arith.mulf %193, %194 : vector<1x512xf32>
    %196 = arith.addf %189, %195 : vector<1x512xf32>
    %197 = vector.broadcast %5 : f32 to vector<1x512xf32>
    %198 = arith.addf %196, %197 : vector<1x512xf32>
    %199 = arith.negf %198 : vector<1x512xf32>
    %200 = math.exp %199 : vector<1x512xf32>
    %cst_11 = arith.constant 1.000000e+00 : f32
    %201 = vector.broadcast %cst_11 : f32 to vector<1x512xf32>
    %202 = arith.addf %201, %200 : vector<1x512xf32>
    %203 = arith.divf %201, %202 : vector<1x512xf32>
    %204 = vector.broadcast %2 : vector<1x512xf32> to vector<4x512xf32>
    %205 = arith.mulf %13, %204 : vector<4x512xf32>
    %206 = tpu.concatenate %2, %205 in 0 : vector<1x512xf32>, vector<4x512xf32> -> vector<5x512xf32>
    %207 = arith.truncf %206 : vector<5x512xf32> to vector<5x512xbf16>
    %208 = arith.truncf %11 : vector<4x512xf32> to vector<4x512xbf16>
    %209 = arith.truncf %12 : vector<4x512xf32> to vector<4x512xbf16>
    %c0_12 = arith.constant 0 : index
    %c0_13 = arith.constant 0 : index
    %210 = vector.load %arg2[%c0_12, %c0_13] : memref<24x8xf32, #tpu.memory_space<vmem>>, vector<24x8xf32>
    %c0_14 = arith.constant 0 : index
    %c0_15 = arith.constant 0 : index
    %211 = vector.load %arg3[%c0_14, %c0_15] : memref<24x1xf32, #tpu.memory_space<vmem>>, vector<24x1xf32>
    %c0_16 = arith.constant 0 : index
    %c0_17 = arith.constant 0 : index
    %212 = vector.load %arg8[%c0_16, %c0_17] : memref<8x4xbf16, #tpu.memory_space<vmem>>, vector<8x4xbf16>
    %c0_18 = arith.constant 0 : index
    %c0_19 = arith.constant 0 : index
    %213 = vector.load %arg9[%c0_18, %c0_19] : memref<8x1xf32, #tpu.memory_space<vmem>>, vector<8x1xf32>
    %214 = vector.extract_strided_slice %0 {offsets = [0, 0], sizes = [8, 256], strides = [1, 1]} : vector<8x512xf32> to vector<8x256xf32>
    %cst_20 = arith.constant dense<0.000000e+00> : vector<8xf32>
    %215 = vector.multi_reduction <add>, %214, %cst_20 [1] : vector<8x256xf32> to vector<8xf32>
    %216 = vector.shape_cast %215 : vector<8xf32> to vector<8x1xf32>
    %cst_21 = arith.constant 0.00510204071 : f32
    %217 = vector.broadcast %cst_21 : f32 to vector<8x1xf32>
    %218 = arith.mulf %216, %217 : vector<8x1xf32>
    %cst_22 = arith.constant dense<0.000000e+00> : vector<24x1xf32>
    %219 = tpu.matmul %210, %218, %cst_22 {dimension_numbers = #tpu.dot_dimension_numbers<[1], [0], [0], [1], [0, 0, 1, 1], [], []>} : vector<24x8xf32>, vector<8x1xf32>, vector<24x1xf32> -> vector<24x1xf32>
    %220 = arith.addf %219, %211 : vector<24x1xf32>
    %221 = arith.negf %220 : vector<24x1xf32>
    %222 = math.exp %221 : vector<24x1xf32>
    %cst_23 = arith.constant 1.000000e+00 : f32
    %223 = vector.broadcast %cst_23 : f32 to vector<24x1xf32>
    %224 = arith.addf %223, %222 : vector<24x1xf32>
    %225 = arith.divf %223, %224 : vector<24x1xf32>
    %226 = vector.extract_strided_slice %225 {offsets = [0, 0], sizes = [8, 1], strides = [1, 1]} : vector<24x1xf32> to vector<8x1xf32>
    %227 = vector.extract_strided_slice %225 {offsets = [8, 0], sizes = [8, 1], strides = [1, 1]} : vector<24x1xf32> to vector<8x1xf32>
    %228 = vector.extract_strided_slice %225 {offsets = [16, 0], sizes = [8, 1], strides = [1, 1]} : vector<24x1xf32> to vector<8x1xf32>
    %cst_24 = arith.constant dense<0.000000e+00> : vector<8x8xf32>
    %229 = tpu.matmul %228, %227, %cst_24 {dimension_numbers = #tpu.dot_dimension_numbers<[1], [1], [0], [0], [0, 0, 1, 0], [], []>} : vector<8x1xf32>, vector<8x1xf32>, vector<8x8xf32> -> vector<8x8xf32>
    %230 = vector.shape_cast %229 : vector<8x8xf32> to vector<1x8x8xf32>
    %cst_25 = arith.constant dense<0xFF800000> : vector<1xf32>
    %231 = vector.multi_reduction <maximumf>, %230, %cst_25 [1, 2] : vector<1x8x8xf32> to vector<1xf32>
    %232 = vector.shape_cast %231 : vector<1xf32> to vector<1x1x1xf32>
    %233 = vector.extract %232[0, 0, 0] : f32 from vector<1x1x1xf32>
    %234 = vector.broadcast %233 : f32 to vector<8x8xf32>
    %235 = arith.subf %229, %234 : vector<8x8xf32>
    %236 = math.exp %235 : vector<8x8xf32>
    %cst_26 = arith.constant dense<0.000000e+00> : vector<8x256xf32>
    %237 = tpu.matmul %236, %214, %cst_26 {dimension_numbers = #tpu.dot_dimension_numbers<[0], [0], [1], [1], [0, 1, 1, 1], [], []>} : vector<8x8xf32>, vector<8x256xf32>, vector<8x256xf32> -> vector<8x256xf32>
    %238 = vector.shape_cast %236 : vector<8x8xf32> to vector<1x8x8xf32>
    %cst_27 = arith.constant dense<0.000000e+00> : vector<1xf32>
    %239 = vector.multi_reduction <add>, %238, %cst_27 [1, 2] : vector<1x8x8xf32> to vector<1xf32>
    %240 = vector.shape_cast %239 : vector<1xf32> to vector<1x1x1xf32>
    %241 = vector.extract %240[0, 0, 0] : f32 from vector<1x1x1xf32>
    %cst_28 = arith.constant 1.000000e+00 : f32
    %242 = arith.divf %cst_28, %241 : f32
    %243 = vector.broadcast %242 : f32 to vector<8x256xf32>
    %244 = arith.mulf %237, %243 : vector<8x256xf32>
    %245 = vector.extract_strided_slice %209 {offsets = [0, 0], sizes = [4, 256], strides = [1, 1]} : vector<4x512xbf16> to vector<4x256xbf16>
    %246 = vector.extract_strided_slice %207 {offsets = [0, 0], sizes = [5, 256], strides = [1, 1]} : vector<5x512xbf16> to vector<5x256xbf16>
    %247 = vector.extract_strided_slice %2 {offsets = [0, 0], sizes = [1, 256], strides = [1, 1]} : vector<1x512xf32> to vector<1x256xf32>
    %248 = vector.extract_strided_slice %208 {offsets = [0, 0], sizes = [4, 128], strides = [1, 1]} : vector<4x512xbf16> to vector<4x128xbf16>
    %cst_29 = arith.constant dense<0.000000e+00> : vector<256x128xf32>
    %249 = tpu.matmul %245, %248, %cst_29 {dimension_numbers = #tpu.dot_dimension_numbers<[0], [0], [1], [1], [0, 1, 1, 1], [], []>} : vector<4x256xbf16>, vector<4x128xbf16>, vector<256x128xf32> -> vector<256x128xf32>
    %250 = vector.shape_cast %249 : vector<256x128xf32> to vector<1x256x128xf32>
    %cst_30 = arith.constant dense<0xFF800000> : vector<1xf32>
    %251 = vector.multi_reduction <maximumf>, %250, %cst_30 [1, 2] : vector<1x256x128xf32> to vector<1xf32>
    %252 = vector.shape_cast %251 : vector<1xf32> to vector<1x1x1xf32>
    %253 = vector.extract %252[0, 0, 0] : f32 from vector<1x1x1xf32>
    %254 = vector.broadcast %253 : f32 to vector<256x128xf32>
    %255 = arith.subf %249, %254 : vector<256x128xf32>
    %256 = math.exp %255 : vector<256x128xf32>
    %257 = arith.truncf %256 : vector<256x128xf32> to vector<256x128xbf16>
    %cst_31 = arith.constant dense<0.000000e+00> : vector<5x128xf32>
    %258 = tpu.matmul %246, %257, %cst_31 {dimension_numbers = #tpu.dot_dimension_numbers<[1], [0], [0], [1], [0, 0, 1, 1], [], []>} : vector<5x256xbf16>, vector<256x128xbf16>, vector<5x128xf32> -> vector<5x128xf32>
    %259 = vector.extract_strided_slice %258 {offsets = [0, 0], sizes = [1, 128], strides = [1, 1]} : vector<5x128xf32> to vector<1x128xf32>
    %260 = vector.extract_strided_slice %247 {offsets = [0, 0], sizes = [1, 128], strides = [1, 1]} : vector<1x256xf32> to vector<1x128xf32>
    %261 = arith.mulf %259, %260 : vector<1x128xf32>
    %262 = vector.shape_cast %261 : vector<1x128xf32> to vector<1x1x128xf32>
    %cst_32 = arith.constant dense<0.000000e+00> : vector<1xf32>
    %263 = vector.multi_reduction <add>, %262, %cst_32 [1, 2] : vector<1x1x128xf32> to vector<1xf32>
    %264 = vector.shape_cast %263 : vector<1xf32> to vector<1x1x1xf32>
    %265 = vector.extract %264[0, 0, 0] : f32 from vector<1x1x1xf32>
    %266 = vector.extract_strided_slice %258 {offsets = [1, 0], sizes = [4, 128], strides = [1, 1]} : vector<5x128xf32> to vector<4x128xf32>
    %267 = vector.extract_strided_slice %208 {offsets = [0, 128], sizes = [4, 128], strides = [1, 1]} : vector<4x512xbf16> to vector<4x128xbf16>
    %cst_33 = arith.constant dense<0.000000e+00> : vector<256x128xf32>
    %268 = tpu.matmul %245, %267, %cst_33 {dimension_numbers = #tpu.dot_dimension_numbers<[0], [0], [1], [1], [0, 1, 1, 1], [], []>} : vector<4x256xbf16>, vector<4x128xbf16>, vector<256x128xf32> -> vector<256x128xf32>
    %269 = vector.shape_cast %268 : vector<256x128xf32> to vector<1x256x128xf32>
    %cst_34 = arith.constant dense<0xFF800000> : vector<1xf32>
    %270 = vector.multi_reduction <maximumf>, %269, %cst_34 [1, 2] : vector<1x256x128xf32> to vector<1xf32>
    %271 = vector.shape_cast %270 : vector<1xf32> to vector<1x1x1xf32>
    %272 = vector.extract %271[0, 0, 0] : f32 from vector<1x1x1xf32>
    %273 = vector.broadcast %272 : f32 to vector<256x128xf32>
    %274 = arith.subf %268, %273 : vector<256x128xf32>
    %275 = math.exp %274 : vector<256x128xf32>
    %276 = arith.truncf %275 : vector<256x128xf32> to vector<256x128xbf16>
    %cst_35 = arith.constant dense<0.000000e+00> : vector<5x128xf32>
    %277 = tpu.matmul %246, %276, %cst_35 {dimension_numbers = #tpu.dot_dimension_numbers<[1], [0], [0], [1], [0, 0, 1, 1], [], []>} : vector<5x256xbf16>, vector<256x128xbf16>, vector<5x128xf32> -> vector<5x128xf32>
    %278 = vector.extract_strided_slice %277 {offsets = [0, 0], sizes = [1, 128], strides = [1, 1]} : vector<5x128xf32> to vector<1x128xf32>
    %279 = vector.extract_strided_slice %247 {offsets = [0, 128], sizes = [1, 128], strides = [1, 1]} : vector<1x256xf32> to vector<1x128xf32>
    %280 = arith.mulf %278, %279 : vector<1x128xf32>
    %281 = vector.shape_cast %280 : vector<1x128xf32> to vector<1x1x128xf32>
    %cst_36 = arith.constant dense<0.000000e+00> : vector<1xf32>
    %282 = vector.multi_reduction <add>, %281, %cst_36 [1, 2] : vector<1x1x128xf32> to vector<1xf32>
    %283 = vector.shape_cast %282 : vector<1xf32> to vector<1x1x1xf32>
    %284 = vector.extract %283[0, 0, 0] : f32 from vector<1x1x1xf32>
    %285 = vector.extract_strided_slice %277 {offsets = [1, 0], sizes = [4, 128], strides = [1, 1]} : vector<5x128xf32> to vector<4x128xf32>
    %286 = arith.maximumf %253, %272 : f32
    %287 = arith.subf %253, %286 : f32
    %288 = math.exp %287 : f32
    %289 = arith.subf %272, %286 : f32
    %290 = math.exp %289 : f32
    %291 = arith.mulf %265, %288 : f32
    %292 = arith.mulf %284, %290 : f32
    %293 = arith.addf %291, %292 : f32
    %cst_37 = arith.constant 1.000000e+00 : f32
    %294 = arith.divf %cst_37, %293 : f32
    %295 = arith.mulf %288, %294 : f32
    %296 = vector.broadcast %295 : f32 to vector<4x128xf32>
    %297 = arith.mulf %266, %296 : vector<4x128xf32>
    %298 = arith.mulf %290, %294 : f32
    %299 = vector.broadcast %298 : f32 to vector<4x128xf32>
    %300 = arith.mulf %285, %299 : vector<4x128xf32>
    %301 = tpu.concatenate %297, %300 in 1 : vector<4x128xf32>, vector<4x128xf32> -> vector<4x256xf32>
    %302 = arith.truncf %301 : vector<4x256xf32> to vector<4x256xbf16>
    %cst_38 = arith.constant dense<0.000000e+00> : vector<8x256xf32>
    %303 = tpu.matmul %212, %302, %cst_38 {dimension_numbers = #tpu.dot_dimension_numbers<[1], [0], [0], [1], [0, 0, 1, 1], [], []>} : vector<8x4xbf16>, vector<4x256xbf16>, vector<8x256xf32> -> vector<8x256xf32>
    %304 = vector.broadcast %213 : vector<8x1xf32> to vector<8x256xf32>
    %305 = arith.addf %303, %304 : vector<8x256xf32>
    %cst_39 = arith.constant 1.000000e+00 : f32
    %306 = vector.broadcast %cst_39 : f32 to vector<8x1xf32>
    %307 = arith.addf %306, %226 : vector<8x1xf32>
    %308 = vector.broadcast %3 : f32 to vector<8x1xf32>
    %309 = arith.mulf %308, %307 : vector<8x1xf32>
    %310 = vector.extract_strided_slice %203 {offsets = [0, 0], sizes = [1, 256], strides = [1, 1]} : vector<1x512xf32> to vector<1x256xf32>
    %cst_40 = arith.constant 1.000000e+00 : f32
    %311 = vector.broadcast %cst_40 : f32 to vector<1x256xf32>
    %312 = arith.addf %311, %310 : vector<1x256xf32>
    %313 = vector.broadcast %309 : vector<8x1xf32> to vector<8x256xf32>
    %314 = vector.broadcast %312 : vector<1x256xf32> to vector<8x256xf32>
    %315 = arith.mulf %313, %314 : vector<8x256xf32>
    %316 = vector.broadcast %4 : f32 to vector<8x256xf32>
    %317 = arith.addf %315, %316 : vector<8x256xf32>
    %cst_41 = arith.constant 1.000000e+00 : f32
    %318 = vector.broadcast %cst_41 : f32 to vector<8x256xf32>
    %319 = arith.addf %318, %244 : vector<8x256xf32>
    %320 = arith.mulf %319, %305 : vector<8x256xf32>
    %321 = arith.addf %317, %320 : vector<8x256xf32>
    %322 = arith.mulf %214, %321 : vector<8x256xf32>
    %c0_42 = arith.constant 0 : index
    %c0_43 = arith.constant 0 : index
    %323 = vector.load %arg11[%c0_42, %c0_43] : memref<8x512xf32, #tpu.memory_space<vmem>>, vector<8x256xf32>
    tpu.vector_store %arg11[%c0_42, %c0_43], %322 {strides = array<i32>} : memref<8x512xf32, #tpu.memory_space<vmem>>, vector<8x256xf32>,
    %324 = vector.extract_strided_slice %0 {offsets = [0, 256], sizes = [8, 256], strides = [1, 1]} : vector<8x512xf32> to vector<8x256xf32>
    %cst_44 = arith.constant dense<0.000000e+00> : vector<8xf32>
    %325 = vector.multi_reduction <add>, %324, %cst_44 [1] : vector<8x256xf32> to vector<8xf32>
    %326 = vector.shape_cast %325 : vector<8xf32> to vector<8x1xf32>
    %cst_45 = arith.constant 0.00510204071 : f32
    %327 = vector.broadcast %cst_45 : f32 to vector<8x1xf32>
    %328 = arith.mulf %326, %327 : vector<8x1xf32>
    %cst_46 = arith.constant dense<0.000000e+00> : vector<24x1xf32>
    %329 = tpu.matmul %210, %328, %cst_46 {dimension_numbers = #tpu.dot_dimension_numbers<[1], [0], [0], [1], [0, 0, 1, 1], [], []>} : vector<24x8xf32>, vector<8x1xf32>, vector<24x1xf32> -> vector<24x1xf32>
    %330 = arith.addf %329, %211 : vector<24x1xf32>
    %331 = arith.negf %330 : vector<24x1xf32>
    %332 = math.exp %331 : vector<24x1xf32>
    %cst_47 = arith.constant 1.000000e+00 : f32
    %333 = vector.broadcast %cst_47 : f32 to vector<24x1xf32>
    %334 = arith.addf %333, %332 : vector<24x1xf32>
    %335 = arith.divf %333, %334 : vector<24x1xf32>
    %336 = vector.extract_strided_slice %335 {offsets = [0, 0], sizes = [8, 1], strides = [1, 1]} : vector<24x1xf32> to vector<8x1xf32>
    %337 = vector.extract_strided_slice %335 {offsets = [8, 0], sizes = [8, 1], strides = [1, 1]} : vector<24x1xf32> to vector<8x1xf32>
    %338 = vector.extract_strided_slice %335 {offsets = [16, 0], sizes = [8, 1], strides = [1, 1]} : vector<24x1xf32> to vector<8x1xf32>
    %cst_48 = arith.constant dense<0.000000e+00> : vector<8x8xf32>
    %339 = tpu.matmul %338, %337, %cst_48 {dimension_numbers = #tpu.dot_dimension_numbers<[1], [1], [0], [0], [0, 0, 1, 0], [], []>} : vector<8x1xf32>, vector<8x1xf32>, vector<8x8xf32> -> vector<8x8xf32>
    %340 = vector.shape_cast %339 : vector<8x8xf32> to vector<1x8x8xf32>
    %cst_49 = arith.constant dense<0xFF800000> : vector<1xf32>
    %341 = vector.multi_reduction <maximumf>, %340, %cst_49 [1, 2] : vector<1x8x8xf32> to vector<1xf32>
    %342 = vector.shape_cast %341 : vector<1xf32> to vector<1x1x1xf32>
    %343 = vector.extract %342[0, 0, 0] : f32 from vector<1x1x1xf32>
    %344 = vector.broadcast %343 : f32 to vector<8x8xf32>
    %345 = arith.subf %339, %344 : vector<8x8xf32>
    %346 = math.exp %345 : vector<8x8xf32>
    %cst_50 = arith.constant dense<0.000000e+00> : vector<8x256xf32>
    %347 = tpu.matmul %346, %324, %cst_50 {dimension_numbers = #tpu.dot_dimension_numbers<[0], [0], [1], [1], [0, 1, 1, 1], [], []>} : vector<8x8xf32>, vector<8x256xf32>, vector<8x256xf32> -> vector<8x256xf32>
    %348 = vector.shape_cast %346 : vector<8x8xf32> to vector<1x8x8xf32>
    %cst_51 = arith.constant dense<0.000000e+00> : vector<1xf32>
    %349 = vector.multi_reduction <add>, %348, %cst_51 [1, 2] : vector<1x8x8xf32> to vector<1xf32>
    %350 = vector.shape_cast %349 : vector<1xf32> to vector<1x1x1xf32>
    %351 = vector.extract %350[0, 0, 0] : f32 from vector<1x1x1xf32>
    %cst_52 = arith.constant 1.000000e+00 : f32
    %352 = arith.divf %cst_52, %351 : f32
    %353 = vector.broadcast %352 : f32 to vector<8x256xf32>
    %354 = arith.mulf %347, %353 : vector<8x256xf32>
    %355 = vector.extract_strided_slice %209 {offsets = [0, 256], sizes = [4, 256], strides = [1, 1]} : vector<4x512xbf16> to vector<4x256xbf16>
    %356 = vector.extract_strided_slice %207 {offsets = [0, 256], sizes = [5, 256], strides = [1, 1]} : vector<5x512xbf16> to vector<5x256xbf16>
    %357 = vector.extract_strided_slice %2 {offsets = [0, 256], sizes = [1, 256], strides = [1, 1]} : vector<1x512xf32> to vector<1x256xf32>
    %358 = vector.extract_strided_slice %208 {offsets = [0, 256], sizes = [4, 128], strides = [1, 1]} : vector<4x512xbf16> to vector<4x128xbf16>
    %cst_53 = arith.constant dense<0.000000e+00> : vector<256x128xf32>
    %359 = tpu.matmul %355, %358, %cst_53 {dimension_numbers = #tpu.dot_dimension_numbers<[0], [0], [1], [1], [0, 1, 1, 1], [], []>} : vector<4x256xbf16>, vector<4x128xbf16>, vector<256x128xf32> -> vector<256x128xf32>
    %360 = vector.shape_cast %359 : vector<256x128xf32> to vector<1x256x128xf32>
    %cst_54 = arith.constant dense<0xFF800000> : vector<1xf32>
    %361 = vector.multi_reduction <maximumf>, %360, %cst_54 [1, 2] : vector<1x256x128xf32> to vector<1xf32>
    %362 = vector.shape_cast %361 : vector<1xf32> to vector<1x1x1xf32>
    %363 = vector.extract %362[0, 0, 0] : f32 from vector<1x1x1xf32>
    %364 = vector.broadcast %363 : f32 to vector<256x128xf32>
    %365 = arith.subf %359, %364 : vector<256x128xf32>
    %366 = math.exp %365 : vector<256x128xf32>
    %367 = arith.truncf %366 : vector<256x128xf32> to vector<256x128xbf16>
    %cst_55 = arith.constant dense<0.000000e+00> : vector<5x128xf32>
    %368 = tpu.matmul %356, %367, %cst_55 {dimension_numbers = #tpu.dot_dimension_numbers<[1], [0], [0], [1], [0, 0, 1, 1], [], []>} : vector<5x256xbf16>, vector<256x128xbf16>, vector<5x128xf32> -> vector<5x128xf32>
    %369 = vector.extract_strided_slice %368 {offsets = [0, 0], sizes = [1, 128], strides = [1, 1]} : vector<5x128xf32> to vector<1x128xf32>
    %370 = vector.extract_strided_slice %357 {offsets = [0, 0], sizes = [1, 128], strides = [1, 1]} : vector<1x256xf32> to vector<1x128xf32>
    %371 = arith.mulf %369, %370 : vector<1x128xf32>
    %372 = vector.shape_cast %371 : vector<1x128xf32> to vector<1x1x128xf32>
    %cst_56 = arith.constant dense<0.000000e+00> : vector<1xf32>
    %373 = vector.multi_reduction <add>, %372, %cst_56 [1, 2] : vector<1x1x128xf32> to vector<1xf32>
    %374 = vector.shape_cast %373 : vector<1xf32> to vector<1x1x1xf32>
    %375 = vector.extract %374[0, 0, 0] : f32 from vector<1x1x1xf32>
    %376 = vector.extract_strided_slice %368 {offsets = [1, 0], sizes = [4, 128], strides = [1, 1]} : vector<5x128xf32> to vector<4x128xf32>
    %377 = vector.extract_strided_slice %208 {offsets = [0, 384], sizes = [4, 128], strides = [1, 1]} : vector<4x512xbf16> to vector<4x128xbf16>
    %cst_57 = arith.constant dense<0.000000e+00> : vector<256x128xf32>
    %378 = tpu.matmul %355, %377, %cst_57 {dimension_numbers = #tpu.dot_dimension_numbers<[0], [0], [1], [1], [0, 1, 1, 1], [], []>} : vector<4x256xbf16>, vector<4x128xbf16>, vector<256x128xf32> -> vector<256x128xf32>
    %379 = vector.shape_cast %378 : vector<256x128xf32> to vector<1x256x128xf32>
    %cst_58 = arith.constant dense<0xFF800000> : vector<1xf32>
    %380 = vector.multi_reduction <maximumf>, %379, %cst_58 [1, 2] : vector<1x256x128xf32> to vector<1xf32>
    %381 = vector.shape_cast %380 : vector<1xf32> to vector<1x1x1xf32>
    %382 = vector.extract %381[0, 0, 0] : f32 from vector<1x1x1xf32>
    %383 = vector.broadcast %382 : f32 to vector<256x128xf32>
    %384 = arith.subf %378, %383 : vector<256x128xf32>
    %385 = math.exp %384 : vector<256x128xf32>
    %386 = arith.truncf %385 : vector<256x128xf32> to vector<256x128xbf16>
    %cst_59 = arith.constant dense<0.000000e+00> : vector<5x128xf32>
    %387 = tpu.matmul %356, %386, %cst_59 {dimension_numbers = #tpu.dot_dimension_numbers<[1], [0], [0], [1], [0, 0, 1, 1], [], []>} : vector<5x256xbf16>, vector<256x128xbf16>, vector<5x128xf32> -> vector<5x128xf32>
    %388 = vector.extract_strided_slice %387 {offsets = [0, 0], sizes = [1, 128], strides = [1, 1]} : vector<5x128xf32> to vector<1x128xf32>
    %389 = vector.extract_strided_slice %357 {offsets = [0, 128], sizes = [1, 128], strides = [1, 1]} : vector<1x256xf32> to vector<1x128xf32>
    %390 = arith.mulf %388, %389 : vector<1x128xf32>
    %391 = vector.shape_cast %390 : vector<1x128xf32> to vector<1x1x128xf32>
    %cst_60 = arith.constant dense<0.000000e+00> : vector<1xf32>
    %392 = vector.multi_reduction <add>, %391, %cst_60 [1, 2] : vector<1x1x128xf32> to vector<1xf32>
    %393 = vector.shape_cast %392 : vector<1xf32> to vector<1x1x1xf32>
    %394 = vector.extract %393[0, 0, 0] : f32 from vector<1x1x1xf32>
    %395 = vector.extract_strided_slice %387 {offsets = [1, 0], sizes = [4, 128], strides = [1, 1]} : vector<5x128xf32> to vector<4x128xf32>
    %396 = arith.maximumf %363, %382 : f32
    %397 = arith.subf %363, %396 : f32
    %398 = math.exp %397 : f32
    %399 = arith.subf %382, %396 : f32
    %400 = math.exp %399 : f32
    %401 = arith.mulf %375, %398 : f32
    %402 = arith.mulf %394, %400 : f32
    %403 = arith.addf %401, %402 : f32
    %cst_61 = arith.constant 1.000000e+00 : f32
    %404 = arith.divf %cst_61, %403 : f32
    %405 = arith.mulf %398, %404 : f32
    %406 = vector.broadcast %405 : f32 to vector<4x128xf32>
    %407 = arith.mulf %376, %406 : vector<4x128xf32>
    %408 = arith.mulf %400, %404 : f32
    %409 = vector.broadcast %408 : f32 to vector<4x128xf32>
    %410 = arith.mulf %395, %409 : vector<4x128xf32>
    %411 = tpu.concatenate %407, %410 in 1 : vector<4x128xf32>, vector<4x128xf32> -> vector<4x256xf32>
    %412 = arith.truncf %411 : vector<4x256xf32> to vector<4x256xbf16>
    %cst_62 = arith.constant dense<0.000000e+00> : vector<8x256xf32>
    %413 = tpu.matmul %212, %412, %cst_62 {dimension_numbers = #tpu.dot_dimension_numbers<[1], [0], [0], [1], [0, 0, 1, 1], [], []>} : vector<8x4xbf16>, vector<4x256xbf16>, vector<8x256xf32> -> vector<8x256xf32>
    %414 = vector.broadcast %213 : vector<8x1xf32> to vector<8x256xf32>
    %415 = arith.addf %413, %414 : vector<8x256xf32>
    %cst_63 = arith.constant 1.000000e+00 : f32
    %416 = vector.broadcast %cst_63 : f32 to vector<8x1xf32>
    %417 = arith.addf %416, %336 : vector<8x1xf32>
    %418 = vector.broadcast %3 : f32 to vector<8x1xf32>
    %419 = arith.mulf %418, %417 : vector<8x1xf32>
    %420 = vector.extract_strided_slice %203 {offsets = [0, 256], sizes = [1, 256], strides = [1, 1]} : vector<1x512xf32> to vector<1x256xf32>
    %cst_64 = arith.constant 1.000000e+00 : f32
    %421 = vector.broadcast %cst_64 : f32 to vector<1x256xf32>
    %422 = arith.addf %421, %420 : vector<1x256xf32>
    %423 = vector.broadcast %419 : vector<8x1xf32> to vector<8x256xf32>
    %424 = vector.broadcast %422 : vector<1x256xf32> to vector<8x256xf32>
    %425 = arith.mulf %423, %424 : vector<8x256xf32>
    %426 = vector.broadcast %4 : f32 to vector<8x256xf32>
    %427 = arith.addf %425, %426 : vector<8x256xf32>
    %cst_65 = arith.constant 1.000000e+00 : f32
    %428 = vector.broadcast %cst_65 : f32 to vector<8x256xf32>
    %429 = arith.addf %428, %354 : vector<8x256xf32>
    %430 = arith.mulf %429, %415 : vector<8x256xf32>
    %431 = arith.addf %427, %430 : vector<8x256xf32>
    %432 = arith.mulf %324, %431 : vector<8x256xf32>
    %c0_66 = arith.constant 0 : index
    %c256 = arith.constant 256 : index
    %433 = vector.load %arg11[%c0_66, %c256] : memref<8x512xf32, #tpu.memory_space<vmem>>, vector<8x256xf32>
    tpu.vector_store %arg11[%c0_66, %c256], %432 {strides = array<i32>} : memref<8x512xf32, #tpu.memory_space<vmem>>, vector<8x256xf32>,
    return
  }
  func.func @transform_0(%arg0: i32) -> (i32, i32) {
    %c0_i32 = arith.constant 0 : i32
    %c0_i32_0 = arith.constant 0 : i32
    return %c0_i32, %arg0 : i32, i32
  }
  func.func @transform_1(%arg0: i32) -> (i32, i32) {
    %c0_i32 = arith.constant 0 : i32
    %c0_i32_0 = arith.constant 0 : i32
    %c0_i32_1 = arith.constant 0 : i32
    return %c0_i32, %c0_i32_0 : i32, i32
  }
  func.func @transform_2(%arg0: i32) -> (i32, i32) {
    %c0_i32 = arith.constant 0 : i32
    %c0_i32_0 = arith.constant 0 : i32
    %c0_i32_1 = arith.constant 0 : i32
    return %c0_i32, %c0_i32_0 : i32, i32
  }
  func.func @transform_3(%arg0: i32) -> (i32, i32) {
    %c0_i32 = arith.constant 0 : i32
    %c0_i32_0 = arith.constant 0 : i32
    %c0_i32_1 = arith.constant 0 : i32
    return %c0_i32, %c0_i32_0 : i32, i32
  }
  func.func @transform_4(%arg0: i32) -> (i32, i32) {
    %c0_i32 = arith.constant 0 : i32
    %c0_i32_0 = arith.constant 0 : i32
    %c0_i32_1 = arith.constant 0 : i32
    return %c0_i32, %c0_i32_0 : i32, i32
  }
  func.func @transform_5(%arg0: i32) -> (i32, i32) {
    %c0_i32 = arith.constant 0 : i32
    %c0_i32_0 = arith.constant 0 : i32
    %c0_i32_1 = arith.constant 0 : i32
    return %c0_i32, %c0_i32_0 : i32, i32
  }
  func.func @transform_6(%arg0: i32) -> (i32, i32) {
    %c0_i32 = arith.constant 0 : i32
    %c0_i32_0 = arith.constant 0 : i32
    %c0_i32_1 = arith.constant 0 : i32
    return %c0_i32, %c0_i32_0 : i32, i32
  }
  func.func @transform_7(%arg0: i32) -> (i32, i32) {
    %c0_i32 = arith.constant 0 : i32
    %c0_i32_0 = arith.constant 0 : i32
    %c0_i32_1 = arith.constant 0 : i32
    return %c0_i32, %c0_i32_0 : i32, i32
  }
  func.func @transform_8(%arg0: i32) -> (i32, i32) {
    %c0_i32 = arith.constant 0 : i32
    %c0_i32_0 = arith.constant 0 : i32
    %c0_i32_1 = arith.constant 0 : i32
    return %c0_i32, %c0_i32_0 : i32, i32
  }
  func.func @transform_9(%arg0: i32) -> i32 {
    %c0_i32 = arith.constant 0 : i32
    %c0_i32_0 = arith.constant 0 : i32
    return %c0_i32 : i32
  }
  func.func @transform_10(%arg0: i32) -> (i32, i32) {
    %c0_i32 = arith.constant 0 : i32
    %c0_i32_0 = arith.constant 0 : i32
    return %c0_i32, %arg0 : i32, i32
  }
}

</mosaic_0001>

<llo_original>
// kernel: tpu_custom_call.1
$region0: #{tpu_custom_call.1}
  #allocation0 [shape = 'u32[]', space=smem, size = 0x4, offset = 0x4, fixed_abs, tag = 'smem constant byte address 0x4 - core index']
  #allocation1 [shape = 'u32[144,128]{1,0:T(1,128)}', space=vmem, size = 0x12000, scoped, tag = 'internal scratch']
  %s0 = inlined_call_operand.vmem [shape: f32[8,1024], index: 0, kind: input, shape index: {}]
  %s1 = inlined_call_operand.vmem [shape: f32[24,8], index: 1, kind: input, shape index: {}]
  %s2 = inlined_call_operand.vmem [shape: f32[24,1], index: 2, kind: input, shape index: {}]
  %s3 = inlined_call_operand.vmem [shape: bf16[39,8], index: 3, kind: input, shape index: {}]
  %s4 = inlined_call_operand.vmem [shape: f32[39,1], index: 4, kind: input, shape index: {}]
  %s5 = inlined_call_operand.hbm [shape: f32[27,512], index: 5, kind: input, shape index: {}]
  %s6 = inlined_call_operand.vmem [shape: f32[1,512], index: 6, kind: input, shape index: {}]
  %s7 = inlined_call_operand.vmem [shape: bf16[8,4], index: 7, kind: input, shape index: {}]
  %s8 = inlined_call_operand.vmem [shape: f32[8,1], index: 8, kind: input, shape index: {}]
  %s9 = inlined_call_operand.vmem [shape: f32[3], index: 9, kind: input, shape index: {}]
  %s10 = inlined_call_operand.hbm [shape: f32[8,1024], index: 10, kind: output, shape index: {}]
  %s11 = sld [smem:[#allocation0]]
  $region81: #{tpu_custom_call.1} parent=0
    _
  %s13 = ssub.s32 1, %s11
  %s14 = scalar_select 0, %s13, %s11
  $region1: #{tpu_custom_call.1} parent=0
    #allocation2 [shape = 'u8[65536]{0}', space=vmem, size = 0x10000, scoped, tag = 'input window, operand 5, single buffered']
    #allocation3 [shape = 's32[2]{0}', space=sflag, size = 0x8, scoped, tag = 'scoped memory for tpu_custom_call.1']
    #allocation4 [shape = 's32[2]{0}', space=sflag, size = 0x8, scoped, tag = 'scoped memory for tpu_custom_call.1']
    #allocation5 [shape = 's32[2]{0}', space=sflag, size = 0x8, scoped, tag = 'scoped memory for tpu_custom_call.1']
    #allocation6 [shape = 'u8[512]{0}', space=smem, size = 0x200, scoped, tag = 'input window, operand 9, single buffered']
    #allocation7 [shape = 'u8[32768]{0}', space=vmem, size = 0x8000, scoped, tag = 'output window, operand 0']
    %15 = vsyncpa [#allocation3], 0
    %16 = vsyncpa [#allocation5], 0
    %17 = vsyncpa [#allocation4], 0
    %s18 = scalar_lea.sflag [#allocation4], 1
    %19 = vsyncpa %s18, 0
    loop: start=0, step=1, limit=4
    $region2: #{tpu_custom_call.1} parent=1 // loop_pre_header
      _
    $region3: #{tpu_custom_call.1} parent=1 // loop_header
      %s21 = sphi 0, %s25
      %p22 = scmp.ge.s32.totalorder %s21, 4
      %s31 = sphi 0, %s33
      %s34 = sphi 0, %s31
      %s35 = sphi 0, %s34
      %s51 = sphi 0, %s35
      %s55 = sphi 0, %s55
      %s57 = sphi 0, %s55
      %s58 = sphi 0, %s57
      %s72 = sphi 0, %s58
      %s76 = sphi 0, %s76
      %s78 = sphi 0, %s76
      %s79 = sphi 0, %s78
      %s93 = sphi 0, %s79
      %s97 = sphi 0, %s97
      %s99 = sphi 0, %s97
      %s100 = sphi 0, %s99
      %s114 = sphi 0, %s100
      %s118 = sphi 0, %s118
      %s120 = sphi 0, %s118
      %s121 = sphi 0, %s120
      %s135 = sphi 0, %s121
      %s139 = sphi 0, %s139
      %s141 = sphi 0, %s139
      %s142 = sphi 0, %s141
      %s156 = sphi 0, %s142
      %s160 = sphi 0, %s160
      %s162 = sphi 0, %s160
      %s163 = sphi 0, %s162
      %s177 = sphi 0, %s163
      %s181 = sphi 0, %s181
      %s183 = sphi 0, %s181
      %s184 = sphi 0, %s183
      %s198 = sphi 0, %s184
      %s202 = sphi 0, %s202
      %s204 = sphi 0, %s202
      %s205 = sphi 0, %s204
      %s219 = sphi 0, %s205
      %s223 = sphi 0, %s223
      %s225 = sphi 0, %s223
      %s226 = sphi 0, %s225
      %s240 = sphi 0, %s226
      %s246 = sphi 0, %s248
      %s249 = sphi 0, %s246
      %s250 = sphi 0, %s249
      %s266 = sphi 0, %s250
    $region4: #{tpu_custom_call.1} parent=1 // loop_header_branch
      %24 = sbr.rel (%p22) target = $region8
    $region5: #{tpu_custom_call.1} parent=1 // loop_body
      %s26 = ssub.s32 %s21, 1
      %s27 = ssub.s32 %s21, 2
      %s28 = sadd.s32 %s21, 1
      %s29 = ssub.s32 %s21, %s28
      %p30 = scmp.eq.s32.totalorder %s29, 0
      %s32 = sadd.s32 %s31, 1
      %s33 = scalar_select %p30, %s31, %s32
      %p36 = pneg %p30
      %p37 = scmp.eq.s32.totalorder %s21, 1
      %p38 = por %p36, %p37
      %p39 = scmp.ne.s32.totalorder %s31, %s34
      %p40 = scmp.eq.s32.totalorder %s21, 0
      %p41 = por %p39, %p40
      %p42 = scmp.ne.s32.totalorder %s31, %s34
      %p43 = scmp.eq.s32.totalorder %s26, 1
      %p44 = por %p42, %p43
      %p45 = scmp.ne.s32.totalorder %s34, %s35
      %p46 = scmp.eq.s32.totalorder %s26, 0
      %p47 = por %p45, %p46
      %p48 = scmp.ne.s32.totalorder %s34, %s35
      %p49 = scmp.eq.s32.totalorder %s27, 1
      %p50 = por %p48, %p49
      %p52 = scmp.ne.s32.totalorder %s35, %s51
      %p53 = scmp.eq.s32.totalorder %s27, 0
      %p54 = por %p52, %p53
      %s56 = sadd.s32 %s55, 1
      %p59 = scmp.eq.s32.totalorder %s21, 1
      %p60 = scmp.ne.s32.totalorder %s55, %s57
      %p61 = scmp.eq.s32.totalorder %s21, 0
      %p62 = por %p60, %p61
      %p63 = scmp.ne.s32.totalorder %s55, %s57
      %p64 = scmp.eq.s32.totalorder %s26, 1
      %p65 = por %p63, %p64
      %p66 = scmp.ne.s32.totalorder %s57, %s58
      %p67 = scmp.eq.s32.totalorder %s26, 0
      %p68 = por %p66, %p67
      %p69 = scmp.ne.s32.totalorder %s57, %s58
      %p70 = scmp.eq.s32.totalorder %s27, 1
      %p71 = por %p69, %p70
      %p73 = scmp.ne.s32.totalorder %s58, %s72
      %p74 = scmp.eq.s32.totalorder %s27, 0
      %p75 = por %p73, %p74
      %s77 = sadd.s32 %s76, 1
      %p80 = scmp.eq.s32.totalorder %s21, 1
      %p81 = scmp.ne.s32.totalorder %s76, %s78
      %p82 = scmp.eq.s32.totalorder %s21, 0
      %p83 = por %p81, %p82
      %p84 = scmp.ne.s32.totalorder %s76, %s78
      %p85 = scmp.eq.s32.totalorder %s26, 1
      %p86 = por %p84, %p85
      %p87 = scmp.ne.s32.totalorder %s78, %s79
      %p88 = scmp.eq.s32.totalorder %s26, 0
      %p89 = por %p87, %p88
      %p90 = scmp.ne.s32.totalorder %s78, %s79
      %p91 = scmp.eq.s32.totalorder %s27, 1
      %p92 = por %p90, %p91
      %p94 = scmp.ne.s32.totalorder %s79, %s93
      %p95 = scmp.eq.s32.totalorder %s27, 0
      %p96 = por %p94, %p95
      %s98 = sadd.s32 %s97, 1
      %p101 = scmp.eq.s32.totalorder %s21, 1
      %p102 = scmp.ne.s32.totalorder %s97, %s99
      %p103 = scmp.eq.s32.totalorder %s21, 0
      %p104 = por %p102, %p103
      %p105 = scmp.ne.s32.totalorder %s97, %s99
      %p106 = scmp.eq.s32.totalorder %s26, 1
      %p107 = por %p105, %p106
      %p108 = scmp.ne.s32.totalorder %s99, %s100
      %p109 = scmp.eq.s32.totalorder %s26, 0
      %p110 = por %p108, %p109
      %p111 = scmp.ne.s32.totalorder %s99, %s100
      %p112 = scmp.eq.s32.totalorder %s27, 1
      %p113 = por %p111, %p112
      %p115 = scmp.ne.s32.totalorder %s100, %s114
      %p116 = scmp.eq.s32.totalorder %s27, 0
      %p117 = por %p115, %p116
      %s119 = sadd.s32 %s118, 1
      %p122 = scmp.eq.s32.totalorder %s21, 1
      %p123 = scmp.ne.s32.totalorder %s118, %s120
      %p124 = scmp.eq.s32.totalorder %s21, 0
      %p125 = por %p123, %p124
      %p126 = scmp.ne.s32.totalorder %s118, %s120
      %p127 = scmp.eq.s32.totalorder %s26, 1
      %p128 = por %p126, %p127
      %p129 = scmp.ne.s32.totalorder %s120, %s121
      %p130 = scmp.eq.s32.totalorder %s26, 0
      %p131 = por %p129, %p130
      %p132 = scmp.ne.s32.totalorder %s120, %s121
      %p133 = scmp.eq.s32.totalorder %s27, 1
      %p134 = por %p132, %p133
      %p136 = scmp.ne.s32.totalorder %s121, %s135
      %p137 = scmp.eq.s32.totalorder %s27, 0
      %p138 = por %p136, %p137
      %s140 = sadd.s32 %s139, 1
      %p143 = scmp.eq.s32.totalorder %s21, 1
      %p144 = scmp.ne.s32.totalorder %s139, %s141
      %p145 = scmp.eq.s32.totalorder %s21, 0
      %p146 = por %p144, %p145
      %p147 = scmp.ne.s32.totalorder %s139, %s141
      %p148 = scmp.eq.s32.totalorder %s26, 1
      %p149 = por %p147, %p148
      %p150 = scmp.ne.s32.totalorder %s141, %s142
      %p151 = scmp.eq.s32.totalorder %s26, 0
      %p152 = por %p150, %p151
      %p153 = scmp.ne.s32.totalorder %s141, %s142
      %p154 = scmp.eq.s32.totalorder %s27, 1
      %p155 = por %p153, %p154
      %p157 = scmp.ne.s32.totalorder %s142, %s156
      %p158 = scmp.eq.s32.totalorder %s27, 0
      %p159 = por %p157, %p158
      %s161 = sadd.s32 %s160, 1
      %p164 = scmp.eq.s32.totalorder %s21, 1
      %p165 = scmp.ne.s32.totalorder %s160, %s162
      %p166 = scmp.eq.s32.totalorder %s21, 0
      %p167 = por %p165, %p166
      %p168 = scmp.ne.s32.totalorder %s160, %s162
      %p169 = scmp.eq.s32.totalorder %s26, 1
      %p170 = por %p168, %p169
      %p171 = scmp.ne.s32.totalorder %s162, %s163
      %p172 = scmp.eq.s32.totalorder %s26, 0
      %p173 = por %p171, %p172
      %p174 = scmp.ne.s32.totalorder %s162, %s163
      %p175 = scmp.eq.s32.totalorder %s27, 1
      %p176 = por %p174, %p175
      %p178 = scmp.ne.s32.totalorder %s163, %s177
      %p179 = scmp.eq.s32.totalorder %s27, 0
      %p180 = por %p178, %p179
      %s182 = sadd.s32 %s181, 1
      %p185 = scmp.eq.s32.totalorder %s21, 1
      %p186 = scmp.ne.s32.totalorder %s181, %s183
      %p187 = scmp.eq.s32.totalorder %s21, 0
      %p188 = por %p186, %p187
      %p189 = scmp.ne.s32.totalorder %s181, %s183
      %p190 = scmp.eq.s32.totalorder %s26, 1
      %p191 = por %p189, %p190
      %p192 = scmp.ne.s32.totalorder %s183, %s184
      %p193 = scmp.eq.s32.totalorder %s26, 0
      %p194 = por %p192, %p193
      %p195 = scmp.ne.s32.totalorder %s183, %s184
      %p196 = scmp.eq.s32.totalorder %s27, 1
      %p197 = por %p195, %p196
      %p199 = scmp.ne.s32.totalorder %s184, %s198
      %p200 = scmp.eq.s32.totalorder %s27, 0
      %p201 = por %p199, %p200
      %s203 = sadd.s32 %s202, 1
      %p206 = scmp.eq.s32.totalorder %s21, 1
      %p207 = scmp.ne.s32.totalorder %s202, %s204
      %p208 = scmp.eq.s32.totalorder %s21, 0
      %p209 = por %p207, %p208
      %p210 = scmp.ne.s32.totalorder %s202, %s204
      %p211 = scmp.eq.s32.totalorder %s26, 1
      %p212 = por %p210, %p211
      %p213 = scmp.ne.s32.totalorder %s204, %s205
      %p214 = scmp.eq.s32.totalorder %s26, 0
      %p215 = por %p213, %p214
      %p216 = scmp.ne.s32.totalorder %s204, %s205
      %p217 = scmp.eq.s32.totalorder %s27, 1
      %p218 = por %p216, %p217
      %p220 = scmp.ne.s32.totalorder %s205, %s219
      %p221 = scmp.eq.s32.totalorder %s27, 0
      %p222 = por %p220, %p221
      %s224 = sadd.s32 %s223, 1
      %p227 = scmp.eq.s32.totalorder %s21, 1
      %p228 = scmp.ne.s32.totalorder %s223, %s225
      %p229 = scmp.eq.s32.totalorder %s21, 0
      %p230 = por %p228, %p229
      %p231 = scmp.ne.s32.totalorder %s223, %s225
      %p232 = scmp.eq.s32.totalorder %s26, 1
      %p233 = por %p231, %p232
      %p234 = scmp.ne.s32.totalorder %s225, %s226
      %p235 = scmp.eq.s32.totalorder %s26, 0
      %p236 = por %p234, %p235
      %p237 = scmp.ne.s32.totalorder %s225, %s226
      %p238 = scmp.eq.s32.totalorder %s27, 1
      %p239 = por %p237, %p238
      %p241 = scmp.ne.s32.totalorder %s226, %s240
      %p242 = scmp.eq.s32.totalorder %s27, 0
      %p243 = por %p241, %p242
      %s244 = ssub.s32 %s21, %s28
      %p245 = scmp.eq.s32.totalorder %s244, 0
      %s247 = sadd.s32 %s246, 1
      %s248 = scalar_select %p245, %s246, %s247
      %p251 = pneg %p245
      %p252 = scmp.eq.s32.totalorder %s21, 1
      %p253 = por %p251, %p252
      %p254 = scmp.ne.s32.totalorder %s246, %s249
      %p255 = scmp.eq.s32.totalorder %s21, 0
      %p256 = por %p254, %p255
      %p257 = scmp.ne.s32.totalorder %s246, %s249
      %p258 = scmp.eq.s32.totalorder %s26, 1
      %p259 = por %p257, %p258
      %p260 = scmp.ne.s32.totalorder %s249, %s250
      %p261 = scmp.eq.s32.totalorder %s26, 0
      %p262 = por %p260, %p261
      %p263 = scmp.ne.s32.totalorder %s249, %s250
      %p264 = scmp.eq.s32.totalorder %s27, 1
      %p265 = por %p263, %p264
      %p267 = scmp.ne.s32.totalorder %s250, %s266
      %p268 = scmp.eq.s32.totalorder %s27, 0
      %p269 = por %p267, %p268
      %p270 = scmp.le.s32.totalorder 1, %s21
      %p271 = scmp.lt.s32.totalorder %s21, 3
      %p272 = pnand %p270, %p271
      %p273 = pneg %p272
      // Predicated region
      $region9: #{tpu_custom_call.1} parent=5 // pred_check
        _
      $region10: #{tpu_custom_call.1} parent=5 // pred_check_branch
        %275 = sbr.rel (%p272) target = $region12
      $region11: #{tpu_custom_call.1} parent=5 // pred_region
        %s276 = ssub.s32 %s21, 1
        // Predicated region
        $region13: #{tpu_custom_call.1} parent=11 // pred_check
          %p277 = pneg %p68
        $region14: #{tpu_custom_call.1} parent=11 // pred_check_branch
          %279 = sbr.rel (%p277) target = $region16
        $region15: #{tpu_custom_call.1} parent=11 // pred_region
          _
        $region16: #{tpu_custom_call.1} parent=11 // pred_fallthru
          _
        // Predicated region
        $region17: #{tpu_custom_call.1} parent=11 // pred_check
          %p280 = pneg %p89
        $region18: #{tpu_custom_call.1} parent=11 // pred_check_branch
          %282 = sbr.rel (%p280) target = $region20
        $region19: #{tpu_custom_call.1} parent=11 // pred_region
          _
        $region20: #{tpu_custom_call.1} parent=11 // pred_fallthru
          _
        // Predicated region
        $region21: #{tpu_custom_call.1} parent=11 // pred_check
          %p283 = pneg %p110
        $region22: #{tpu_custom_call.1} parent=11 // pred_check_branch
          %285 = sbr.rel (%p283) target = $region24
        $region23: #{tpu_custom_call.1} parent=11 // pred_region
          _
        $region24: #{tpu_custom_call.1} parent=11 // pred_fallthru
          _
        // Predicated region
        $region25: #{tpu_custom_call.1} parent=11 // pred_check
          %p286 = pneg %p131
        $region26: #{tpu_custom_call.1} parent=11 // pred_check_branch
          %288 = sbr.rel (%p286) target = $region28
        $region27: #{tpu_custom_call.1} parent=11 // pred_region
          _
        $region28: #{tpu_custom_call.1} parent=11 // pred_fallthru
          _
        // Predicated region
        $region29: #{tpu_custom_call.1} parent=11 // pred_check
          %p289 = pneg %p152
        $region30: #{tpu_custom_call.1} parent=11 // pred_check_branch
          %291 = sbr.rel (%p289) target = $region32
        $region31: #{tpu_custom_call.1} parent=11 // pred_region
          %s293 = ssub.s32 2048, 2048
          %294 = vsyncadd [#allocation3], %s293
          %s295 = sshll.u32 [#allocation2], 4
          %s296 = int_to_ptr.vmem [resolvable:$true] %s295
          %301 = dma.hbm_to_vmem [thread:$0]  %s5, 2048, %s296, [#allocation3], 512, 512, 32
        $region32: #{tpu_custom_call.1} parent=11 // pred_fallthru
          _
        // Predicated region
        $region33: #{tpu_custom_call.1} parent=11 // pred_check
          %p302 = pneg %p173
        $region34: #{tpu_custom_call.1} parent=11 // pred_check_branch
          %304 = sbr.rel (%p302) target = $region36
        $region35: #{tpu_custom_call.1} parent=11 // pred_region
          _
        $region36: #{tpu_custom_call.1} parent=11 // pred_fallthru
          _
        // Predicated region
        $region37: #{tpu_custom_call.1} parent=11 // pred_check
          %p305 = pneg %p194
        $region38: #{tpu_custom_call.1} parent=11 // pred_check_branch
          %307 = sbr.rel (%p305) target = $region40
        $region39: #{tpu_custom_call.1} parent=11 // pred_region
          _
        $region40: #{tpu_custom_call.1} parent=11 // pred_fallthru
          _
        // Predicated region
        $region41: #{tpu_custom_call.1} parent=11 // pred_check
          %p308 = pneg %p215
        $region42: #{tpu_custom_call.1} parent=11 // pred_check_branch
          %310 = sbr.rel (%p308) target = $region44
        $region43: #{tpu_custom_call.1} parent=11 // pred_region
          _
        $region44: #{tpu_custom_call.1} parent=11 // pred_fallthru
          _
        // Predicated region
        $region45: #{tpu_custom_call.1} parent=11 // pred_check
          %p311 = pneg %p236
        $region46: #{tpu_custom_call.1} parent=11 // pred_check_branch
          %313 = sbr.rel (%p311) target = $region48
        $region47: #{tpu_custom_call.1} parent=11 // pred_region
          %s315 = ssub.s32 16, 16
          %316 = vsyncadd [#allocation5], %s315
          %s318 = sshll.u32 %s9, 4
          %s319 = int_to_ptr.vmem [resolvable:$true] %s318
          %321 = dma.vmem_to_smem %s319, 16, [#allocation6], [#allocation5]
        $region48: #{tpu_custom_call.1} parent=11 // pred_fallthru
          _
      $region12: #{tpu_custom_call.1} parent=5 // pred_fallthru
        _
      %p322 = scmp.lt.s32.totalorder %s21, 2
      // Predicated region
      $region49: #{tpu_custom_call.1} parent=5 // pred_check
        %p323 = pneg %p322
      $region50: #{tpu_custom_call.1} parent=5 // pred_check_branch
        %325 = sbr.rel (%p323) target = $region52
      $region51: #{tpu_custom_call.1} parent=5 // pred_region
        // Predicated region
        $region53: #{tpu_custom_call.1} parent=51 // pred_check
          %p326 = pneg %p41
        $region54: #{tpu_custom_call.1} parent=51 // pred_check_branch
          %328 = sbr.rel (%p326) target = $region56
        $region55: #{tpu_custom_call.1} parent=51 // pred_region
          %s329 = smul.u32 4, %s21
          %p330 = scmp.lt.s32.totalorder %s329, 7
          %s331 = scalar_select %p330, %s329, 7
          %s332 = smul.addr %s331, 8
          %s333 = scalar_lea.vmem %s0, %s332
          %s334 = smul.u32 4, %s21
        $region56: #{tpu_custom_call.1} parent=51 // pred_fallthru
          _
      $region52: #{tpu_custom_call.1} parent=5 // pred_fallthru
        _
      %p335 = scmp.le.s32.totalorder 1, %s21
      %p336 = scmp.lt.s32.totalorder %s21, 3
      %p337 = pnand %p335, %p336
      %p338 = pneg %p337
      // Predicated region
      $region57: #{tpu_custom_call.1} parent=5 // pred_check
        _
      $region58: #{tpu_custom_call.1} parent=5 // pred_check_branch
        %340 = sbr.rel (%p337) target = $region60
      $region59: #{tpu_custom_call.1} parent=5 // pred_region
        %s341 = ssub.s32 %s21, 1
        // Predicated region
        $region61: #{tpu_custom_call.1} parent=59 // pred_check
          %p342 = pneg %p152
        $region62: #{tpu_custom_call.1} parent=59 // pred_check_branch
          %344 = sbr.rel (%p342) target = $region64
        $region63: #{tpu_custom_call.1} parent=59 // pred_region
          %345 = dma.done [#allocation3], 2048
        $region64: #{tpu_custom_call.1} parent=59 // pred_fallthru
          _
        // Predicated region
        $region65: #{tpu_custom_call.1} parent=59 // pred_check
          %p346 = pneg %p236
        $region66: #{tpu_custom_call.1} parent=59 // pred_check_branch
          %348 = sbr.rel (%p346) target = $region68
        $region67: #{tpu_custom_call.1} parent=59 // pred_region
          %349 = dma.done [#allocation5], 16
        $region68: #{tpu_custom_call.1} parent=59 // pred_fallthru
          _
        %350 = sfence
        %s351 = smul.u32 4, %s26
        %p352 = scmp.lt.s32.totalorder %s351, 7
        %s353 = scalar_select %p352, %s351, 7
        %s354 = smul.addr %s353, 8
        %s355 = scalar_lea.vmem %s0, %s354
        %p356 = pneg %p47
        %p357 = pneg %p44
        %p358 = pneg %p68
        %p359 = pneg %p65
        %p360 = pneg %p89
        %p361 = pneg %p86
        %p362 = pneg %p110
        %p363 = pneg %p107
        %p364 = pneg %p131
        %p365 = pneg %p128
        %p366 = pneg %p152
        %p367 = pneg %p149
        %p368 = pneg %p173
        %p369 = pneg %p170
        %p370 = pneg %p194
        %p371 = pneg %p191
        %p372 = pneg %p215
        %p373 = pneg %p212
        %p374 = pneg %p236
        %p375 = pneg %p233
        %p376 = pneg %p262
        %p377 = pneg %p259
        %s378 = sand.u32 %s249, 1
        %s379 = scalar_lea.sflag [#allocation4], %s378
        %s380 = sand.u32 %s249, 1
        %s381 = smul.addr %s380, 32
        %s382 = scalar_lea.vmem [#allocation7], %s381
        %s383 = smul.u32 4, %s26
        %p384 = scmp.lt.s32.totalorder %s383, 7
        %s385 = scalar_select %p384, %s383, 7
        %s386 = smul.addr %s385, 8
        %s387 = scalar_lea.vmem %s0, %s386
        %s388 = smul.u32 4, %s26
        %s389 = smul.u32 4, %s26
        %v391 = vld [vmem:[%s387] sm:$0xff]
        %v392 = vld [vmem:[%s387 + $0x8] sm:$0xff]
        %v393 = vld [vmem:[%s387 + $0x10] sm:$0xff]
        %v394 = vld [vmem:[%s387 + $0x18] sm:$0xff]
        %v395 = vpack.c.bf16 %v391, %v391
        %v396 = vpack.c.bf16 %v392, %v392
        %v397 = vpack.c.bf16 %v393, %v393
        %v398 = vpack.c.bf16 %v394, %v394
        %v399 = vld [vmem:[%s6] sm:$0xf]
        %s400 = sld [smem:[#allocation6]]
        %s401 = sld [smem:[#allocation6 + $0x1]]
        %s402 = sld [smem:[#allocation6 + $0x2]]
        %v403 = vld [vmem:[%s3] sm:$0xf]
        %v404 = vld [vmem:[%s3 + $0x4] sm:$0xf]
        %v405 = vld [vmem:[%s3 + $0x8] sm:$0xf]
        %v406 = vld [vmem:[%s3 + $0xc] sm:$0xf]
        %v407 = vld [vmem:[%s3 + $0x10] sm:$0xf]
        %v408 = vld [vmem:[%s4] sm:$0xff]
        %v409 = vld [vmem:[%s4 + $0x8] sm:$0xff]
        %v410 = vld [vmem:[%s4 + $0x10] sm:$0xff]
        %v411 = vld [vmem:[%s4 + $0x18] sm:$0xff]
        %v412 = vld [vmem:[%s4 + $0x20] sm:$0x7f]
        %414 = vset.pattern.permute.xlu0 0
        %415 = vperm.xlu0 %414, %v408
        %v416 = vpop.permute.xlu0 %415
        %419 = vset.pattern.permute.xlu0 0
        %420 = vperm.xlu0 %419, %v409
        %v421 = vpop.permute.xlu0 %420
        %424 = vset.pattern.permute.xlu0 0
        %425 = vperm.xlu0 %424, %v410
        %v426 = vpop.permute.xlu0 %425
        %429 = vset.pattern.permute.xlu0 0
        %430 = vperm.xlu0 %429, %v411
        %v431 = vpop.permute.xlu0 %430
        %434 = vset.pattern.permute.xlu0 0
        %435 = vperm.xlu0 %434, %v412
        %v436 = vpop.permute.xlu0 %435
        %v443 = vunpack.c.l.b16 %v403
        %v444 = vunpack.c.l.b16 %v404
        %v445 = vunpack.c.l.b16 %v405
        %v446 = vunpack.c.l.b16 %v406
        %v447 = vunpack.c.l.b16 %v407
        %v448 = vpack.c.b16 %v444, %v443
        %v449 = vpack.c.b16 %v446, %v445
        %v450 = vpack.c.b16 %v447, %v447
        %vm451 = vcmask 64512
        %v453 = vsel %vm451, %v448, 0
        %v456 = vsel %vm451, %v449, 0
        %v459 = vsel %vm451, %v450, 0
        %vm461 = vcmask 1043456
        %v463 = vsel %vm461, %v395, 0
        %v466 = vsel %vm461, %v396, 0
        %v469 = vsel %vm461, %v397, 0
        %v472 = vsel %vm461, %v398, 0
        %474 = vmatprep.subr.bf16.mxu0 0
        %475 = vmatpush1.bf16.msra.mxu0 0
        %476 = vmatprep.subr.bf16.mxu0 0
        %477 = vmatpush1.bf16.msra.mxu0 0
        %478 = vmatprep.subr.bf16.mxu0 0
        %479 = vmatpush1.bf16.msra.mxu0 0
        %480 = vmatprep.subr.bf16.mxu0 0
        %481 = vmatpush1.bf16.msra.mxu0 0
        %482 = vmatprep.subr.bf16.mxu0 0
        %483 = vmatpush1.bf16.msra.mxu0 0
        %484 = vmatprep.subr.bf16.mxu0 0
        %485 = vmatpush1.bf16.msra.mxu0 0
        %486 = vmatprep.subr.bf16.mxu0 0
        %487 = vmatpush1.bf16.msra.mxu0 0
        %488 = vmatprep.subr.bf16.mxu0 %v466
        %489 = vmatpush1.bf16.msra.mxu0 %v463
        %490 = vmatprep.subr.bf16.mxu0 0
        %491 = vmatpush2.bf16.msra.mxu0 0
        %492 = vmatprep.subr.bf16.mxu0 0
        %493 = vmatpush2.bf16.msra.mxu0 0
        %494 = vmatprep.subr.bf16.mxu0 0
        %495 = vmatpush2.bf16.msra.mxu0 0
        %496 = vmatprep.subr.bf16.mxu0 0
        %497 = vmatpush2.bf16.msra.mxu0 0
        %498 = vmatprep.subr.bf16.mxu0 0
        %499 = vmatpush2.bf16.msra.mxu0 0
        %500 = vmatprep.subr.bf16.mxu0 0
        %501 = vmatpush2.bf16.msra.mxu0 0
        %502 = vmatprep.subr.bf16.mxu0 0
        %503 = vmatpush2.bf16.msra.mxu0 0
        %504 = vmatprep.subr.bf16.mxu0 0
        %505 = vmatpush2.bf16.msra.mxu0 0
        %506 = vmatprep.mubr.bf16.mxu0 0
        %507 = vmatmul.mubr.bf16.gmra.mxu0 %v453
        %v508 = vpop.f32.mrf.mxu0
        %v509 = vadd.f32 %v416, %v508
        %v510 = vpop.f32.mrf.mxu0
        %v511 = vadd.f32 %v416, %v510
        %v512 = vpop.f32.mrf.mxu0
        %v513 = vadd.f32 %v421, %v512
        %v514 = vpop.f32.mrf.mxu0
        %v515 = vadd.f32 %v421, %v514
        %516 = vmatprep.mubr.bf16.mxu0 0
        %517 = vmatmul.mubr.bf16.gmra.mxu0 %v456
        %v518 = vpop.f32.mrf.mxu0
        %v519 = vadd.f32 %v426, %v518
        %v520 = vpop.f32.mrf.mxu0
        %v521 = vadd.f32 %v426, %v520
        %v522 = vpop.f32.mrf.mxu0
        %v523 = vadd.f32 %v431, %v522
        %v524 = vpop.f32.mrf.mxu0
        %v525 = vadd.f32 %v431, %v524
        %526 = vmatprep.mubr.bf16.mxu0 0
        %527 = vmatmul.mubr.bf16.gmra.mxu0 %v459
        %v528 = vpop.f32.mrf.mxu0
        %v529 = vadd.f32 %v436, %v528
        %v530 = vpop.f32.mrf.mxu0
        %v531 = vadd.f32 %v436, %v530
        %v532 = vpop.f32.mrf.mxu0
        %v533 = vpop.f32.mrf.mxu0
        %534 = vdwg.mxu0
        %535 = vmatprep.subr.bf16.mxu0 0
        %536 = vmatpush1.bf16.msra.mxu0 0
        %537 = vmatprep.subr.bf16.mxu0 0
        %538 = vmatpush1.bf16.msra.mxu0 0
        %539 = vmatprep.subr.bf16.mxu0 0
        %540 = vmatpush1.bf16.msra.mxu0 0
        %541 = vmatprep.subr.bf16.mxu0 0
        %542 = vmatpush1.bf16.msra.mxu0 0
        %543 = vmatprep.subr.bf16.mxu0 0
        %544 = vmatpush1.bf16.msra.mxu0 0
        %545 = vmatprep.subr.bf16.mxu0 0
        %546 = vmatpush1.bf16.msra.mxu0 0
        %547 = vmatprep.subr.bf16.mxu0 0
        %548 = vmatpush1.bf16.msra.mxu0 0
        %549 = vmatprep.subr.bf16.mxu0 %v472
        %550 = vmatpush1.bf16.msra.mxu0 %v469
        %551 = vmatprep.subr.bf16.mxu0 0
        %552 = vmatpush2.bf16.msra.mxu0 0
        %553 = vmatprep.subr.bf16.mxu0 0
        %554 = vmatpush2.bf16.msra.mxu0 0
        %555 = vmatprep.subr.bf16.mxu0 0
        %556 = vmatpush2.bf16.msra.mxu0 0
        %557 = vmatprep.subr.bf16.mxu0 0
        %558 = vmatpush2.bf16.msra.mxu0 0
        %559 = vmatprep.subr.bf16.mxu0 0
        %560 = vmatpush2.bf16.msra.mxu0 0
        %561 = vmatprep.subr.bf16.mxu0 0
        %562 = vmatpush2.bf16.msra.mxu0 0
        %563 = vmatprep.subr.bf16.mxu0 0
        %564 = vmatpush2.bf16.msra.mxu0 0
        %565 = vmatprep.subr.bf16.mxu0 0
        %566 = vmatpush2.bf16.msra.mxu0 0
        %567 = vmatprep.mubr.bf16.mxu0 0
        %568 = vmatmul.mubr.bf16.gmra.mxu0 %v453
        %v569 = vpop.f32.mrf.mxu0
        %v570 = vadd.f32 %v416, %v569
        %v571 = vpop.f32.mrf.mxu0
        %v572 = vadd.f32 %v416, %v571
        %v573 = vpop.f32.mrf.mxu0
        %v574 = vadd.f32 %v421, %v573
        %v575 = vpop.f32.mrf.mxu0
        %v576 = vadd.f32 %v421, %v575
        %577 = vmatprep.mubr.bf16.mxu0 0
        %578 = vmatmul.mubr.bf16.gmra.mxu0 %v456
        %v579 = vpop.f32.mrf.mxu0
        %v580 = vadd.f32 %v426, %v579
        %v581 = vpop.f32.mrf.mxu0
        %v582 = vadd.f32 %v426, %v581
        %v583 = vpop.f32.mrf.mxu0
        %v584 = vadd.f32 %v431, %v583
        %v585 = vpop.f32.mrf.mxu0
        %v586 = vadd.f32 %v431, %v585
        %587 = vmatprep.mubr.bf16.mxu0 0
        %588 = vmatmul.mubr.bf16.gmra.mxu0 %v459
        %v589 = vpop.f32.mrf.mxu0
        %v590 = vadd.f32 %v436, %v589
        %v591 = vpop.f32.mrf.mxu0
        %v592 = vadd.f32 %v436, %v591
        %v593 = vpop.f32.mrf.mxu0
        %v594 = vpop.f32.mrf.mxu0
        %595 = vdwg.mxu0
        %v596 = vld [vmem:[#allocation2] sm:$0xff]
        %v597 = vld [vmem:[#allocation2 + $0x8] sm:$0xff]
        %v598 = vld [vmem:[#allocation2 + $0x10] sm:$0xff]
        %v599 = vld [vmem:[#allocation2 + $0x18] sm:$0xff]
        %v600 = vld [vmem:[#allocation2 + $0x20] sm:$0xff]
        %v601 = vld [vmem:[#allocation2 + $0x28] sm:$0xff]
        %v602 = vld [vmem:[#allocation2 + $0x30] sm:$0xff]
        %v603 = vld [vmem:[#allocation2 + $0x38] sm:$0xff]
        %v604 = vld [vmem:[#allocation2 + $0x40] sm:$0xff]
        %v605 = vld [vmem:[#allocation2 + $0x48] sm:$0xff]
        %v606 = vld [vmem:[#allocation2 + $0x50] sm:$0xff]
        %v607 = vld [vmem:[#allocation2 + $0x58] sm:$0xff]
        %v608 = vld [vmem:[#allocation2 + $0x60] sm:$0x7]
        %v609 = vld [vmem:[#allocation2 + $0x68] sm:$0x7]
        %v610 = vld [vmem:[#allocation2 + $0x70] sm:$0x7]
        %v611 = vld [vmem:[#allocation2 + $0x78] sm:$0x7]
        %613 = vrot.lane.b32.xlu0 %v576, 15
        %v614 = vpop.permute.xlu0 %613
        %619 = vrot.lane.b32.xlu0 %v513, 15
        %v620 = vpop.permute.xlu0 %619
        %621 = vrot.lane.b32.xlu0 %v515, 15
        %v622 = vpop.permute.xlu0 %621
        %623 = vrot.lane.b32.xlu0 %v574, 15
        %v624 = vpop.permute.xlu0 %623
        %vm625 = vcmask 121856
        %v626 = vsel %vm625, %v620, %v622
        %v627 = vsel %vm625, %v622, %v624
        %v628 = vsel %vm625, %v624, %v614
        %v633 = vsel %vm625, %v614, %v620
        %v638 = vrot.slane %v596, 4
        %v639 = vrot.slane %v597, 4
        %v640 = vrot.slane %v598, 4
        %v641 = vrot.slane %v599, 4
        %v646 = vmul.f32 %v633, %v638
        %v647 = vmul.f32 %v626, %v639
        %v648 = vmul.f32 %v627, %v640
        %v649 = vmul.f32 %v628, %v641
        %v650 = vadd.f32 %v646, 0.0
        %v651 = vadd.f32 %v647, 0.0
        %v652 = vadd.f32 %v648, 0.0
        %v653 = vadd.f32 %v649, 0.0
        %654 = vrot.lane.b32.xlu0 %v576, 14
        %v655 = vpop.permute.xlu0 %654
        %657 = vrot.lane.b32.xlu0 %v513, 14
        %v658 = vpop.permute.xlu0 %657
        %659 = vrot.lane.b32.xlu0 %v515, 14
        %v660 = vpop.permute.xlu0 %659
        %661 = vrot.lane.b32.xlu0 %v574, 14
        %v662 = vpop.permute.xlu0 %661
        %vm663 = vcmask 113664
        %v664 = vsel %vm663, %v658, %v660
        %v665 = vsel %vm663, %v660, %v662
        %v666 = vsel %vm663, %v662, %v655
        %v671 = vsel %vm663, %v655, %v658
        %v672 = vmul.f32 %v671, %v638
        %v673 = vmul.f32 %v664, %v639
        %v674 = vmul.f32 %v665, %v640
        %v675 = vmul.f32 %v666, %v641
        %v680 = vrot.slane %v672, 1
        %v681 = vrot.slane %v673, 1
        %v682 = vrot.slane %v674, 1
        %v683 = vrot.slane %v675, 1
        %v688 = vadd.f32 %v650, %v680
        %v689 = vadd.f32 %v651, %v681
        %v690 = vadd.f32 %v652, %v682
        %v691 = vadd.f32 %v653, %v683
        %692 = vrot.lane.b32.xlu0 %v576, 13
        %v693 = vpop.permute.xlu0 %692
        %695 = vrot.lane.b32.xlu0 %v513, 13
        %v696 = vpop.permute.xlu0 %695
        %697 = vrot.lane.b32.xlu0 %v515, 13
        %v698 = vpop.permute.xlu0 %697
        %699 = vrot.lane.b32.xlu0 %v574, 13
        %v700 = vpop.permute.xlu0 %699
        %vm701 = vcmask 105472
        %v702 = vsel %vm701, %v696, %v698
        %v703 = vsel %vm701, %v698, %v700
        %v704 = vsel %vm701, %v700, %v693
        %v709 = vsel %vm701, %v693, %v696
        %v710 = vmul.f32 %v709, %v638
        %v711 = vmul.f32 %v702, %v639
        %v712 = vmul.f32 %v703, %v640
        %v713 = vmul.f32 %v704, %v641
        %v718 = vrot.slane %v710, 2
        %v719 = vrot.slane %v711, 2
        %v720 = vrot.slane %v712, 2
        %v721 = vrot.slane %v713, 2
        %v726 = vadd.f32 %v688, %v718
        %v727 = vadd.f32 %v689, %v719
        %v728 = vadd.f32 %v690, %v720
        %v729 = vadd.f32 %v691, %v721
        %730 = vrot.lane.b32.xlu0 %v576, 1
        %v731 = vpop.permute.xlu0 %730
        %733 = vrot.lane.b32.xlu0 %v513, 1
        %v734 = vpop.permute.xlu0 %733
        %735 = vrot.lane.b32.xlu0 %v515, 1
        %v736 = vpop.permute.xlu0 %735
        %737 = vrot.lane.b32.xlu0 %v574, 1
        %v738 = vpop.permute.xlu0 %737
        %vm739 = vcmask 7168
        %v740 = vsel %vm739, %v734, %v736
        %v741 = vsel %vm739, %v736, %v738
        %v742 = vsel %vm739, %v738, %v731
        %v747 = vsel %vm739, %v731, %v734
        %v748 = vmul.f32 %v747, %v638
        %v749 = vmul.f32 %v740, %v639
        %v750 = vmul.f32 %v741, %v640
        %v751 = vmul.f32 %v742, %v641
        %v756 = vrot.slane %v748, 3
        %v757 = vrot.slane %v749, 3
        %v758 = vrot.slane %v750, 3
        %v759 = vrot.slane %v751, 3
        %v764 = vadd.f32 %v726, %v756
        %v765 = vadd.f32 %v727, %v757
        %v766 = vadd.f32 %v728, %v758
        %v767 = vadd.f32 %v729, %v759
        %v768 = vmul.f32 %v519, %v638
        %v769 = vmul.f32 %v521, %v639
        %v770 = vmul.f32 %v580, %v640
        %v771 = vmul.f32 %v582, %v641
        %v776 = vrot.slane %v768, 4
        %v777 = vrot.slane %v769, 4
        %v778 = vrot.slane %v770, 4
        %v779 = vrot.slane %v771, 4
        %v784 = vadd.f32 %v764, %v776
        %v785 = vadd.f32 %v765, %v777
        %v786 = vadd.f32 %v766, %v778
        %v787 = vadd.f32 %v767, %v779
        %792 = vrot.lane.b32.xlu0 %v519, 127
        %v793 = vpop.permute.xlu0 %792
        %794 = vrot.lane.b32.xlu0 %v521, 127
        %v795 = vpop.permute.xlu0 %794
        %796 = vrot.lane.b32.xlu0 %v580, 127
        %v797 = vpop.permute.xlu0 %796
        %798 = vrot.lane.b32.xlu0 %v582, 127
        %v799 = vpop.permute.xlu0 %798
        %vm800 = vcmask 1039360
        %v801 = vsel %vm800, %v793, %v795
        %v802 = vsel %vm800, %v795, %v797
        %v803 = vsel %vm800, %v797, %v799
        %v809 = vsel %vm800, %v799, %v793
        %v810 = vmul.f32 %v801, %v638
        %v811 = vmul.f32 %v802, %v639
        %v812 = vmul.f32 %v803, %v640
        %v813 = vmul.f32 %v809, %v641
        %v818 = vrot.slane %v810, 5
        %v819 = vrot.slane %v811, 5
        %v820 = vrot.slane %v812, 5
        %v821 = vrot.slane %v813, 5
        %v826 = vadd.f32 %v784, %v818
        %v827 = vadd.f32 %v785, %v819
        %v828 = vadd.f32 %v786, %v820
        %v829 = vadd.f32 %v787, %v821
        %830 = vrot.lane.b32.xlu0 %v519, 115
        %v831 = vpop.permute.xlu0 %830
        %832 = vrot.lane.b32.xlu0 %v521, 115
        %v833 = vpop.permute.xlu0 %832
        %834 = vrot.lane.b32.xlu0 %v580, 115
        %v835 = vpop.permute.xlu0 %834
        %836 = vrot.lane.b32.xlu0 %v582, 115
        %v837 = vpop.permute.xlu0 %836
        %vm838 = vcmask 941056
        %v839 = vsel %vm838, %v831, %v833
        %v840 = vsel %vm838, %v833, %v835
        %v841 = vsel %vm838, %v835, %v837
        %v847 = vsel %vm838, %v837, %v831
        %v848 = vmul.f32 %v839, %v638
        %v849 = vmul.f32 %v840, %v639
        %v850 = vmul.f32 %v841, %v640
        %v851 = vmul.f32 %v847, %v641
        %v856 = vrot.slane %v848, 6
        %v857 = vrot.slane %v849, 6
        %v858 = vrot.slane %v850, 6
        %v859 = vrot.slane %v851, 6
        %v864 = vadd.f32 %v826, %v856
        %v865 = vadd.f32 %v827, %v857
        %v866 = vadd.f32 %v828, %v858
        %v867 = vadd.f32 %v829, %v859
        %868 = vrot.lane.b32.xlu0 %v519, 114
        %v869 = vpop.permute.xlu0 %868
        %870 = vrot.lane.b32.xlu0 %v521, 114
        %v871 = vpop.permute.xlu0 %870
        %872 = vrot.lane.b32.xlu0 %v580, 114
        %v873 = vpop.permute.xlu0 %872
        %874 = vrot.lane.b32.xlu0 %v582, 114
        %v875 = vpop.permute.xlu0 %874
        %vm876 = vcmask 932864
        %v877 = vsel %vm876, %v869, %v871
        %v878 = vsel %vm876, %v871, %v873
        %v879 = vsel %vm876, %v873, %v875
        %v885 = vsel %vm876, %v875, %v869
        %v886 = vmul.f32 %v877, %v638
        %v887 = vmul.f32 %v878, %v639
        %v888 = vmul.f32 %v879, %v640
        %v889 = vmul.f32 %v885, %v641
        %v894 = vrot.slane %v886, 7
        %v895 = vrot.slane %v887, 7
        %v896 = vrot.slane %v888, 7
        %v897 = vrot.slane %v889, 7
        %v902 = vadd.f32 %v864, %v894
        %v903 = vadd.f32 %v865, %v895
        %v904 = vadd.f32 %v866, %v896
        %v905 = vadd.f32 %v867, %v897
        %906 = vrot.lane.b32.xlu0 %v519, 113
        %v907 = vpop.permute.xlu0 %906
        %908 = vrot.lane.b32.xlu0 %v521, 113
        %v909 = vpop.permute.xlu0 %908
        %910 = vrot.lane.b32.xlu0 %v580, 113
        %v911 = vpop.permute.xlu0 %910
        %912 = vrot.lane.b32.xlu0 %v582, 113
        %v913 = vpop.permute.xlu0 %912
        %vm914 = vcmask 924672
        %v915 = vsel %vm914, %v907, %v909
        %v916 = vsel %vm914, %v909, %v911
        %v917 = vsel %vm914, %v911, %v913
        %v923 = vsel %vm914, %v913, %v907
        %v928 = vrot.slane %v600, 4
        %v929 = vrot.slane %v601, 4
        %v930 = vrot.slane %v602, 4
        %v931 = vrot.slane %v603, 4
        %v936 = vmul.f32 %v915, %v928
        %v937 = vmul.f32 %v916, %v929
        %v938 = vmul.f32 %v917, %v930
        %v939 = vmul.f32 %v923, %v931
        %v940 = vadd.f32 %v902, %v936
        %v941 = vadd.f32 %v903, %v937
        %v942 = vadd.f32 %v904, %v938
        %v943 = vadd.f32 %v905, %v939
        %944 = vrot.lane.b32.xlu0 %v582, 30
        %v945 = vpop.permute.xlu0 %944
        %947 = vrot.lane.b32.xlu0 %v519, 30
        %v948 = vpop.permute.xlu0 %947
        %949 = vrot.lane.b32.xlu0 %v521, 30
        %v950 = vpop.permute.xlu0 %949
        %951 = vrot.lane.b32.xlu0 %v580, 30
        %v952 = vpop.permute.xlu0 %951
        %vm953 = vcmask 244736
        %v954 = vsel %vm953, %v948, %v950
        %v955 = vsel %vm953, %v950, %v952
        %v956 = vsel %vm953, %v952, %v945
        %v961 = vsel %vm953, %v945, %v948
        %v962 = vmul.f32 %v961, %v928
        %v963 = vmul.f32 %v954, %v929
        %v964 = vmul.f32 %v955, %v930
        %v965 = vmul.f32 %v956, %v931
        %v970 = vrot.slane %v962, 1
        %v971 = vrot.slane %v963, 1
        %v972 = vrot.slane %v964, 1
        %v973 = vrot.slane %v965, 1
        %v978 = vadd.f32 %v940, %v970
        %v979 = vadd.f32 %v941, %v971
        %v980 = vadd.f32 %v942, %v972
        %v981 = vadd.f32 %v943, %v973
        %982 = vrot.lane.b32.xlu0 %v582, 28
        %v983 = vpop.permute.xlu0 %982
        %985 = vrot.lane.b32.xlu0 %v519, 28
        %v986 = vpop.permute.xlu0 %985
        %987 = vrot.lane.b32.xlu0 %v521, 28
        %v988 = vpop.permute.xlu0 %987
        %989 = vrot.lane.b32.xlu0 %v580, 28
        %v990 = vpop.permute.xlu0 %989
        %vm991 = vcmask 228352
        %v992 = vsel %vm991, %v986, %v988
        %v993 = vsel %vm991, %v988, %v990
        %v994 = vsel %vm991, %v990, %v983
        %v999 = vsel %vm991, %v983, %v986
        %v1000 = vmul.f32 %v999, %v928
        %v1001 = vmul.f32 %v992, %v929
        %v1002 = vmul.f32 %v993, %v930
        %v1003 = vmul.f32 %v994, %v931
        %v1008 = vrot.slane %v1000, 2
        %v1009 = vrot.slane %v1001, 2
        %v1010 = vrot.slane %v1002, 2
        %v1011 = vrot.slane %v1003, 2
        %v1016 = vadd.f32 %v978, %v1008
        %v1017 = vadd.f32 %v979, %v1009
        %v1018 = vadd.f32 %v980, %v1010
        %v1019 = vadd.f32 %v981, %v1011
        %1020 = vrot.lane.b32.xlu0 %v582, 26
        %v1021 = vpop.permute.xlu0 %1020
        %1023 = vrot.lane.b32.xlu0 %v519, 26
        %v1024 = vpop.permute.xlu0 %1023
        %1025 = vrot.lane.b32.xlu0 %v521, 26
        %v1026 = vpop.permute.xlu0 %1025
        %1027 = vrot.lane.b32.xlu0 %v580, 26
        %v1028 = vpop.permute.xlu0 %1027
        %vm1029 = vcmask 211968
        %v1030 = vsel %vm1029, %v1024, %v1026
        %v1031 = vsel %vm1029, %v1026, %v1028
        %v1032 = vsel %vm1029, %v1028, %v1021
        %v1037 = vsel %vm1029, %v1021, %v1024
        %v1038 = vmul.f32 %v1037, %v928
        %v1039 = vmul.f32 %v1030, %v929
        %v1040 = vmul.f32 %v1031, %v930
        %v1041 = vmul.f32 %v1032, %v931
        %v1046 = vrot.slane %v1038, 3
        %v1047 = vrot.slane %v1039, 3
        %v1048 = vrot.slane %v1040, 3
        %v1049 = vrot.slane %v1041, 3
        %v1054 = vadd.f32 %v1016, %v1046
        %v1055 = vadd.f32 %v1017, %v1047
        %v1056 = vadd.f32 %v1018, %v1048
        %v1057 = vadd.f32 %v1019, %v1049
        %1059 = vrot.lane.b32.xlu0 %v586, 2
        %v1060 = vpop.permute.xlu0 %1059
        %1065 = vrot.lane.b32.xlu0 %v523, 2
        %v1066 = vpop.permute.xlu0 %1065
        %1067 = vrot.lane.b32.xlu0 %v525, 2
        %v1068 = vpop.permute.xlu0 %1067
        %1069 = vrot.lane.b32.xlu0 %v584, 2
        %v1070 = vpop.permute.xlu0 %1069
        %vm1071 = vcmask 15360
        %v1072 = vsel %vm1071, %v1066, %v1068
        %v1073 = vsel %vm1071, %v1068, %v1070
        %v1074 = vsel %vm1071, %v1070, %v1060
        %v1079 = vsel %vm1071, %v1060, %v1066
        %v1080 = vmul.f32 %v1079, %v928
        %v1081 = vmul.f32 %v1072, %v929
        %v1082 = vmul.f32 %v1073, %v930
        %v1083 = vmul.f32 %v1074, %v931
        %v1088 = vrot.slane %v1080, 4
        %v1089 = vrot.slane %v1081, 4
        %v1090 = vrot.slane %v1082, 4
        %v1091 = vrot.slane %v1083, 4
        %v1096 = vadd.f32 %v1054, %v1088
        %v1097 = vadd.f32 %v1055, %v1089
        %v1098 = vadd.f32 %v1056, %v1090
        %v1099 = vadd.f32 %v1057, %v1091
        %v1100 = vmul.f32 %v523, %v928
        %v1101 = vmul.f32 %v525, %v929
        %v1102 = vmul.f32 %v584, %v930
        %v1103 = vmul.f32 %v586, %v931
        %v1108 = vrot.slane %v1100, 5
        %v1109 = vrot.slane %v1101, 5
        %v1110 = vrot.slane %v1102, 5
        %v1111 = vrot.slane %v1103, 5
        %v1116 = vadd.f32 %v1096, %v1108
        %v1117 = vadd.f32 %v1097, %v1109
        %v1118 = vadd.f32 %v1098, %v1110
        %v1119 = vadd.f32 %v1099, %v1111
        %1120 = vrot.lane.b32.xlu0 %v523, 126
        %v1121 = vpop.permute.xlu0 %1120
        %1122 = vrot.lane.b32.xlu0 %v525, 126
        %v1123 = vpop.permute.xlu0 %1122
        %1124 = vrot.lane.b32.xlu0 %v584, 126
        %v1125 = vpop.permute.xlu0 %1124
        %1126 = vrot.lane.b32.xlu0 %v586, 126
        %v1127 = vpop.permute.xlu0 %1126
        %vm1128 = vcmask 1031168
        %v1129 = vsel %vm1128, %v1121, %v1123
        %v1130 = vsel %vm1128, %v1123, %v1125
        %v1131 = vsel %vm1128, %v1125, %v1127
        %v1137 = vsel %vm1128, %v1127, %v1121
        %v1138 = vmul.f32 %v1129, %v928
        %v1139 = vmul.f32 %v1130, %v929
        %v1140 = vmul.f32 %v1131, %v930
        %v1141 = vmul.f32 %v1137, %v931
        %v1146 = vrot.slane %v1138, 6
        %v1147 = vrot.slane %v1139, 6
        %v1148 = vrot.slane %v1140, 6
        %v1149 = vrot.slane %v1141, 6
        %v1154 = vadd.f32 %v1116, %v1146
        %v1155 = vadd.f32 %v1117, %v1147
        %v1156 = vadd.f32 %v1118, %v1148
        %v1157 = vadd.f32 %v1119, %v1149
        %1158 = vrot.lane.b32.xlu0 %v523, 102
        %v1159 = vpop.permute.xlu0 %1158
        %1160 = vrot.lane.b32.xlu0 %v525, 102
        %v1161 = vpop.permute.xlu0 %1160
        %1162 = vrot.lane.b32.xlu0 %v584, 102
        %v1163 = vpop.permute.xlu0 %1162
        %1164 = vrot.lane.b32.xlu0 %v586, 102
        %v1165 = vpop.permute.xlu0 %1164
        %vm1166 = vcmask 834560
        %v1167 = vsel %vm1166, %v1159, %v1161
        %v1168 = vsel %vm1166, %v1161, %v1163
        %v1169 = vsel %vm1166, %v1163, %v1165
        %v1175 = vsel %vm1166, %v1165, %v1159
        %v1176 = vmul.f32 %v1167, %v928
        %v1177 = vmul.f32 %v1168, %v929
        %v1178 = vmul.f32 %v1169, %v930
        %v1179 = vmul.f32 %v1175, %v931
        %v1184 = vrot.slane %v1176, 7
        %v1185 = vrot.slane %v1177, 7
        %v1186 = vrot.slane %v1178, 7
        %v1187 = vrot.slane %v1179, 7
        %v1192 = vadd.f32 %v1154, %v1184
        %v1193 = vadd.f32 %v1155, %v1185
        %v1194 = vadd.f32 %v1156, %v1186
        %v1195 = vadd.f32 %v1157, %v1187
        %1196 = vrot.lane.b32.xlu0 %v523, 100
        %v1197 = vpop.permute.xlu0 %1196
        %1198 = vrot.lane.b32.xlu0 %v525, 100
        %v1199 = vpop.permute.xlu0 %1198
        %1200 = vrot.lane.b32.xlu0 %v584, 100
        %v1201 = vpop.permute.xlu0 %1200
        %1202 = vrot.lane.b32.xlu0 %v586, 100
        %v1203 = vpop.permute.xlu0 %1202
        %vm1204 = vcmask 818176
        %v1205 = vsel %vm1204, %v1197, %v1199
        %v1206 = vsel %vm1204, %v1199, %v1201
        %v1207 = vsel %vm1204, %v1201, %v1203
        %v1213 = vsel %vm1204, %v1203, %v1197
        %v1218 = vrot.slane %v604, 4
        %v1219 = vrot.slane %v605, 4
        %v1220 = vrot.slane %v606, 4
        %v1221 = vrot.slane %v607, 4
        %v1226 = vmul.f32 %v1205, %v1218
        %v1227 = vmul.f32 %v1206, %v1219
        %v1228 = vmul.f32 %v1207, %v1220
        %v1229 = vmul.f32 %v1213, %v1221
        %v1230 = vadd.f32 %v1192, %v1226
        %v1231 = vadd.f32 %v1193, %v1227
        %v1232 = vadd.f32 %v1194, %v1228
        %v1233 = vadd.f32 %v1195, %v1229
        %1234 = vrot.lane.b32.xlu0 %v523, 98
        %v1235 = vpop.permute.xlu0 %1234
        %1236 = vrot.lane.b32.xlu0 %v525, 98
        %v1237 = vpop.permute.xlu0 %1236
        %1238 = vrot.lane.b32.xlu0 %v584, 98
        %v1239 = vpop.permute.xlu0 %1238
        %1240 = vrot.lane.b32.xlu0 %v586, 98
        %v1241 = vpop.permute.xlu0 %1240
        %vm1242 = vcmask 801792
        %v1243 = vsel %vm1242, %v1235, %v1237
        %v1244 = vsel %vm1242, %v1237, %v1239
        %v1245 = vsel %vm1242, %v1239, %v1241
        %v1251 = vsel %vm1242, %v1241, %v1235
        %v1252 = vmul.f32 %v1243, %v1218
        %v1253 = vmul.f32 %v1244, %v1219
        %v1254 = vmul.f32 %v1245, %v1220
        %v1255 = vmul.f32 %v1251, %v1221
        %v1260 = vrot.slane %v1252, 1
        %v1261 = vrot.slane %v1253, 1
        %v1262 = vrot.slane %v1254, 1
        %v1263 = vrot.slane %v1255, 1
        %v1268 = vadd.f32 %v1230, %v1260
        %v1269 = vadd.f32 %v1231, %v1261
        %v1270 = vadd.f32 %v1232, %v1262
        %v1271 = vadd.f32 %v1233, %v1263
        %1272 = vrot.lane.b32.xlu0 %v586, 45
        %v1273 = vpop.permute.xlu0 %1272
        %1275 = vrot.lane.b32.xlu0 %v523, 45
        %v1276 = vpop.permute.xlu0 %1275
        %1277 = vrot.lane.b32.xlu0 %v525, 45
        %v1278 = vpop.permute.xlu0 %1277
        %1279 = vrot.lane.b32.xlu0 %v584, 45
        %v1280 = vpop.permute.xlu0 %1279
        %vm1281 = vcmask 367616
        %v1282 = vsel %vm1281, %v1276, %v1278
        %v1283 = vsel %vm1281, %v1278, %v1280
        %v1284 = vsel %vm1281, %v1280, %v1273
        %v1289 = vsel %vm1281, %v1273, %v1276
        %v1290 = vmul.f32 %v1289, %v1218
        %v1291 = vmul.f32 %v1282, %v1219
        %v1292 = vmul.f32 %v1283, %v1220
        %v1293 = vmul.f32 %v1284, %v1221
        %v1298 = vrot.slane %v1290, 2
        %v1299 = vrot.slane %v1291, 2
        %v1300 = vrot.slane %v1292, 2
        %v1301 = vrot.slane %v1293, 2
        %v1306 = vadd.f32 %v1268, %v1298
        %v1307 = vadd.f32 %v1269, %v1299
        %v1308 = vadd.f32 %v1270, %v1300
        %v1309 = vadd.f32 %v1271, %v1301
        %1310 = vrot.lane.b32.xlu0 %v586, 42
        %v1311 = vpop.permute.xlu0 %1310
        %1313 = vrot.lane.b32.xlu0 %v523, 42
        %v1314 = vpop.permute.xlu0 %1313
        %1315 = vrot.lane.b32.xlu0 %v525, 42
        %v1316 = vpop.permute.xlu0 %1315
        %1317 = vrot.lane.b32.xlu0 %v584, 42
        %v1318 = vpop.permute.xlu0 %1317
        %vm1319 = vcmask 343040
        %v1320 = vsel %vm1319, %v1314, %v1316
        %v1321 = vsel %vm1319, %v1316, %v1318
        %v1322 = vsel %vm1319, %v1318, %v1311
        %v1327 = vsel %vm1319, %v1311, %v1314
        %v1328 = vmul.f32 %v1327, %v1218
        %v1329 = vmul.f32 %v1320, %v1219
        %v1330 = vmul.f32 %v1321, %v1220
        %v1331 = vmul.f32 %v1322, %v1221
        %v1336 = vrot.slane %v1328, 3
        %v1337 = vrot.slane %v1329, 3
        %v1338 = vrot.slane %v1330, 3
        %v1339 = vrot.slane %v1331, 3
        %v1344 = vadd.f32 %v1306, %v1336
        %v1345 = vadd.f32 %v1307, %v1337
        %v1346 = vadd.f32 %v1308, %v1338
        %v1347 = vadd.f32 %v1309, %v1339
        %1349 = vrot.lane.b32.xlu0 %v592, 39
        %v1350 = vpop.permute.xlu0 %1349
        %1355 = vrot.lane.b32.xlu0 %v529, 39
        %v1356 = vpop.permute.xlu0 %1355
        %1357 = vrot.lane.b32.xlu0 %v531, 39
        %v1358 = vpop.permute.xlu0 %1357
        %1359 = vrot.lane.b32.xlu0 %v590, 39
        %v1360 = vpop.permute.xlu0 %1359
        %vm1361 = vcmask 318464
        %v1362 = vsel %vm1361, %v1356, %v1358
        %v1363 = vsel %vm1361, %v1358, %v1360
        %v1364 = vsel %vm1361, %v1360, %v1350
        %v1369 = vsel %vm1361, %v1350, %v1356
        %v1370 = vmul.f32 %v1369, %v1218
        %v1371 = vmul.f32 %v1362, %v1219
        %v1372 = vmul.f32 %v1363, %v1220
        %v1373 = vmul.f32 %v1364, %v1221
        %v1378 = vrot.slane %v1370, 4
        %v1379 = vrot.slane %v1371, 4
        %v1380 = vrot.slane %v1372, 4
        %v1381 = vrot.slane %v1373, 4
        %v1386 = vadd.f32 %v1344, %v1378
        %v1387 = vadd.f32 %v1345, %v1379
        %v1388 = vadd.f32 %v1346, %v1380
        %v1389 = vadd.f32 %v1347, %v1381
        %1390 = vrot.lane.b32.xlu0 %v592, 3
        %v1391 = vpop.permute.xlu0 %1390
        %1393 = vrot.lane.b32.xlu0 %v529, 3
        %v1394 = vpop.permute.xlu0 %1393
        %1395 = vrot.lane.b32.xlu0 %v531, 3
        %v1396 = vpop.permute.xlu0 %1395
        %1397 = vrot.lane.b32.xlu0 %v590, 3
        %v1398 = vpop.permute.xlu0 %1397
        %vm1399 = vcmask 23552
        %v1400 = vsel %vm1399, %v1394, %v1396
        %v1401 = vsel %vm1399, %v1396, %v1398
        %v1402 = vsel %vm1399, %v1398, %v1391
        %v1407 = vsel %vm1399, %v1391, %v1394
        %v1408 = vmul.f32 %v1407, %v1218
        %v1409 = vmul.f32 %v1400, %v1219
        %v1410 = vmul.f32 %v1401, %v1220
        %v1411 = vmul.f32 %v1402, %v1221
        %v1416 = vrot.slane %v1408, 5
        %v1417 = vrot.slane %v1409, 5
        %v1418 = vrot.slane %v1410, 5
        %v1419 = vrot.slane %v1411, 5
        %v1424 = vadd.f32 %v1386, %v1416
        %v1425 = vadd.f32 %v1387, %v1417
        %v1426 = vadd.f32 %v1388, %v1418
        %v1427 = vadd.f32 %v1389, %v1419
        %v1428 = vmul.f32 %v529, %v1218
        %v1429 = vmul.f32 %v531, %v1219
        %v1430 = vmul.f32 %v590, %v1220
        %v1431 = vmul.f32 %v592, %v1221
        %v1436 = vrot.slane %v1428, 6
        %v1437 = vrot.slane %v1429, 6
        %v1438 = vrot.slane %v1430, 6
        %v1439 = vrot.slane %v1431, 6
        %v1444 = vadd.f32 %v1424, %v1436
        %v1445 = vadd.f32 %v1425, %v1437
        %v1446 = vadd.f32 %v1426, %v1438
        %v1447 = vadd.f32 %v1427, %v1439
        %1448 = vrot.lane.b32.xlu0 %v529, 125
        %v1449 = vpop.permute.xlu0 %1448
        %1450 = vrot.lane.b32.xlu0 %v531, 125
        %v1451 = vpop.permute.xlu0 %1450
        %1452 = vrot.lane.b32.xlu0 %v590, 125
        %v1453 = vpop.permute.xlu0 %1452
        %1454 = vrot.lane.b32.xlu0 %v592, 125
        %v1455 = vpop.permute.xlu0 %1454
        %vm1456 = vcmask 1022976
        %v1457 = vsel %vm1456, %v1449, %v1451
        %v1458 = vsel %vm1456, %v1451, %v1453
        %v1459 = vsel %vm1456, %v1453, %v1455
        %v1465 = vsel %vm1456, %v1455, %v1449
        %v1466 = vmul.f32 %v1457, %v1218
        %v1467 = vmul.f32 %v1458, %v1219
        %v1468 = vmul.f32 %v1459, %v1220
        %v1469 = vmul.f32 %v1465, %v1221
        %v1474 = vrot.slane %v1466, 7
        %v1475 = vrot.slane %v1467, 7
        %v1476 = vrot.slane %v1468, 7
        %v1477 = vrot.slane %v1469, 7
        %v1482 = vadd.f32 %v1444, %v1474
        %v1483 = vadd.f32 %v1445, %v1475
        %v1484 = vadd.f32 %v1446, %v1476
        %v1485 = vadd.f32 %v1447, %v1477
        %1486 = vrot.lane.b32.xlu0 %v529, 89
        %v1487 = vpop.permute.xlu0 %1486
        %1488 = vrot.lane.b32.xlu0 %v531, 89
        %v1489 = vpop.permute.xlu0 %1488
        %1490 = vrot.lane.b32.xlu0 %v590, 89
        %v1491 = vpop.permute.xlu0 %1490
        %1492 = vrot.lane.b32.xlu0 %v592, 89
        %v1493 = vpop.permute.xlu0 %1492
        %vm1494 = vcmask 728064
        %v1495 = vsel %vm1494, %v1487, %v1489
        %v1496 = vsel %vm1494, %v1489, %v1491
        %v1497 = vsel %vm1494, %v1491, %v1493
        %v1503 = vsel %vm1494, %v1493, %v1487
        %v1508 = vrot.slane %v608, 4
        %v1509 = vrot.slane %v609, 4
        %v1510 = vrot.slane %v610, 4
        %v1511 = vrot.slane %v611, 4
        %v1516 = vmul.f32 %v1495, %v1508
        %v1517 = vmul.f32 %v1496, %v1509
        %v1518 = vmul.f32 %v1497, %v1510
        %v1519 = vmul.f32 %v1503, %v1511
        %v1520 = vadd.f32 %v1482, %v1516
        %v1521 = vadd.f32 %v1483, %v1517
        %v1522 = vadd.f32 %v1484, %v1518
        %v1523 = vadd.f32 %v1485, %v1519
        %1524 = vrot.lane.b32.xlu0 %v529, 86
        %v1525 = vpop.permute.xlu0 %1524
        %1526 = vrot.lane.b32.xlu0 %v531, 86
        %v1527 = vpop.permute.xlu0 %1526
        %1528 = vrot.lane.b32.xlu0 %v590, 86
        %v1529 = vpop.permute.xlu0 %1528
        %1530 = vrot.lane.b32.xlu0 %v592, 86
        %v1531 = vpop.permute.xlu0 %1530
        %vm1532 = vcmask 703488
        %v1533 = vsel %vm1532, %v1525, %v1527
        %v1534 = vsel %vm1532, %v1527, %v1529
        %v1535 = vsel %vm1532, %v1529, %v1531
        %v1541 = vsel %vm1532, %v1531, %v1525
        %v1542 = vmul.f32 %v1533, %v1508
        %v1543 = vmul.f32 %v1534, %v1509
        %v1544 = vmul.f32 %v1535, %v1510
        %v1545 = vmul.f32 %v1541, %v1511
        %v1550 = vrot.slane %v1542, 1
        %v1551 = vrot.slane %v1543, 1
        %v1552 = vrot.slane %v1544, 1
        %v1553 = vrot.slane %v1545, 1
        %v1558 = vadd.f32 %v1520, %v1550
        %v1559 = vadd.f32 %v1521, %v1551
        %v1560 = vadd.f32 %v1522, %v1552
        %v1561 = vadd.f32 %v1523, %v1553
        %1562 = vrot.lane.b32.xlu0 %v529, 83
        %v1563 = vpop.permute.xlu0 %1562
        %1564 = vrot.lane.b32.xlu0 %v531, 83
        %v1565 = vpop.permute.xlu0 %1564
        %1566 = vrot.lane.b32.xlu0 %v590, 83
        %v1567 = vpop.permute.xlu0 %1566
        %1568 = vrot.lane.b32.xlu0 %v592, 83
        %v1569 = vpop.permute.xlu0 %1568
        %vm1570 = vcmask 678912
        %v1571 = vsel %vm1570, %v1563, %v1565
        %v1572 = vsel %vm1570, %v1565, %v1567
        %v1573 = vsel %vm1570, %v1567, %v1569
        %v1579 = vsel %vm1570, %v1569, %v1563
        %v1580 = vmul.f32 %v1571, %v1508
        %v1581 = vmul.f32 %v1572, %v1509
        %v1582 = vmul.f32 %v1573, %v1510
        %v1583 = vmul.f32 %v1579, %v1511
        %v1588 = vrot.slane %v1580, 2
        %v1589 = vrot.slane %v1581, 2
        %v1590 = vrot.slane %v1582, 2
        %v1591 = vrot.slane %v1583, 2
        %v1596 = vadd.f32 %v1558, %v1588
        %v1597 = vadd.f32 %v1559, %v1589
        %v1598 = vadd.f32 %v1560, %v1590
        %v1599 = vadd.f32 %v1561, %v1591
        %v1600 = vstv %s402
        %v1601 = vadd.f32 %v1596, %v1600
        %v1602 = vadd.f32 %v1597, %v1600
        %v1603 = vadd.f32 %v1598, %v1600
        %v1604 = vadd.f32 %v1599, %v1600
        %v1605 = vxor.u32 %v1601, 2147483648
        %v1606 = vxor.u32 %v1602, 2147483648
        %v1607 = vxor.u32 %v1603, 2147483648
        %v1608 = vxor.u32 %v1604, 2147483648
        %v1609 = vmul.f32 %v1605, 1.442695
        %v1610 = vpow.pop %v1609
        %v1611 = vmul.f32 %v1606, 1.442695
        %v1612 = vpow.pop %v1611
        %v1613 = vmul.f32 %v1607, 1.442695
        %v1614 = vpow.pop %v1613
        %v1615 = vmul.f32 %v1608, 1.442695
        %v1616 = vpow.pop %v1615
        %v1617 = vadd.f32 %v1610, 1.0
        %v1618 = vadd.f32 %v1612, 1.0
        %v1619 = vadd.f32 %v1614, 1.0
        %v1620 = vadd.f32 %v1616, 1.0
        %v1621 = vrcp.pop %v1617
        %v1622 = vmul.f32 1.0, %v1621
        %v1623 = vrcp.pop %v1618
        %v1624 = vmul.f32 1.0, %v1623
        %v1625 = vrcp.pop %v1619
        %v1626 = vmul.f32 1.0, %v1625
        %v1627 = vrcp.pop %v1620
        %v1628 = vmul.f32 1.0, %v1627
        %v1630 = vlaneseq
        %v1631 = vshrl.u32 %v1630, 7
        %v1632 = vsub.s32 0, %v1631
        %v1633 = vrot.slane %v399, %v1632
        %v1634 = vlaneseq
        %v1635 = vshrl.u32 %v1634, 7
        %v1636 = vsub.s32 1, %v1635
        %v1637 = vrot.slane %v399, %v1636
        %v1638 = vlaneseq
        %v1639 = vshrl.u32 %v1638, 7
        %v1640 = vsub.s32 2, %v1639
        %v1641 = vrot.slane %v399, %v1640
        %v1642 = vlaneseq
        %v1643 = vshrl.u32 %v1642, 7
        %v1644 = vsub.s32 3, %v1643
        %v1645 = vrot.slane %v399, %v1644
        %v1650 = vmul.f32 %v513, %v1633
        %v1651 = vmul.f32 %v515, %v1637
        %v1652 = vmul.f32 %v574, %v1641
        %v1653 = vmul.f32 %v576, %v1645
        %v1658 = vrot.slane %v1650, 7
        %v1659 = vrot.slane %v1651, 7
        %v1660 = vrot.slane %v1652, 7
        %v1661 = vrot.slane %v1653, 7
        %vm1666 = vcmask 1040384
        %v1667 = vsel %vm1666, %v1633, %v1658
        %v1668 = vsel %vm1666, %v1637, %v1659
        %v1669 = vsel %vm1666, %v1641, %v1660
        %v1670 = vsel %vm1666, %v1645, %v1661
        %v1671 = vpack.c.bf16 %v1667, %v1667
        %v1672 = vpack.c.bf16 %v1668, %v1668
        %v1673 = vpack.c.bf16 %v1669, %v1669
        %v1674 = vpack.c.bf16 %v1670, %v1670
        %v1675 = vpack.c.bf16 %v509, %v509
        %v1676 = vpack.c.bf16 %v511, %v511
        %v1677 = vpack.c.bf16 %v570, %v570
        %v1678 = vpack.c.bf16 %v572, %v572
        %v1679 = vld [vmem:[%s1] sm:$0xff]
        %v1680 = vld [vmem:[%s1 + $0x8] sm:$0xff]
        %v1681 = vld [vmem:[%s1 + $0x10] sm:$0xff]
        %v1682 = vld [vmem:[%s2] sm:$0xff]
        %v1683 = vld [vmem:[%s2 + $0x8] sm:$0xff]
        %v1684 = vld [vmem:[%s2 + $0x10] sm:$0xff]
        %v1685 = vld [vmem:[%s7] sm:$0xf]
        %v1686 = vld [vmem:[%s8] sm:$0xff]
        %v1687 = vadd.f32 %v391, %v392
        %1688 = vadd.xlane.f32.xlu0 %v1687
        %v1689 = vpop.xlane.xlu0 %1688
        %v1690 = vmul.f32 %v1689, 0.0051020407
        %v1692 = vsel %vm451, %v1679, 0
        %v1695 = vsel %vm451, %v1680, 0
        %v1698 = vsel %vm451, %v1681, 0
        %1700 = vmatprep.subr.mxu0 0.0
        %1701 = vmatpush1.msra.mxu0 0.0
        %1702 = vmatprep.subr.mxu0 0.0
        %1703 = vmatpush1.msra.mxu0 0.0
        %1704 = vmatprep.subr.mxu0 0.0
        %1705 = vmatpush1.msra.mxu0 0.0
        %1706 = vmatprep.subr.mxu0 0.0
        %1707 = vmatpush1.msra.mxu0 0.0
        %1708 = vmatprep.subr.mxu0 0.0
        %1709 = vmatpush1.msra.mxu0 0.0
        %1710 = vmatprep.subr.mxu0 0.0
        %1711 = vmatpush1.msra.mxu0 0.0
        %1712 = vmatprep.subr.mxu0 0.0
        %1713 = vmatpush1.msra.mxu0 0.0
        %1714 = vmatprep.subr.mxu0 0.0
        %1715 = vmatpush1.msra.mxu0 0.0
        %1716 = vmatprep.subr.mxu0 0.0
        %1717 = vmatpush1.msra.mxu0 0.0
        %1718 = vmatprep.subr.mxu0 0.0
        %1719 = vmatpush1.msra.mxu0 0.0
        %1720 = vmatprep.subr.mxu0 0.0
        %1721 = vmatpush1.msra.mxu0 0.0
        %1722 = vmatprep.subr.mxu0 0.0
        %1723 = vmatpush1.msra.mxu0 0.0
        %1724 = vmatprep.subr.mxu0 0.0
        %1725 = vmatpush1.msra.mxu0 0.0
        %1726 = vmatprep.subr.mxu0 0.0
        %1727 = vmatpush1.msra.mxu0 0.0
        %1728 = vmatprep.subr.mxu0 0.0
        %1729 = vmatpush1.msra.mxu0 0.0
        %1730 = vmatprep.subr.mxu0 0.0
        %1731 = vmatpush1.msra.mxu0 %v1690
        %1732 = vmatprep.subr.mxu0 0.0
        %1733 = vmatpush2.msra.mxu0 0.0
        %1734 = vmatprep.subr.mxu0 0.0
        %1735 = vmatpush2.msra.mxu0 0.0
        %1736 = vmatprep.subr.mxu0 0.0
        %1737 = vmatpush2.msra.mxu0 0.0
        %1738 = vmatprep.subr.mxu0 0.0
        %1739 = vmatpush2.msra.mxu0 0.0
        %1740 = vmatprep.subr.mxu0 0.0
        %1741 = vmatpush2.msra.mxu0 0.0
        %1742 = vmatprep.subr.mxu0 0.0
        %1743 = vmatpush2.msra.mxu0 0.0
        %1744 = vmatprep.subr.mxu0 0.0
        %1745 = vmatpush2.msra.mxu0 0.0
        %1746 = vmatprep.subr.mxu0 0.0
        %1747 = vmatpush2.msra.mxu0 0.0
        %1748 = vmatprep.subr.mxu0 0.0
        %1749 = vmatpush2.msra.mxu0 0.0
        %1750 = vmatprep.subr.mxu0 0.0
        %1751 = vmatpush2.msra.mxu0 0.0
        %1752 = vmatprep.subr.mxu0 0.0
        %1753 = vmatpush2.msra.mxu0 0.0
        %1754 = vmatprep.subr.mxu0 0.0
        %1755 = vmatpush2.msra.mxu0 0.0
        %1756 = vmatprep.subr.mxu0 0.0
        %1757 = vmatpush2.msra.mxu0 0.0
        %1758 = vmatprep.subr.mxu0 0.0
        %1759 = vmatpush2.msra.mxu0 0.0
        %1760 = vmatprep.subr.mxu0 0.0
        %1761 = vmatpush2.msra.mxu0 0.0
        %1762 = vmatprep.subr.mxu0 0.0
        %1763 = vmatpush2.msra.mxu0 0.0
        %1764 = vmatprep.mubr.f32.mxu0 0.0
        %1765 = vmatmul.mubr.f32.gmra.mxu0 %v1692
        %v1766 = vpop.f32.mrf.mxu0
        %v1767 = vadd.f32 %v1682, %v1766
        %v1768 = vpop.f32.mrf.mxu0
        %1769 = vmatprep.mubr.f32.mxu0 0.0
        %1770 = vmatmul.mubr.f32.gmra.mxu0 %v1695
        %v1771 = vpop.f32.mrf.mxu0
        %v1772 = vadd.f32 %v1683, %v1771
        %v1773 = vpop.f32.mrf.mxu0
        %1774 = vmatprep.mubr.f32.mxu0 0.0
        %1775 = vmatmul.mubr.f32.gmra.mxu0 %v1698
        %v1776 = vpop.f32.mrf.mxu0
        %v1777 = vadd.f32 %v1684, %v1776
        %v1778 = vpop.f32.mrf.mxu0
        %1779 = vdwg.mxu0
        %v1780 = vxor.u32 %v1767, 2147483648
        %v1781 = vxor.u32 %v1772, 2147483648
        %v1782 = vxor.u32 %v1777, 2147483648
        %v1783 = vmul.f32 %v1780, 1.442695
        %v1784 = vpow.pop %v1783
        %v1785 = vmul.f32 %v1781, 1.442695
        %v1786 = vpow.pop %v1785
        %v1787 = vmul.f32 %v1782, 1.442695
        %v1788 = vpow.pop %v1787
        %v1789 = vadd.f32 %v1784, 1.0
        %v1790 = vadd.f32 %v1786, 1.0
        %v1791 = vadd.f32 %v1788, 1.0
        %v1792 = vrcp.pop %v1789
        %v1793 = vmul.f32 1.0, %v1792
        %v1794 = vrcp.pop %v1790
        %v1795 = vmul.f32 1.0, %v1794
        %v1796 = vrcp.pop %v1791
        %v1797 = vmul.f32 1.0, %v1796
        %v1799 = vsel %vm739, %v1797, 0
        %v1802 = vsel %vm739, %v1795, 0
        %1804 = vmatprep.subr.mxu0 0.0
        %1805 = vmatpush1.xpose.msra.mxu0 0.0
        %1806 = vmatprep.subr.mxu0 0.0
        %1807 = vmatpush1.xpose.msra.mxu0 0.0
        %1808 = vmatprep.subr.mxu0 0.0
        %1809 = vmatpush1.xpose.msra.mxu0 0.0
        %1810 = vmatprep.subr.mxu0 0.0
        %1811 = vmatpush1.xpose.msra.mxu0 0.0
        %1812 = vmatprep.subr.mxu0 0.0
        %1813 = vmatpush1.xpose.msra.mxu0 0.0
        %1814 = vmatprep.subr.mxu0 0.0
        %1815 = vmatpush1.xpose.msra.mxu0 0.0
        %1816 = vmatprep.subr.mxu0 0.0
        %1817 = vmatpush1.xpose.msra.mxu0 0.0
        %1818 = vmatprep.subr.mxu0 0.0
        %1819 = vmatpush1.xpose.msra.mxu0 0.0
        %1820 = vmatprep.subr.mxu0 0.0
        %1821 = vmatpush1.xpose.msra.mxu0 0.0
        %1822 = vmatprep.subr.mxu0 0.0
        %1823 = vmatpush1.xpose.msra.mxu0 0.0
        %1824 = vmatprep.subr.mxu0 0.0
        %1825 = vmatpush1.xpose.msra.mxu0 0.0
        %1826 = vmatprep.subr.mxu0 0.0
        %1827 = vmatpush1.xpose.msra.mxu0 0.0
        %1828 = vmatprep.subr.mxu0 0.0
        %1829 = vmatpush1.xpose.msra.mxu0 0.0
        %1830 = vmatprep.subr.mxu0 0.0
        %1831 = vmatpush1.xpose.msra.mxu0 0.0
        %1832 = vmatprep.subr.mxu0 0.0
        %1833 = vmatpush1.xpose.msra.mxu0 0.0
        %1834 = vmatprep.subr.mxu0 0.0
        %1835 = vmatpush1.xpose.msra.mxu0 %v1802
        %1836 = vmatprep.subr.mxu0 0.0
        %1837 = vmatpush2.xpose.msra.mxu0 0.0
        %1838 = vmatprep.subr.mxu0 0.0
        %1839 = vmatpush2.xpose.msra.mxu0 0.0
        %1840 = vmatprep.subr.mxu0 0.0
        %1841 = vmatpush2.xpose.msra.mxu0 0.0
        %1842 = vmatprep.subr.mxu0 0.0
        %1843 = vmatpush2.xpose.msra.mxu0 0.0
        %1844 = vmatprep.subr.mxu0 0.0
        %1845 = vmatpush2.xpose.msra.mxu0 0.0
        %1846 = vmatprep.subr.mxu0 0.0
        %1847 = vmatpush2.xpose.msra.mxu0 0.0
        %1848 = vmatprep.subr.mxu0 0.0
        %1849 = vmatpush2.xpose.msra.mxu0 0.0
        %1850 = vmatprep.subr.mxu0 0.0
        %1851 = vmatpush2.xpose.msra.mxu0 0.0
        %1852 = vmatprep.subr.mxu0 0.0
        %1853 = vmatpush2.xpose.msra.mxu0 0.0
        %1854 = vmatprep.subr.mxu0 0.0
        %1855 = vmatpush2.xpose.msra.mxu0 0.0
        %1856 = vmatprep.subr.mxu0 0.0
        %1857 = vmatpush2.xpose.msra.mxu0 0.0
        %1858 = vmatprep.subr.mxu0 0.0
        %1859 = vmatpush2.xpose.msra.mxu0 0.0
        %1860 = vmatprep.subr.mxu0 0.0
        %1861 = vmatpush2.xpose.msra.mxu0 0.0
        %1862 = vmatprep.subr.mxu0 0.0
        %1863 = vmatpush2.xpose.msra.mxu0 0.0
        %1864 = vmatprep.subr.mxu0 0.0
        %1865 = vmatpush2.xpose.msra.mxu0 0.0
        %1866 = vmatprep.subr.mxu0 0.0
        %1867 = vmatpush2.xpose.msra.mxu0 0.0
        %1868 = vmatprep.mubr.f32.mxu0 0.0
        %1869 = vmatmul.mubr.f32.gmra.mxu0 %v1799
        %v1870 = vpop.f32.mrf.mxu0
        %v1871 = vadd.f32 0.0, %v1870
        %v1872 = vpop.f32.mrf.mxu0
        %1873 = vdwg.mxu0
        %v1874 = vsel %vm451, %v1871, -inf
        %1875 = vmax.xlane.f32.xlu0 %v1874
        %v1876 = vpop.xlane.xlu0 %1875
        %v1877 = vrot.slane %v1876, 4
        %v1878 = vmax.f32 %v1876, %v1877
        %v1879 = vrot.slane %v1878, 2
        %v1880 = vmax.f32 %v1878, %v1879
        %v1881 = vrot.slane %v1880, 1
        %v1882 = vmax.f32 %v1880, %v1881
        %s1883 = vtos %v1882
        %v1884 = vstv %s1883
        %v1885 = vsub.f32 %v1871, %v1884
        %v1886 = vmul.f32 %v1885, 1.442695
        %v1887 = vpow.pop %v1886
        %1888 = vxpose.xlu0.b32.start [1/16] %v1887, 128
        %1889 = vxpose.xlu0.b32.cont [2/16] 0.0, 128
        %1890 = vxpose.xlu0.b32.cont [3/16] 0.0, 128
        %1891 = vxpose.xlu0.b32.cont [4/16] 0.0, 128
        %1892 = vxpose.xlu0.b32.cont [5/16] 0.0, 128
        %1893 = vxpose.xlu0.b32.cont [6/16] 0.0, 128
        %1894 = vxpose.xlu0.b32.cont [7/16] 0.0, 128
        %1895 = vxpose.xlu0.b32.cont [8/16] 0.0, 128
        %1896 = vxpose.xlu0.b32.cont [9/16] 0.0, 128
        %1897 = vxpose.xlu0.b32.cont [10/16] 0.0, 128
        %1898 = vxpose.xlu0.b32.cont [11/16] 0.0, 128
        %1899 = vxpose.xlu0.b32.cont [12/16] 0.0, 128
        %1900 = vxpose.xlu0.b32.cont [13/16] 0.0, 128
        %1901 = vxpose.xlu0.b32.cont [14/16] 0.0, 128
        %1902 = vxpose.xlu0.b32.cont [15/16] 0.0, 128
        %1903 = vxpose.xlu0.b32.end [16/16] 0.0, 128
        %v1904 = vpop.trf.xlu0
        %v1905 = vpop.trf.xlu0
        %v1906 = vpop.trf.xlu0
        %v1907 = vpop.trf.xlu0
        %v1908 = vpop.trf.xlu0
        %v1909 = vpop.trf.xlu0
        %v1910 = vpop.trf.xlu0
        %v1911 = vpop.trf.xlu0
        %v1912 = vpop.trf.xlu0
        %v1913 = vpop.trf.xlu0
        %v1914 = vpop.trf.xlu0
        %v1915 = vpop.trf.xlu0
        %v1916 = vpop.trf.xlu0
        %v1917 = vpop.trf.xlu0
        %v1918 = vpop.trf.xlu0
        %v1919 = vpop.trf.xlu0
        %v1921 = vsel %vm451, %v1904, 0
        %1923 = vmatprep.subr.mxu0 0.0
        %1924 = vmatpush1.msra.mxu0 0.0
        %1925 = vmatprep.subr.mxu0 0.0
        %1926 = vmatpush1.msra.mxu0 0.0
        %1927 = vmatprep.subr.mxu0 0.0
        %1928 = vmatpush1.msra.mxu0 0.0
        %1929 = vmatprep.subr.mxu0 0.0
        %1930 = vmatpush1.msra.mxu0 0.0
        %1931 = vmatprep.subr.mxu0 0.0
        %1932 = vmatpush1.msra.mxu0 0.0
        %1933 = vmatprep.subr.mxu0 0.0
        %1934 = vmatpush1.msra.mxu0 0.0
        %1935 = vmatprep.subr.mxu0 0.0
        %1936 = vmatpush1.msra.mxu0 0.0
        %1937 = vmatprep.subr.mxu0 0.0
        %1938 = vmatpush1.msra.mxu0 0.0
        %1939 = vmatprep.subr.mxu0 0.0
        %1940 = vmatpush1.msra.mxu0 0.0
        %1941 = vmatprep.subr.mxu0 0.0
        %1942 = vmatpush1.msra.mxu0 0.0
        %1943 = vmatprep.subr.mxu0 0.0
        %1944 = vmatpush1.msra.mxu0 0.0
        %1945 = vmatprep.subr.mxu0 0.0
        %1946 = vmatpush1.msra.mxu0 0.0
        %1947 = vmatprep.subr.mxu0 0.0
        %1948 = vmatpush1.msra.mxu0 0.0
        %1949 = vmatprep.subr.mxu0 0.0
        %1950 = vmatpush1.msra.mxu0 0.0
        %1951 = vmatprep.subr.mxu0 0.0
        %1952 = vmatpush1.msra.mxu0 0.0
        %1953 = vmatprep.subr.mxu0 %v392
        %1954 = vmatpush1.msra.mxu0 %v391
        %1955 = vmatprep.subr.mxu0 0.0
        %1956 = vmatpush2.msra.mxu0 0.0
        %1957 = vmatprep.subr.mxu0 0.0
        %1958 = vmatpush2.msra.mxu0 0.0
        %1959 = vmatprep.subr.mxu0 0.0
        %1960 = vmatpush2.msra.mxu0 0.0
        %1961 = vmatprep.subr.mxu0 0.0
        %1962 = vmatpush2.msra.mxu0 0.0
        %1963 = vmatprep.subr.mxu0 0.0
        %1964 = vmatpush2.msra.mxu0 0.0
        %1965 = vmatprep.subr.mxu0 0.0
        %1966 = vmatpush2.msra.mxu0 0.0
        %1967 = vmatprep.subr.mxu0 0.0
        %1968 = vmatpush2.msra.mxu0 0.0
        %1969 = vmatprep.subr.mxu0 0.0
        %1970 = vmatpush2.msra.mxu0 0.0
        %1971 = vmatprep.subr.mxu0 0.0
        %1972 = vmatpush2.msra.mxu0 0.0
        %1973 = vmatprep.subr.mxu0 0.0
        %1974 = vmatpush2.msra.mxu0 0.0
        %1975 = vmatprep.subr.mxu0 0.0
        %1976 = vmatpush2.msra.mxu0 0.0
        %1977 = vmatprep.subr.mxu0 0.0
        %1978 = vmatpush2.msra.mxu0 0.0
        %1979 = vmatprep.subr.mxu0 0.0
        %1980 = vmatpush2.msra.mxu0 0.0
        %1981 = vmatprep.subr.mxu0 0.0
        %1982 = vmatpush2.msra.mxu0 0.0
        %1983 = vmatprep.subr.mxu0 0.0
        %1984 = vmatpush2.msra.mxu0 0.0
        %1985 = vmatprep.subr.mxu0 0.0
        %1986 = vmatpush2.msra.mxu0 0.0
        %1987 = vmatprep.mubr.f32.mxu0 0.0
        %1988 = vmatmul.mubr.f32.gmra.mxu0 %v1921
        %v1989 = vpop.f32.mrf.mxu0
        %v1990 = vadd.f32 0.0, %v1989
        %v1991 = vpop.f32.mrf.mxu0
        %v1992 = vadd.f32 0.0, %v1991
        %1993 = vdwg.mxu0
        %v1994 = vsel %vm451, %v1887, 0.0
        %1995 = vadd.xlane.f32.xlu0 %v1994
        %v1996 = vpop.xlane.xlu0 %1995
        %v1997 = vrot.slane %v1996, 4
        %v1998 = vadd.f32 %v1996, %v1997
        %v1999 = vrot.slane %v1998, 2
        %v2000 = vadd.f32 %v1998, %v1999
        %v2001 = vrot.slane %v2000, 1
        %v2002 = vadd.f32 %v2000, %v2001
        %s2003 = vtos %v2002
        %v2004 = vstv %s2003
        %v2005 = vrcp.pop %v2004
        %s2006 = vtos %v2005
        %v2007 = vstv %s2006
        %v2008 = vmul.f32 %v1990, %v2007
        %v2009 = vmul.f32 %v1992, %v2007
        %v2012 = vrot.slane %v1675, 2
        %v2013 = vrot.slane %v1676, 2
        %2016 = vxpose.xlu0.c.b16.start [1/8] %v2012, 128
        %2017 = vxpose.xlu0.c.b16.cont [2/8] 0, 128
        %2018 = vxpose.xlu0.c.b16.cont [3/8] 0, 128
        %2019 = vxpose.xlu0.c.b16.cont [4/8] 0, 128
        %2020 = vxpose.xlu0.c.b16.cont [5/8] 0, 128
        %2021 = vxpose.xlu0.c.b16.cont [6/8] 0, 128
        %2022 = vxpose.xlu0.c.b16.cont [7/8] 0, 128
        %2023 = vxpose.xlu0.c.b16.end [8/8] 0, 128
        %v2024 = vpop.trf.xlu0
        %v2025 = vpop.trf.xlu0
        %v2026 = vpop.trf.xlu0
        %v2027 = vpop.trf.xlu0
        %v2028 = vpop.trf.xlu0
        %v2029 = vpop.trf.xlu0
        %v2030 = vpop.trf.xlu0
        %v2031 = vpop.trf.xlu0
        %2032 = vxpose.xlu0.c.b16.start [1/8] %v2013, 128
        %2033 = vxpose.xlu0.c.b16.cont [2/8] 0, 128
        %2034 = vxpose.xlu0.c.b16.cont [3/8] 0, 128
        %2035 = vxpose.xlu0.c.b16.cont [4/8] 0, 128
        %2036 = vxpose.xlu0.c.b16.cont [5/8] 0, 128
        %2037 = vxpose.xlu0.c.b16.cont [6/8] 0, 128
        %2038 = vxpose.xlu0.c.b16.cont [7/8] 0, 128
        %2039 = vxpose.xlu0.c.b16.end [8/8] 0, 128
        %v2040 = vpop.trf.xlu0
        %v2041 = vpop.trf.xlu0
        %v2042 = vpop.trf.xlu0
        %v2043 = vpop.trf.xlu0
        %v2044 = vpop.trf.xlu0
        %v2045 = vpop.trf.xlu0
        %v2046 = vpop.trf.xlu0
        %v2047 = vpop.trf.xlu0
        %vm2048 = vcmask 31744
        %v2050 = vsel %vm2048, %v2024, 0
        %v2053 = vsel %vm2048, %v2025, 0
        %v2056 = vsel %vm2048, %v2026, 0
        %v2059 = vsel %vm2048, %v2027, 0
        %v2062 = vsel %vm2048, %v2028, 0
        %v2065 = vsel %vm2048, %v2029, 0
        %v2068 = vsel %vm2048, %v2030, 0
        %v2071 = vsel %vm2048, %v2031, 0
        %v2074 = vsel %vm2048, %v2040, 0
        %v2077 = vsel %vm2048, %v2041, 0
        %v2080 = vsel %vm2048, %v2042, 0
        %v2083 = vsel %vm2048, %v2043, 0
        %v2086 = vsel %vm2048, %v2044, 0
        %v2089 = vsel %vm2048, %v2045, 0
        %v2092 = vsel %vm2048, %v2046, 0
        %v2095 = vsel %vm2048, %v2047, 0
        %vm2097 = vcmask 1041408
        %v2099 = vsel %vm2097, %v1675, 0
        %2101 = vmatprep.subr.bf16.mxu0 0
        %2102 = vmatpush1.bf16.msra.mxu0 0
        %2103 = vmatprep.subr.bf16.mxu0 0
        %2104 = vmatpush1.bf16.msra.mxu0 0
        %2105 = vmatprep.subr.bf16.mxu0 0
        %2106 = vmatpush1.bf16.msra.mxu0 0
        %2107 = vmatprep.subr.bf16.mxu0 0
        %2108 = vmatpush1.bf16.msra.mxu0 0
        %2109 = vmatprep.subr.bf16.mxu0 0
        %2110 = vmatpush1.bf16.msra.mxu0 0
        %2111 = vmatprep.subr.bf16.mxu0 0
        %2112 = vmatpush1.bf16.msra.mxu0 0
        %2113 = vmatprep.subr.bf16.mxu0 0
        %2114 = vmatpush1.bf16.msra.mxu0 0
        %2115 = vmatprep.subr.bf16.mxu0 0
        %2116 = vmatpush1.bf16.msra.mxu0 %v2099
        %2117 = vmatprep.subr.bf16.mxu0 0
        %2118 = vmatpush2.bf16.msra.mxu0 0
        %2119 = vmatprep.subr.bf16.mxu0 0
        %2120 = vmatpush2.bf16.msra.mxu0 0
        %2121 = vmatprep.subr.bf16.mxu0 0
        %2122 = vmatpush2.bf16.msra.mxu0 0
        %2123 = vmatprep.subr.bf16.mxu0 0
        %2124 = vmatpush2.bf16.msra.mxu0 0
        %2125 = vmatprep.subr.bf16.mxu0 0
        %2126 = vmatpush2.bf16.msra.mxu0 0
        %2127 = vmatprep.subr.bf16.mxu0 0
        %2128 = vmatpush2.bf16.msra.mxu0 0
        %2129 = vmatprep.subr.bf16.mxu0 0
        %2130 = vmatpush2.bf16.msra.mxu0 0
        %2131 = vmatprep.subr.bf16.mxu0 0
        %2132 = vmatpush2.bf16.msra.mxu0 0
        %2133 = vmatprep.mubr.bf16.mxu0 0
        %2134 = vmatmul.mubr.bf16.gmra.mxu0 %v2050
        %v2135 = vpop.f32.mrf.mxu0
        %v2136 = vadd.f32 0.0, %v2135
        %v2137 = vpop.f32.mrf.mxu0
        %v2138 = vpop.f32.mrf.mxu0
        %v2139 = vadd.f32 0.0, %v2138
        %v2140 = vpop.f32.mrf.mxu0
        %2141 = vmatprep.mubr.bf16.mxu0 0
        %2142 = vmatmul.mubr.bf16.gmra.mxu0 %v2053
        %v2143 = vpop.f32.mrf.mxu0
        %v2144 = vadd.f32 0.0, %v2143
        %v2145 = vpop.f32.mrf.mxu0
        %v2146 = vpop.f32.mrf.mxu0
        %v2147 = vadd.f32 0.0, %v2146
        %v2148 = vpop.f32.mrf.mxu0
        %2149 = vmatprep.mubr.bf16.mxu0 0
        %2150 = vmatmul.mubr.bf16.gmra.mxu0 %v2056
        %v2151 = vpop.f32.mrf.mxu0
        %v2152 = vadd.f32 0.0, %v2151
        %v2153 = vpop.f32.mrf.mxu0
        %v2154 = vpop.f32.mrf.mxu0
        %v2155 = vadd.f32 0.0, %v2154
        %v2156 = vpop.f32.mrf.mxu0
        %2157 = vmatprep.mubr.bf16.mxu0 0
        %2158 = vmatmul.mubr.bf16.gmra.mxu0 %v2059
        %v2159 = vpop.f32.mrf.mxu0
        %v2160 = vadd.f32 0.0, %v2159
        %v2161 = vpop.f32.mrf.mxu0
        %v2162 = vpop.f32.mrf.mxu0
        %v2163 = vadd.f32 0.0, %v2162
        %v2164 = vpop.f32.mrf.mxu0
        %2165 = vmatprep.mubr.bf16.mxu0 0
        %2166 = vmatmul.mubr.bf16.gmra.mxu0 %v2062
        %v2167 = vpop.f32.mrf.mxu0
        %v2168 = vadd.f32 0.0, %v2167
        %v2169 = vpop.f32.mrf.mxu0
        %v2170 = vpop.f32.mrf.mxu0
        %v2171 = vadd.f32 0.0, %v2170
        %v2172 = vpop.f32.mrf.mxu0
        %2173 = vmatprep.mubr.bf16.mxu0 0
        %2174 = vmatmul.mubr.bf16.gmra.mxu0 %v2065
        %v2175 = vpop.f32.mrf.mxu0
        %v2176 = vadd.f32 0.0, %v2175
        %v2177 = vpop.f32.mrf.mxu0
        %v2178 = vpop.f32.mrf.mxu0
        %v2179 = vadd.f32 0.0, %v2178
        %v2180 = vpop.f32.mrf.mxu0
        %2181 = vmatprep.mubr.bf16.mxu0 0
        %2182 = vmatmul.mubr.bf16.gmra.mxu0 %v2068
        %v2183 = vpop.f32.mrf.mxu0
        %v2184 = vadd.f32 0.0, %v2183
        %v2185 = vpop.f32.mrf.mxu0
        %v2186 = vpop.f32.mrf.mxu0
        %v2187 = vadd.f32 0.0, %v2186
        %v2188 = vpop.f32.mrf.mxu0
        %2189 = vmatprep.mubr.bf16.mxu0 0
        %2190 = vmatmul.mubr.bf16.gmra.mxu0 %v2071
        %v2191 = vpop.f32.mrf.mxu0
        %v2192 = vadd.f32 0.0, %v2191
        %v2193 = vpop.f32.mrf.mxu0
        %v2194 = vpop.f32.mrf.mxu0
        %v2195 = vadd.f32 0.0, %v2194
        %v2196 = vpop.f32.mrf.mxu0
        %2197 = vmatprep.mubr.bf16.mxu0 0
        %2198 = vmatmul.mubr.bf16.gmra.mxu0 %v2074
        %v2199 = vpop.f32.mrf.mxu0
        %v2200 = vadd.f32 0.0, %v2199
        %v2201 = vpop.f32.mrf.mxu0
        %v2202 = vpop.f32.mrf.mxu0
        %v2203 = vadd.f32 0.0, %v2202
        %v2204 = vpop.f32.mrf.mxu0
        %2205 = vmatprep.mubr.bf16.mxu0 0
        %2206 = vmatmul.mubr.bf16.gmra.mxu0 %v2077
        %v2207 = vpop.f32.mrf.mxu0
        %v2208 = vadd.f32 0.0, %v2207
        %v2209 = vpop.f32.mrf.mxu0
        %v2210 = vpop.f32.mrf.mxu0
        %v2211 = vadd.f32 0.0, %v2210
        %v2212 = vpop.f32.mrf.mxu0
        %2213 = vmatprep.mubr.bf16.mxu0 0
        %2214 = vmatmul.mubr.bf16.gmra.mxu0 %v2080
        %v2215 = vpop.f32.mrf.mxu0
        %v2216 = vadd.f32 0.0, %v2215
        %v2217 = vpop.f32.mrf.mxu0
        %v2218 = vpop.f32.mrf.mxu0
        %v2219 = vadd.f32 0.0, %v2218
        %v2220 = vpop.f32.mrf.mxu0
        %2221 = vmatprep.mubr.bf16.mxu0 0
        %2222 = vmatmul.mubr.bf16.gmra.mxu0 %v2083
        %v2223 = vpop.f32.mrf.mxu0
        %v2224 = vadd.f32 0.0, %v2223
        %v2225 = vpop.f32.mrf.mxu0
        %v2226 = vpop.f32.mrf.mxu0
        %v2227 = vadd.f32 0.0, %v2226
        %v2228 = vpop.f32.mrf.mxu0
        %2229 = vmatprep.mubr.bf16.mxu0 0
        %2230 = vmatmul.mubr.bf16.gmra.mxu0 %v2086
        %v2231 = vpop.f32.mrf.mxu0
        %v2232 = vadd.f32 0.0, %v2231
        %v2233 = vpop.f32.mrf.mxu0
        %v2234 = vpop.f32.mrf.mxu0
        %v2235 = vadd.f32 0.0, %v2234
        %v2236 = vpop.f32.mrf.mxu0
        %2237 = vmatprep.mubr.bf16.mxu0 0
        %2238 = vmatmul.mubr.bf16.gmra.mxu0 %v2089
        %v2239 = vpop.f32.mrf.mxu0
        %v2240 = vadd.f32 0.0, %v2239
        %v2241 = vpop.f32.mrf.mxu0
        %v2242 = vpop.f32.mrf.mxu0
        %v2243 = vadd.f32 0.0, %v2242
        %v2244 = vpop.f32.mrf.mxu0
        %2245 = vmatprep.mubr.bf16.mxu0 0
        %2246 = vmatmul.mubr.bf16.gmra.mxu0 %v2092
        %v2247 = vpop.f32.mrf.mxu0
        %v2248 = vadd.f32 0.0, %v2247
        %v2249 = vpop.f32.mrf.mxu0
        %v2250 = vpop.f32.mrf.mxu0
        %v2251 = vadd.f32 0.0, %v2250
        %v2252 = vpop.f32.mrf.mxu0
        %2253 = vmatprep.mubr.bf16.mxu0 0
        %2254 = vmatmul.mubr.bf16.gmra.mxu0 %v2095
        %v2255 = vpop.f32.mrf.mxu0
        %v2256 = vadd.f32 0.0, %v2255
        %v2257 = vpop.f32.mrf.mxu0
        %v2258 = vpop.f32.mrf.mxu0
        %v2259 = vadd.f32 0.0, %v2258
        %v2260 = vpop.f32.mrf.mxu0
        %2261 = vdwg.mxu0
        %v2262 = vmax.f32 %v2136, %v2152
        %v2263 = vmax.f32 %v2139, %v2155
        %v2264 = vmax.f32 %v2144, %v2160
        %v2265 = vmax.f32 %v2147, %v2163
        %v2266 = vmax.f32 %v2262, %v2168
        %v2267 = vmax.f32 %v2263, %v2171
        %v2268 = vmax.f32 %v2264, %v2176
        %v2269 = vmax.f32 %v2265, %v2179
        %v2270 = vmax.f32 %v2266, %v2184
        %v2271 = vmax.f32 %v2267, %v2187
        %v2272 = vmax.f32 %v2268, %v2192
        %v2273 = vmax.f32 %v2269, %v2195
        %v2274 = vmax.f32 %v2270, %v2200
        %v2275 = vmax.f32 %v2271, %v2203
        %v2276 = vmax.f32 %v2272, %v2208
        %v2277 = vmax.f32 %v2273, %v2211
        %v2278 = vmax.f32 %v2274, %v2216
        %v2279 = vmax.f32 %v2275, %v2219
        %v2280 = vmax.f32 %v2276, %v2224
        %v2281 = vmax.f32 %v2277, %v2227
        %v2282 = vmax.f32 %v2278, %v2232
        %v2283 = vmax.f32 %v2279, %v2235
        %v2284 = vmax.f32 %v2280, %v2240
        %v2285 = vmax.f32 %v2281, %v2243
        %v2286 = vmax.f32 %v2282, %v2248
        %v2287 = vmax.f32 %v2283, %v2251
        %v2288 = vmax.f32 %v2284, %v2256
        %v2289 = vmax.f32 %v2285, %v2259
        %v2290 = vmax.f32 %v2286, %v2287
        %v2291 = vmax.f32 %v2288, %v2289
        %v2292 = vmax.f32 %v2290, %v2291
        %2293 = vmax.xlane.f32.xlu0 %v2292
        %v2294 = vpop.xlane.xlu0 %2293
        %v2295 = vrot.slane %v2294, 4
        %v2296 = vmax.f32 %v2294, %v2295
        %v2297 = vrot.slane %v2296, 2
        %v2298 = vmax.f32 %v2296, %v2297
        %v2299 = vrot.slane %v2298, 1
        %v2300 = vmax.f32 %v2298, %v2299
        %s2301 = vtos %v2300
        %v2302 = vstv %s2301
        %v2303 = vsub.f32 %v2136, %v2302
        %v2304 = vsub.f32 %v2139, %v2302
        %v2305 = vsub.f32 %v2144, %v2302
        %v2306 = vsub.f32 %v2147, %v2302
        %v2307 = vsub.f32 %v2152, %v2302
        %v2308 = vsub.f32 %v2155, %v2302
        %v2309 = vsub.f32 %v2160, %v2302
        %v2310 = vsub.f32 %v2163, %v2302
        %v2311 = vsub.f32 %v2168, %v2302
        %v2312 = vsub.f32 %v2171, %v2302
        %v2313 = vsub.f32 %v2176, %v2302
        %v2314 = vsub.f32 %v2179, %v2302
        %v2315 = vsub.f32 %v2184, %v2302
        %v2316 = vsub.f32 %v2187, %v2302
        %v2317 = vsub.f32 %v2192, %v2302
        %v2318 = vsub.f32 %v2195, %v2302
        %v2319 = vsub.f32 %v2200, %v2302
        %v2320 = vsub.f32 %v2203, %v2302
        %v2321 = vsub.f32 %v2208, %v2302
        %v2322 = vsub.f32 %v2211, %v2302
        %v2323 = vsub.f32 %v2216, %v2302
        %v2324 = vsub.f32 %v2219, %v2302
        %v2325 = vsub.f32 %v2224, %v2302
        %v2326 = vsub.f32 %v2227, %v2302
        %v2327 = vsub.f32 %v2232, %v2302
        %v2328 = vsub.f32 %v2235, %v2302
        %v2329 = vsub.f32 %v2240, %v2302
        %v2330 = vsub.f32 %v2243, %v2302
        %v2331 = vsub.f32 %v2248, %v2302
        %v2332 = vsub.f32 %v2251, %v2302
        %v2333 = vsub.f32 %v2256, %v2302
        %v2334 = vsub.f32 %v2259, %v2302
        %v2335 = vmul.f32 %v2303, 1.442695
        %v2336 = vpow.pop %v2335
        %v2337 = vmul.f32 %v2304, 1.442695
        %v2338 = vpow.pop %v2337
        %v2339 = vmul.f32 %v2305, 1.442695
        %v2340 = vpow.pop %v2339
        %v2341 = vmul.f32 %v2306, 1.442695
        %v2342 = vpow.pop %v2341
        %v2343 = vmul.f32 %v2307, 1.442695
        %v2344 = vpow.pop %v2343
        %v2345 = vmul.f32 %v2308, 1.442695
        %v2346 = vpow.pop %v2345
        %v2347 = vmul.f32 %v2309, 1.442695
        %v2348 = vpow.pop %v2347
        %v2349 = vmul.f32 %v2310, 1.442695
        %v2350 = vpow.pop %v2349
        %v2351 = vmul.f32 %v2311, 1.442695
        %v2352 = vpow.pop %v2351
        %v2353 = vmul.f32 %v2312, 1.442695
        %v2354 = vpow.pop %v2353
        %v2355 = vmul.f32 %v2313, 1.442695
        %v2356 = vpow.pop %v2355
        %v2357 = vmul.f32 %v2314, 1.442695
        %v2358 = vpow.pop %v2357
        %v2359 = vmul.f32 %v2315, 1.442695
        %v2360 = vpow.pop %v2359
        %v2361 = vmul.f32 %v2316, 1.442695
        %v2362 = vpow.pop %v2361
        %v2363 = vmul.f32 %v2317, 1.442695
        %v2364 = vpow.pop %v2363
        %v2365 = vmul.f32 %v2318, 1.442695
        %v2366 = vpow.pop %v2365
        %v2367 = vmul.f32 %v2319, 1.442695
        %v2368 = vpow.pop %v2367
        %v2369 = vmul.f32 %v2320, 1.442695
        %v2370 = vpow.pop %v2369
        %v2371 = vmul.f32 %v2321, 1.442695
        %v2372 = vpow.pop %v2371
        %v2373 = vmul.f32 %v2322, 1.442695
        %v2374 = vpow.pop %v2373
        %v2375 = vmul.f32 %v2323, 1.442695
        %v2376 = vpow.pop %v2375
        %v2377 = vmul.f32 %v2324, 1.442695
        %v2378 = vpow.pop %v2377
        %v2379 = vmul.f32 %v2325, 1.442695
        %v2380 = vpow.pop %v2379
        %v2381 = vmul.f32 %v2326, 1.442695
        %v2382 = vpow.pop %v2381
        %v2383 = vmul.f32 %v2327, 1.442695
        %v2384 = vpow.pop %v2383
        %v2385 = vmul.f32 %v2328, 1.442695
        %v2386 = vpow.pop %v2385
        %v2387 = vmul.f32 %v2329, 1.442695
        %v2388 = vpow.pop %v2387
        %v2389 = vmul.f32 %v2330, 1.442695
        %v2390 = vpow.pop %v2389
        %v2391 = vmul.f32 %v2331, 1.442695
        %v2392 = vpow.pop %v2391
        %v2393 = vmul.f32 %v2332, 1.442695
        %v2394 = vpow.pop %v2393
        %v2395 = vmul.f32 %v2333, 1.442695
        %v2396 = vpow.pop %v2395
        %v2397 = vmul.f32 %v2334, 1.442695
        %v2398 = vpow.pop %v2397
        %v2399 = vpack.c.bf16 %v2338, %v2336
        %v2400 = vpack.c.bf16 %v2342, %v2340
        %v2401 = vpack.c.bf16 %v2346, %v2344
        %v2402 = vpack.c.bf16 %v2350, %v2348
        %v2403 = vpack.c.bf16 %v2354, %v2352
        %v2404 = vpack.c.bf16 %v2358, %v2356
        %v2405 = vpack.c.bf16 %v2362, %v2360
        %v2406 = vpack.c.bf16 %v2366, %v2364
        %v2407 = vpack.c.bf16 %v2370, %v2368
        %v2408 = vpack.c.bf16 %v2374, %v2372
        %v2409 = vpack.c.bf16 %v2378, %v2376
        %v2410 = vpack.c.bf16 %v2382, %v2380
        %v2411 = vpack.c.bf16 %v2386, %v2384
        %v2412 = vpack.c.bf16 %v2390, %v2388
        %v2413 = vpack.c.bf16 %v2394, %v2392
        %v2414 = vpack.c.bf16 %v2398, %v2396
        %2415 = vmatprep.subr.bf16.mxu0 0
        %2416 = vmatpush1.bf16.msra.mxu0 %v2406
        %2417 = vmatprep.subr.bf16.mxu0 0
        %2418 = vmatpush1.bf16.msra.mxu0 %v2405
        %2419 = vmatprep.subr.bf16.mxu0 0
        %2420 = vmatpush1.bf16.msra.mxu0 %v2404
        %2421 = vmatprep.subr.bf16.mxu0 0
        %2422 = vmatpush1.bf16.msra.mxu0 %v2403
        %2423 = vmatprep.subr.bf16.mxu0 0
        %2424 = vmatpush1.bf16.msra.mxu0 %v2402
        %2425 = vmatprep.subr.bf16.mxu0 0
        %2426 = vmatpush1.bf16.msra.mxu0 %v2401
        %2427 = vmatprep.subr.bf16.mxu0 0
        %2428 = vmatpush1.bf16.msra.mxu0 %v2400
        %2429 = vmatprep.subr.bf16.mxu0 0
        %2430 = vmatpush1.bf16.msra.mxu0 %v2399
        %2431 = vmatprep.subr.bf16.mxu0 0
        %2432 = vmatpush2.bf16.msra.mxu0 %v2414
        %2433 = vmatprep.subr.bf16.mxu0 0
        %2434 = vmatpush2.bf16.msra.mxu0 %v2413
        %2435 = vmatprep.subr.bf16.mxu0 0
        %2436 = vmatpush2.bf16.msra.mxu0 %v2412
        %2437 = vmatprep.subr.bf16.mxu0 0
        %2438 = vmatpush2.bf16.msra.mxu0 %v2411
        %2439 = vmatprep.subr.bf16.mxu0 0
        %2440 = vmatpush2.bf16.msra.mxu0 %v2410
        %2441 = vmatprep.subr.bf16.mxu0 0
        %2442 = vmatpush2.bf16.msra.mxu0 %v2409
        %2443 = vmatprep.subr.bf16.mxu0 0
        %2444 = vmatpush2.bf16.msra.mxu0 %v2408
        %2445 = vmatprep.subr.bf16.mxu0 0
        %2446 = vmatpush2.bf16.msra.mxu0 %v2407
        %2447 = vmatprep.mubr.bf16.mxu0 %v1672
        %2448 = vmatmul.mubr.bf16.gmra.mxu0 %v1671
        %v2449 = vpop.f32.mrf.mxu0
        %v2450 = vadd.f32 0.0, %v2449
        %v2451 = vpop.f32.mrf.mxu0
        %v2452 = vpop.f32.mrf.mxu0
        %v2453 = vpop.f32.mrf.mxu0
        %2454 = vdwg.mxu0
        %v2455 = vmul.f32 %v2450, %v399
        %v2456 = vsel %vm1666, %v2455, 0.0
        %2457 = vadd.xlane.f32.xlu0 %v2456
        %v2458 = vpop.xlane.xlu0 %2457
        %v2459 = vrot.slane %v2458, 4
        %v2460 = vadd.f32 %v2458, %v2459
        %v2461 = vrot.slane %v2460, 2
        %v2462 = vadd.f32 %v2460, %v2461
        %v2463 = vrot.slane %v2462, 1
        %v2464 = vadd.f32 %v2462, %v2463
        %s2465 = vtos %v2464
        %v2467 = vsel %vm2097, %v1676, 0
        %2469 = vmatprep.subr.bf16.mxu0 0
        %2470 = vmatpush1.bf16.msra.mxu0 0
        %2471 = vmatprep.subr.bf16.mxu0 0
        %2472 = vmatpush1.bf16.msra.mxu0 0
        %2473 = vmatprep.subr.bf16.mxu0 0
        %2474 = vmatpush1.bf16.msra.mxu0 0
        %2475 = vmatprep.subr.bf16.mxu0 0
        %2476 = vmatpush1.bf16.msra.mxu0 0
        %2477 = vmatprep.subr.bf16.mxu0 0
        %2478 = vmatpush1.bf16.msra.mxu0 0
        %2479 = vmatprep.subr.bf16.mxu0 0
        %2480 = vmatpush1.bf16.msra.mxu0 0
        %2481 = vmatprep.subr.bf16.mxu0 0
        %2482 = vmatpush1.bf16.msra.mxu0 0
        %2483 = vmatprep.subr.bf16.mxu0 0
        %2484 = vmatpush1.bf16.msra.mxu0 %v2467
        %2485 = vmatprep.subr.bf16.mxu0 0
        %2486 = vmatpush2.bf16.msra.mxu0 0
        %2487 = vmatprep.subr.bf16.mxu0 0
        %2488 = vmatpush2.bf16.msra.mxu0 0
        %2489 = vmatprep.subr.bf16.mxu0 0
        %2490 = vmatpush2.bf16.msra.mxu0 0
        %2491 = vmatprep.subr.bf16.mxu0 0
        %2492 = vmatpush2.bf16.msra.mxu0 0
        %2493 = vmatprep.subr.bf16.mxu0 0
        %2494 = vmatpush2.bf16.msra.mxu0 0
        %2495 = vmatprep.subr.bf16.mxu0 0
        %2496 = vmatpush2.bf16.msra.mxu0 0
        %2497 = vmatprep.subr.bf16.mxu0 0
        %2498 = vmatpush2.bf16.msra.mxu0 0
        %2499 = vmatprep.subr.bf16.mxu0 0
        %2500 = vmatpush2.bf16.msra.mxu0 0
        %2501 = vmatprep.mubr.bf16.mxu0 0
        %2502 = vmatmul.mubr.bf16.gmra.mxu0 %v2050
        %v2503 = vpop.f32.mrf.mxu0
        %v2504 = vadd.f32 0.0, %v2503
        %v2505 = vpop.f32.mrf.mxu0
        %v2506 = vpop.f32.mrf.mxu0
        %v2507 = vadd.f32 0.0, %v2506
        %v2508 = vpop.f32.mrf.mxu0
        %2509 = vmatprep.mubr.bf16.mxu0 0
        %2510 = vmatmul.mubr.bf16.gmra.mxu0 %v2053
        %v2511 = vpop.f32.mrf.mxu0
        %v2512 = vadd.f32 0.0, %v2511
        %v2513 = vpop.f32.mrf.mxu0
        %v2514 = vpop.f32.mrf.mxu0
        %v2515 = vadd.f32 0.0, %v2514
        %v2516 = vpop.f32.mrf.mxu0
        %2517 = vmatprep.mubr.bf16.mxu0 0
        %2518 = vmatmul.mubr.bf16.gmra.mxu0 %v2056
        %v2519 = vpop.f32.mrf.mxu0
        %v2520 = vadd.f32 0.0, %v2519
        %v2521 = vpop.f32.mrf.mxu0
        %v2522 = vpop.f32.mrf.mxu0
        %v2523 = vadd.f32 0.0, %v2522
        %v2524 = vpop.f32.mrf.mxu0
        %2525 = vmatprep.mubr.bf16.mxu0 0
        %2526 = vmatmul.mubr.bf16.gmra.mxu0 %v2059
        %v2527 = vpop.f32.mrf.mxu0
        %v2528 = vadd.f32 0.0, %v2527
        %v2529 = vpop.f32.mrf.mxu0
        %v2530 = vpop.f32.mrf.mxu0
        %v2531 = vadd.f32 0.0, %v2530
        %v2532 = vpop.f32.mrf.mxu0
        %2533 = vmatprep.mubr.bf16.mxu0 0
        %2534 = vmatmul.mubr.bf16.gmra.mxu0 %v2062
        %v2535 = vpop.f32.mrf.mxu0
        %v2536 = vadd.f32 0.0, %v2535
        %v2537 = vpop.f32.mrf.mxu0
        %v2538 = vpop.f32.mrf.mxu0
        %v2539 = vadd.f32 0.0, %v2538
        %v2540 = vpop.f32.mrf.mxu0
        %2541 = vmatprep.mubr.bf16.mxu0 0
        %2542 = vmatmul.mubr.bf16.gmra.mxu0 %v2065
        %v2543 = vpop.f32.mrf.mxu0
        %v2544 = vadd.f32 0.0, %v2543
        %v2545 = vpop.f32.mrf.mxu0
        %v2546 = vpop.f32.mrf.mxu0
        %v2547 = vadd.f32 0.0, %v2546
        %v2548 = vpop.f32.mrf.mxu0
        %2549 = vmatprep.mubr.bf16.mxu0 0
        %2550 = vmatmul.mubr.bf16.gmra.mxu0 %v2068
        %v2551 = vpop.f32.mrf.mxu0
        %v2552 = vadd.f32 0.0, %v2551
        %v2553 = vpop.f32.mrf.mxu0
        %v2554 = vpop.f32.mrf.mxu0
        %v2555 = vadd.f32 0.0, %v2554
        %v2556 = vpop.f32.mrf.mxu0
        %2557 = vmatprep.mubr.bf16.mxu0 0
        %2558 = vmatmul.mubr.bf16.gmra.mxu0 %v2071
        %v2559 = vpop.f32.mrf.mxu0
        %v2560 = vadd.f32 0.0, %v2559
        %v2561 = vpop.f32.mrf.mxu0
        %v2562 = vpop.f32.mrf.mxu0
        %v2563 = vadd.f32 0.0, %v2562
        %v2564 = vpop.f32.mrf.mxu0
        %2565 = vmatprep.mubr.bf16.mxu0 0
        %2566 = vmatmul.mubr.bf16.gmra.mxu0 %v2074
        %v2567 = vpop.f32.mrf.mxu0
        %v2568 = vadd.f32 0.0, %v2567
        %v2569 = vpop.f32.mrf.mxu0
        %v2570 = vpop.f32.mrf.mxu0
        %v2571 = vadd.f32 0.0, %v2570
        %v2572 = vpop.f32.mrf.mxu0
        %2573 = vmatprep.mubr.bf16.mxu0 0
        %2574 = vmatmul.mubr.bf16.gmra.mxu0 %v2077
        %v2575 = vpop.f32.mrf.mxu0
        %v2576 = vadd.f32 0.0, %v2575
        %v2577 = vpop.f32.mrf.mxu0
        %v2578 = vpop.f32.mrf.mxu0
        %v2579 = vadd.f32 0.0, %v2578
        %v2580 = vpop.f32.mrf.mxu0
        %2581 = vmatprep.mubr.bf16.mxu0 0
        %2582 = vmatmul.mubr.bf16.gmra.mxu0 %v2080
        %v2583 = vpop.f32.mrf.mxu0
        %v2584 = vadd.f32 0.0, %v2583
        %v2585 = vpop.f32.mrf.mxu0
        %v2586 = vpop.f32.mrf.mxu0
        %v2587 = vadd.f32 0.0, %v2586
        %v2588 = vpop.f32.mrf.mxu0
        %2589 = vmatprep.mubr.bf16.mxu0 0
        %2590 = vmatmul.mubr.bf16.gmra.mxu0 %v2083
        %v2591 = vpop.f32.mrf.mxu0
        %v2592 = vadd.f32 0.0, %v2591
        %v2593 = vpop.f32.mrf.mxu0
        %v2594 = vpop.f32.mrf.mxu0
        %v2595 = vadd.f32 0.0, %v2594
        %v2596 = vpop.f32.mrf.mxu0
        %2597 = vmatprep.mubr.bf16.mxu0 0
        %2598 = vmatmul.mubr.bf16.gmra.mxu0 %v2086
        %v2599 = vpop.f32.mrf.mxu0
        %v2600 = vadd.f32 0.0, %v2599
        %v2601 = vpop.f32.mrf.mxu0
        %v2602 = vpop.f32.mrf.mxu0
        %v2603 = vadd.f32 0.0, %v2602
        %v2604 = vpop.f32.mrf.mxu0
        %2605 = vmatprep.mubr.bf16.mxu0 0
        %2606 = vmatmul.mubr.bf16.gmra.mxu0 %v2089
        %v2607 = vpop.f32.mrf.mxu0
        %v2608 = vadd.f32 0.0, %v2607
        %v2609 = vpop.f32.mrf.mxu0
        %v2610 = vpop.f32.mrf.mxu0
        %v2611 = vadd.f32 0.0, %v2610
        %v2612 = vpop.f32.mrf.mxu0
        %2613 = vmatprep.mubr.bf16.mxu0 0
        %2614 = vmatmul.mubr.bf16.gmra.mxu0 %v2092
        %v2615 = vpop.f32.mrf.mxu0
        %v2616 = vadd.f32 0.0, %v2615
        %v2617 = vpop.f32.mrf.mxu0
        %v2618 = vpop.f32.mrf.mxu0
        %v2619 = vadd.f32 0.0, %v2618
        %v2620 = vpop.f32.mrf.mxu0
        %2621 = vmatprep.mubr.bf16.mxu0 0
        %2622 = vmatmul.mubr.bf16.gmra.mxu0 %v2095
        %v2623 = vpop.f32.mrf.mxu0
        %v2624 = vadd.f32 0.0, %v2623
        %v2625 = vpop.f32.mrf.mxu0
        %v2626 = vpop.f32.mrf.mxu0
        %v2627 = vadd.f32 0.0, %v2626
        %v2628 = vpop.f32.mrf.mxu0
        %2629 = vdwg.mxu0
        %v2630 = vmax.f32 %v2504, %v2520
        %v2631 = vmax.f32 %v2507, %v2523
        %v2632 = vmax.f32 %v2512, %v2528
        %v2633 = vmax.f32 %v2515, %v2531
        %v2634 = vmax.f32 %v2630, %v2536
        %v2635 = vmax.f32 %v2631, %v2539
        %v2636 = vmax.f32 %v2632, %v2544
        %v2637 = vmax.f32 %v2633, %v2547
        %v2638 = vmax.f32 %v2634, %v2552
        %v2639 = vmax.f32 %v2635, %v2555
        %v2640 = vmax.f32 %v2636, %v2560
        %v2641 = vmax.f32 %v2637, %v2563
        %v2642 = vmax.f32 %v2638, %v2568
        %v2643 = vmax.f32 %v2639, %v2571
        %v2644 = vmax.f32 %v2640, %v2576
        %v2645 = vmax.f32 %v2641, %v2579
        %v2646 = vmax.f32 %v2642, %v2584
        %v2647 = vmax.f32 %v2643, %v2587
        %v2648 = vmax.f32 %v2644, %v2592
        %v2649 = vmax.f32 %v2645, %v2595
        %v2650 = vmax.f32 %v2646, %v2600
        %v2651 = vmax.f32 %v2647, %v2603
        %v2652 = vmax.f32 %v2648, %v2608
        %v2653 = vmax.f32 %v2649, %v2611
        %v2654 = vmax.f32 %v2650, %v2616
        %v2655 = vmax.f32 %v2651, %v2619
        %v2656 = vmax.f32 %v2652, %v2624
        %v2657 = vmax.f32 %v2653, %v2627
        %v2658 = vmax.f32 %v2654, %v2655
        %v2659 = vmax.f32 %v2656, %v2657
        %v2660 = vmax.f32 %v2658, %v2659
        %2661 = vmax.xlane.f32.xlu0 %v2660
        %v2662 = vpop.xlane.xlu0 %2661
        %v2663 = vrot.slane %v2662, 4
        %v2664 = vmax.f32 %v2662, %v2663
        %v2665 = vrot.slane %v2664, 2
        %v2666 = vmax.f32 %v2664, %v2665
        %v2667 = vrot.slane %v2666, 1
        %v2668 = vmax.f32 %v2666, %v2667
        %s2669 = vtos %v2668
        %v2670 = vstv %s2669
        %v2671 = vsub.f32 %v2504, %v2670
        %v2672 = vsub.f32 %v2507, %v2670
        %v2673 = vsub.f32 %v2512, %v2670
        %v2674 = vsub.f32 %v2515, %v2670
        %v2675 = vsub.f32 %v2520, %v2670
        %v2676 = vsub.f32 %v2523, %v2670
        %v2677 = vsub.f32 %v2528, %v2670
        %v2678 = vsub.f32 %v2531, %v2670
        %v2679 = vsub.f32 %v2536, %v2670
        %v2680 = vsub.f32 %v2539, %v2670
        %v2681 = vsub.f32 %v2544, %v2670
        %v2682 = vsub.f32 %v2547, %v2670
        %v2683 = vsub.f32 %v2552, %v2670
        %v2684 = vsub.f32 %v2555, %v2670
        %v2685 = vsub.f32 %v2560, %v2670
        %v2686 = vsub.f32 %v2563, %v2670
        %v2687 = vsub.f32 %v2568, %v2670
        %v2688 = vsub.f32 %v2571, %v2670
        %v2689 = vsub.f32 %v2576, %v2670
        %v2690 = vsub.f32 %v2579, %v2670
        %v2691 = vsub.f32 %v2584, %v2670
        %v2692 = vsub.f32 %v2587, %v2670
        %v2693 = vsub.f32 %v2592, %v2670
        %v2694 = vsub.f32 %v2595, %v2670
        %v2695 = vsub.f32 %v2600, %v2670
        %v2696 = vsub.f32 %v2603, %v2670
        %v2697 = vsub.f32 %v2608, %v2670
        %v2698 = vsub.f32 %v2611, %v2670
        %v2699 = vsub.f32 %v2616, %v2670
        %v2700 = vsub.f32 %v2619, %v2670
        %v2701 = vsub.f32 %v2624, %v2670
        %v2702 = vsub.f32 %v2627, %v2670
        %v2703 = vmul.f32 %v2671, 1.442695
        %v2704 = vpow.pop %v2703
        %v2705 = vmul.f32 %v2672, 1.442695
        %v2706 = vpow.pop %v2705
        %v2707 = vmul.f32 %v2673, 1.442695
        %v2708 = vpow.pop %v2707
        %v2709 = vmul.f32 %v2674, 1.442695
        %v2710 = vpow.pop %v2709
        %v2711 = vmul.f32 %v2675, 1.442695
        %v2712 = vpow.pop %v2711
        %v2713 = vmul.f32 %v2676, 1.442695
        %v2714 = vpow.pop %v2713
        %v2715 = vmul.f32 %v2677, 1.442695
        %v2716 = vpow.pop %v2715
        %v2717 = vmul.f32 %v2678, 1.442695
        %v2718 = vpow.pop %v2717
        %v2719 = vmul.f32 %v2679, 1.442695
        %v2720 = vpow.pop %v2719
        %v2721 = vmul.f32 %v2680, 1.442695
        %v2722 = vpow.pop %v2721
        %v2723 = vmul.f32 %v2681, 1.442695
        %v2724 = vpow.pop %v2723
        %v2725 = vmul.f32 %v2682, 1.442695
        %v2726 = vpow.pop %v2725
        %v2727 = vmul.f32 %v2683, 1.442695
        %v2728 = vpow.pop %v2727
        %v2729 = vmul.f32 %v2684, 1.442695
        %v2730 = vpow.pop %v2729
        %v2731 = vmul.f32 %v2685, 1.442695
        %v2732 = vpow.pop %v2731
        %v2733 = vmul.f32 %v2686, 1.442695
        %v2734 = vpow.pop %v2733
        %v2735 = vmul.f32 %v2687, 1.442695
        %v2736 = vpow.pop %v2735
        %v2737 = vmul.f32 %v2688, 1.442695
        %v2738 = vpow.pop %v2737
        %v2739 = vmul.f32 %v2689, 1.442695
        %v2740 = vpow.pop %v2739
        %v2741 = vmul.f32 %v2690, 1.442695
        %v2742 = vpow.pop %v2741
        %v2743 = vmul.f32 %v2691, 1.442695
        %v2744 = vpow.pop %v2743
        %v2745 = vmul.f32 %v2692, 1.442695
        %v2746 = vpow.pop %v2745
        %v2747 = vmul.f32 %v2693, 1.442695
        %v2748 = vpow.pop %v2747
        %v2749 = vmul.f32 %v2694, 1.442695
        %v2750 = vpow.pop %v2749
        %v2751 = vmul.f32 %v2695, 1.442695
        %v2752 = vpow.pop %v2751
        %v2753 = vmul.f32 %v2696, 1.442695
        %v2754 = vpow.pop %v2753
        %v2755 = vmul.f32 %v2697, 1.442695
        %v2756 = vpow.pop %v2755
        %v2757 = vmul.f32 %v2698, 1.442695
        %v2758 = vpow.pop %v2757
        %v2759 = vmul.f32 %v2699, 1.442695
        %v2760 = vpow.pop %v2759
        %v2761 = vmul.f32 %v2700, 1.442695
        %v2762 = vpow.pop %v2761
        %v2763 = vmul.f32 %v2701, 1.442695
        %v2764 = vpow.pop %v2763
        %v2765 = vmul.f32 %v2702, 1.442695
        %v2766 = vpow.pop %v2765
        %v2767 = vpack.c.bf16 %v2706, %v2704
        %v2768 = vpack.c.bf16 %v2710, %v2708
        %v2769 = vpack.c.bf16 %v2714, %v2712
        %v2770 = vpack.c.bf16 %v2718, %v2716
        %v2771 = vpack.c.bf16 %v2722, %v2720
        %v2772 = vpack.c.bf16 %v2726, %v2724
        %v2773 = vpack.c.bf16 %v2730, %v2728
        %v2774 = vpack.c.bf16 %v2734, %v2732
        %v2775 = vpack.c.bf16 %v2738, %v2736
        %v2776 = vpack.c.bf16 %v2742, %v2740
        %v2777 = vpack.c.bf16 %v2746, %v2744
        %v2778 = vpack.c.bf16 %v2750, %v2748
        %v2779 = vpack.c.bf16 %v2754, %v2752
        %v2780 = vpack.c.bf16 %v2758, %v2756
        %v2781 = vpack.c.bf16 %v2762, %v2760
        %v2782 = vpack.c.bf16 %v2766, %v2764
        %2783 = vmatprep.subr.bf16.mxu0 0
        %2784 = vmatpush1.bf16.msra.mxu0 %v2774
        %2785 = vmatprep.subr.bf16.mxu0 0
        %2786 = vmatpush1.bf16.msra.mxu0 %v2773
        %2787 = vmatprep.subr.bf16.mxu0 0
        %2788 = vmatpush1.bf16.msra.mxu0 %v2772
        %2789 = vmatprep.subr.bf16.mxu0 0
        %2790 = vmatpush1.bf16.msra.mxu0 %v2771
        %2791 = vmatprep.subr.bf16.mxu0 0
        %2792 = vmatpush1.bf16.msra.mxu0 %v2770
        %2793 = vmatprep.subr.bf16.mxu0 0
        %2794 = vmatpush1.bf16.msra.mxu0 %v2769
        %2795 = vmatprep.subr.bf16.mxu0 0
        %2796 = vmatpush1.bf16.msra.mxu0 %v2768
        %2797 = vmatprep.subr.bf16.mxu0 0
        %2798 = vmatpush1.bf16.msra.mxu0 %v2767
        %2799 = vmatprep.subr.bf16.mxu0 0
        %2800 = vmatpush2.bf16.msra.mxu0 %v2782
        %2801 = vmatprep.subr.bf16.mxu0 0
        %2802 = vmatpush2.bf16.msra.mxu0 %v2781
        %2803 = vmatprep.subr.bf16.mxu0 0
        %2804 = vmatpush2.bf16.msra.mxu0 %v2780
        %2805 = vmatprep.subr.bf16.mxu0 0
        %2806 = vmatpush2.bf16.msra.mxu0 %v2779
        %2807 = vmatprep.subr.bf16.mxu0 0
        %2808 = vmatpush2.bf16.msra.mxu0 %v2778
        %2809 = vmatprep.subr.bf16.mxu0 0
        %2810 = vmatpush2.bf16.msra.mxu0 %v2777
        %2811 = vmatprep.subr.bf16.mxu0 0
        %2812 = vmatpush2.bf16.msra.mxu0 %v2776
        %2813 = vmatprep.subr.bf16.mxu0 0
        %2814 = vmatpush2.bf16.msra.mxu0 %v2775
        %2815 = vmatprep.mubr.bf16.mxu0 %v1672
        %2816 = vmatmul.mubr.bf16.gmra.mxu0 %v1671
        %v2817 = vpop.f32.mrf.mxu0
        %v2818 = vadd.f32 0.0, %v2817
        %v2819 = vpop.f32.mrf.mxu0
        %v2820 = vpop.f32.mrf.mxu0
        %v2821 = vpop.f32.mrf.mxu0
        %2822 = vdwg.mxu0
        %v2823 = vmul.f32 %v2818, %v1637
        %v2824 = vsel %vm1666, %v2823, 0.0
        %2825 = vadd.xlane.f32.xlu0 %v2824
        %v2826 = vpop.xlane.xlu0 %2825
        %v2827 = vrot.slane %v2826, 4
        %v2828 = vadd.f32 %v2826, %v2827
        %v2829 = vrot.slane %v2828, 2
        %v2830 = vadd.f32 %v2828, %v2829
        %v2831 = vrot.slane %v2830, 1
        %v2832 = vadd.f32 %v2830, %v2831
        %s2833 = vtos %v2832
        %s2834 = smax.f32 %s2301, %s2669
        %s2835 = ssub.f32 %s2301, %s2834
        %v2836 = vstv %s2835
        %v2837 = vmul.f32 %v2836, 1.442695
        %v2838 = vpow.pop %v2837
        %s2839 = vtos %v2838
        %s2840 = ssub.f32 %s2669, %s2834
        %v2841 = vstv %s2840
        %v2842 = vmul.f32 %v2841, 1.442695
        %v2843 = vpow.pop %v2842
        %s2844 = vtos %v2843
        %s2845 = smul.f32 %s2465, %s2839
        %s2846 = smul.f32 %s2833, %s2844
        %s2847 = sadd.f32 %s2845, %s2846
        %v2848 = vstv %s2847
        %v2849 = vrcp.pop %v2848
        %s2850 = vtos %v2849
        %s2851 = smul.f32 %s2839, %s2850
        %v2852 = vstv %s2851
        %v2853 = vmul.f32 %v2450, %v2852
        %s2854 = smul.f32 %s2844, %s2850
        %v2855 = vstv %s2854
        %v2856 = vmul.f32 %v2818, %v2855
        %v2857 = vpack.c.bf16 %v2853, %v2853
        %v2858 = vpack.c.bf16 %v2856, %v2856
        %2860 = vset.pattern.permute.xlu0 0
        %2861 = vperm.xlu0 %2860, %v1686
        %v2862 = vpop.permute.xlu0 %2861
        %v2865 = vshrl.u32 %v2857, 16
        %v2867 = vshll.u32 %v2857, 16
        %v2869 = vrot.slane %v2867, 1
        %v2870 = vor.u32 %v2865, %v2869
        %v2872 = vshrl.u32 %v2858, 16
        %v2874 = vshll.u32 %v2858, 16
        %v2876 = vrot.slane %v2874, 1
        %v2877 = vor.u32 %v2872, %v2876
        %v2879 = vsel %vm2048, %v1685, 0
        %v2882 = vsel %vm2097, %v2870, 0
        %v2885 = vsel %vm2097, %v2877, 0
        %2887 = vmatprep.subr.bf16.mxu0 0
        %2888 = vmatpush1.bf16.msra.mxu0 0
        %2889 = vmatprep.subr.bf16.mxu0 0
        %2890 = vmatpush1.bf16.msra.mxu0 0
        %2891 = vmatprep.subr.bf16.mxu0 0
        %2892 = vmatpush1.bf16.msra.mxu0 0
        %2893 = vmatprep.subr.bf16.mxu0 0
        %2894 = vmatpush1.bf16.msra.mxu0 0
        %2895 = vmatprep.subr.bf16.mxu0 0
        %2896 = vmatpush1.bf16.msra.mxu0 0
        %2897 = vmatprep.subr.bf16.mxu0 0
        %2898 = vmatpush1.bf16.msra.mxu0 0
        %2899 = vmatprep.subr.bf16.mxu0 0
        %2900 = vmatpush1.bf16.msra.mxu0 0
        %2901 = vmatprep.subr.bf16.mxu0 %v2885
        %2902 = vmatpush1.bf16.msra.mxu0 %v2882
        %2903 = vmatprep.subr.bf16.mxu0 0
        %2904 = vmatpush2.bf16.msra.mxu0 0
        %2905 = vmatprep.subr.bf16.mxu0 0
        %2906 = vmatpush2.bf16.msra.mxu0 0
        %2907 = vmatprep.subr.bf16.mxu0 0
        %2908 = vmatpush2.bf16.msra.mxu0 0
        %2909 = vmatprep.subr.bf16.mxu0 0
        %2910 = vmatpush2.bf16.msra.mxu0 0
        %2911 = vmatprep.subr.bf16.mxu0 0
        %2912 = vmatpush2.bf16.msra.mxu0 0
        %2913 = vmatprep.subr.bf16.mxu0 0
        %2914 = vmatpush2.bf16.msra.mxu0 0
        %2915 = vmatprep.subr.bf16.mxu0 0
        %2916 = vmatpush2.bf16.msra.mxu0 0
        %2917 = vmatprep.subr.bf16.mxu0 0
        %2918 = vmatpush2.bf16.msra.mxu0 0
        %2919 = vmatprep.mubr.bf16.mxu0 0
        %2920 = vmatmul.mubr.bf16.gmra.mxu0 %v2879
        %v2921 = vpop.f32.mrf.mxu0
        %v2922 = vadd.f32 %v2862, %v2921
        %v2923 = vpop.f32.mrf.mxu0
        %v2924 = vadd.f32 %v2862, %v2923
        %v2925 = vpop.f32.mrf.mxu0
        %v2926 = vpop.f32.mrf.mxu0
        %2927 = vdwg.mxu0
        %v2928 = vadd.f32 %v1793, 1.0
        %v2929 = vstv %s400
        %v2930 = vmul.f32 %v2929, %v2928
        %v2931 = vadd.f32 %v1622, 1.0
        %v2932 = vadd.f32 %v1624, 1.0
        %2934 = vset.pattern.permute.xlu0 0
        %2935 = vperm.xlu0 %2934, %v2930
        %v2936 = vpop.permute.xlu0 %2935
        %v2938 = vlaneseq
        %v2939 = vshrl.u32 %v2938, 7
        %v2940 = vsub.s32 4, %v2939
        %v2941 = vrot.slane %v2931, %v2940
        %v2942 = vlaneseq
        %v2943 = vshrl.u32 %v2942, 7
        %v2944 = vsub.s32 4, %v2943
        %v2945 = vrot.slane %v2932, %v2944
        %v2946 = vmul.f32 %v2936, %v2941
        %v2947 = vmul.f32 %v2936, %v2945
        %v2948 = vstv %s401
        %v2949 = vadd.f32 %v2946, %v2948
        %v2950 = vadd.f32 %v2947, %v2948
        %v2951 = vadd.f32 %v2008, 1.0
        %v2952 = vadd.f32 %v2009, 1.0
        %v2953 = vmul.f32 %v2951, %v2922
        %v2954 = vmul.f32 %v2952, %v2924
        %v2955 = vadd.f32 %v2949, %v2953
        %v2956 = vadd.f32 %v2950, %v2954
        %v2957 = vmul.f32 %v391, %v2955
        %v2958 = vmul.f32 %v392, %v2956
        %2959 = vst [vmem:[%s382] sm:$0xff] %v2957
        %2960 = vst [vmem:[%s382 + $0x8] sm:$0xff] %v2958
        %v2961 = vadd.f32 %v393, %v394
        %2962 = vadd.xlane.f32.xlu0 %v2961
        %v2963 = vpop.xlane.xlu0 %2962
        %v2964 = vmul.f32 %v2963, 0.0051020407
        %2965 = vmatprep.subr.mxu0 0.0
        %2966 = vmatpush1.msra.mxu0 0.0
        %2967 = vmatprep.subr.mxu0 0.0
        %2968 = vmatpush1.msra.mxu0 0.0
        %2969 = vmatprep.subr.mxu0 0.0
        %2970 = vmatpush1.msra.mxu0 0.0
        %2971 = vmatprep.subr.mxu0 0.0
        %2972 = vmatpush1.msra.mxu0 0.0
        %2973 = vmatprep.subr.mxu0 0.0
        %2974 = vmatpush1.msra.mxu0 0.0
        %2975 = vmatprep.subr.mxu0 0.0
        %2976 = vmatpush1.msra.mxu0 0.0
        %2977 = vmatprep.subr.mxu0 0.0
        %2978 = vmatpush1.msra.mxu0 0.0
        %2979 = vmatprep.subr.mxu0 0.0
        %2980 = vmatpush1.msra.mxu0 0.0
        %2981 = vmatprep.subr.mxu0 0.0
        %2982 = vmatpush1.msra.mxu0 0.0
        %2983 = vmatprep.subr.mxu0 0.0
        %2984 = vmatpush1.msra.mxu0 0.0
        %2985 = vmatprep.subr.mxu0 0.0
        %2986 = vmatpush1.msra.mxu0 0.0
        %2987 = vmatprep.subr.mxu0 0.0
        %2988 = vmatpush1.msra.mxu0 0.0
        %2989 = vmatprep.subr.mxu0 0.0
        %2990 = vmatpush1.msra.mxu0 0.0
        %2991 = vmatprep.subr.mxu0 0.0
        %2992 = vmatpush1.msra.mxu0 0.0
        %2993 = vmatprep.subr.mxu0 0.0
        %2994 = vmatpush1.msra.mxu0 0.0
        %2995 = vmatprep.subr.mxu0 0.0
        %2996 = vmatpush1.msra.mxu0 %v2964
        %2997 = vmatprep.subr.mxu0 0.0
        %2998 = vmatpush2.msra.mxu0 0.0
        %2999 = vmatprep.subr.mxu0 0.0
        %3000 = vmatpush2.msra.mxu0 0.0
        %3001 = vmatprep.subr.mxu0 0.0
        %3002 = vmatpush2.msra.mxu0 0.0
        %3003 = vmatprep.subr.mxu0 0.0
        %3004 = vmatpush2.msra.mxu0 0.0
        %3005 = vmatprep.subr.mxu0 0.0
        %3006 = vmatpush2.msra.mxu0 0.0
        %3007 = vmatprep.subr.mxu0 0.0
        %3008 = vmatpush2.msra.mxu0 0.0
        %3009 = vmatprep.subr.mxu0 0.0
        %3010 = vmatpush2.msra.mxu0 0.0
        %3011 = vmatprep.subr.mxu0 0.0
        %3012 = vmatpush2.msra.mxu0 0.0
        %3013 = vmatprep.subr.mxu0 0.0
        %3014 = vmatpush2.msra.mxu0 0.0
        %3015 = vmatprep.subr.mxu0 0.0
        %3016 = vmatpush2.msra.mxu0 0.0
        %3017 = vmatprep.subr.mxu0 0.0
        %3018 = vmatpush2.msra.mxu0 0.0
        %3019 = vmatprep.subr.mxu0 0.0
        %3020 = vmatpush2.msra.mxu0 0.0
        %3021 = vmatprep.subr.mxu0 0.0
        %3022 = vmatpush2.msra.mxu0 0.0
        %3023 = vmatprep.subr.mxu0 0.0
        %3024 = vmatpush2.msra.mxu0 0.0
        %3025 = vmatprep.subr.mxu0 0.0
        %3026 = vmatpush2.msra.mxu0 0.0
        %3027 = vmatprep.subr.mxu0 0.0
        %3028 = vmatpush2.msra.mxu0 0.0
        %3029 = vmatprep.mubr.f32.mxu0 0.0
        %3030 = vmatmul.mubr.f32.gmra.mxu0 %v1692
        %v3031 = vpop.f32.mrf.mxu0
        %v3032 = vadd.f32 %v1682, %v3031
        %v3033 = vpop.f32.mrf.mxu0
        %3034 = vmatprep.mubr.f32.mxu0 0.0
        %3035 = vmatmul.mubr.f32.gmra.mxu0 %v1695
        %v3036 = vpop.f32.mrf.mxu0
        %v3037 = vadd.f32 %v1683, %v3036
        %v3038 = vpop.f32.mrf.mxu0
        %3039 = vmatprep.mubr.f32.mxu0 0.0
        %3040 = vmatmul.mubr.f32.gmra.mxu0 %v1698
        %v3041 = vpop.f32.mrf.mxu0
        %v3042 = vadd.f32 %v1684, %v3041
        %v3043 = vpop.f32.mrf.mxu0
        %3044 = vdwg.mxu0
        %v3045 = vxor.u32 %v3032, 2147483648
        %v3046 = vxor.u32 %v3037, 2147483648
        %v3047 = vxor.u32 %v3042, 2147483648
        %v3048 = vmul.f32 %v3045, 1.442695
        %v3049 = vpow.pop %v3048
        %v3050 = vmul.f32 %v3046, 1.442695
        %v3051 = vpow.pop %v3050
        %v3052 = vmul.f32 %v3047, 1.442695
        %v3053 = vpow.pop %v3052
        %v3054 = vadd.f32 %v3049, 1.0
        %v3055 = vadd.f32 %v3051, 1.0
        %v3056 = vadd.f32 %v3053, 1.0
        %v3057 = vrcp.pop %v3054
        %v3058 = vmul.f32 1.0, %v3057
        %v3059 = vrcp.pop %v3055
        %v3060 = vmul.f32 1.0, %v3059
        %v3061 = vrcp.pop %v3056
        %v3062 = vmul.f32 1.0, %v3061
        %v3064 = vsel %vm739, %v3062, 0
        %v3067 = vsel %vm739, %v3060, 0
        %3069 = vmatprep.subr.mxu0 0.0
        %3070 = vmatpush1.xpose.msra.mxu0 0.0
        %3071 = vmatprep.subr.mxu0 0.0
        %3072 = vmatpush1.xpose.msra.mxu0 0.0
        %3073 = vmatprep.subr.mxu0 0.0
        %3074 = vmatpush1.xpose.msra.mxu0 0.0
        %3075 = vmatprep.subr.mxu0 0.0
        %3076 = vmatpush1.xpose.msra.mxu0 0.0
        %3077 = vmatprep.subr.mxu0 0.0
        %3078 = vmatpush1.xpose.msra.mxu0 0.0
        %3079 = vmatprep.subr.mxu0 0.0
        %3080 = vmatpush1.xpose.msra.mxu0 0.0
        %3081 = vmatprep.subr.mxu0 0.0
        %3082 = vmatpush1.xpose.msra.mxu0 0.0
        %3083 = vmatprep.subr.mxu0 0.0
        %3084 = vmatpush1.xpose.msra.mxu0 0.0
        %3085 = vmatprep.subr.mxu0 0.0
        %3086 = vmatpush1.xpose.msra.mxu0 0.0
        %3087 = vmatprep.subr.mxu0 0.0
        %3088 = vmatpush1.xpose.msra.mxu0 0.0
        %3089 = vmatprep.subr.mxu0 0.0
        %3090 = vmatpush1.xpose.msra.mxu0 0.0
        %3091 = vmatprep.subr.mxu0 0.0
        %3092 = vmatpush1.xpose.msra.mxu0 0.0
        %3093 = vmatprep.subr.mxu0 0.0
        %3094 = vmatpush1.xpose.msra.mxu0 0.0
        %3095 = vmatprep.subr.mxu0 0.0
        %3096 = vmatpush1.xpose.msra.mxu0 0.0
        %3097 = vmatprep.subr.mxu0 0.0
        %3098 = vmatpush1.xpose.msra.mxu0 0.0
        %3099 = vmatprep.subr.mxu0 0.0
        %3100 = vmatpush1.xpose.msra.mxu0 %v3067
        %3101 = vmatprep.subr.mxu0 0.0
        %3102 = vmatpush2.xpose.msra.mxu0 0.0
        %3103 = vmatprep.subr.mxu0 0.0
        %3104 = vmatpush2.xpose.msra.mxu0 0.0
        %3105 = vmatprep.subr.mxu0 0.0
        %3106 = vmatpush2.xpose.msra.mxu0 0.0
        %3107 = vmatprep.subr.mxu0 0.0
        %3108 = vmatpush2.xpose.msra.mxu0 0.0
        %3109 = vmatprep.subr.mxu0 0.0
        %3110 = vmatpush2.xpose.msra.mxu0 0.0
        %3111 = vmatprep.subr.mxu0 0.0
        %3112 = vmatpush2.xpose.msra.mxu0 0.0
        %3113 = vmatprep.subr.mxu0 0.0
        %3114 = vmatpush2.xpose.msra.mxu0 0.0
        %3115 = vmatprep.subr.mxu0 0.0
        %3116 = vmatpush2.xpose.msra.mxu0 0.0
        %3117 = vmatprep.subr.mxu0 0.0
        %3118 = vmatpush2.xpose.msra.mxu0 0.0
        %3119 = vmatprep.subr.mxu0 0.0
        %3120 = vmatpush2.xpose.msra.mxu0 0.0
        %3121 = vmatprep.subr.mxu0 0.0
        %3122 = vmatpush2.xpose.msra.mxu0 0.0
        %3123 = vmatprep.subr.mxu0 0.0
        %3124 = vmatpush2.xpose.msra.mxu0 0.0
        %3125 = vmatprep.subr.mxu0 0.0
        %3126 = vmatpush2.xpose.msra.mxu0 0.0
        %3127 = vmatprep.subr.mxu0 0.0
        %3128 = vmatpush2.xpose.msra.mxu0 0.0
        %3129 = vmatprep.subr.mxu0 0.0
        %3130 = vmatpush2.xpose.msra.mxu0 0.0
        %3131 = vmatprep.subr.mxu0 0.0
        %3132 = vmatpush2.xpose.msra.mxu0 0.0
        %3133 = vmatprep.mubr.f32.mxu0 0.0
        %3134 = vmatmul.mubr.f32.gmra.mxu0 %v3064
        %v3135 = vpop.f32.mrf.mxu0
        %v3136 = vadd.f32 0.0, %v3135
        %v3137 = vpop.f32.mrf.mxu0
        %3138 = vdwg.mxu0
        %v3139 = vsel %vm451, %v3136, -inf
        %3140 = vmax.xlane.f32.xlu0 %v3139
        %v3141 = vpop.xlane.xlu0 %3140
        %v3142 = vrot.slane %v3141, 4
        %v3143 = vmax.f32 %v3141, %v3142
        %v3144 = vrot.slane %v3143, 2
        %v3145 = vmax.f32 %v3143, %v3144
        %v3146 = vrot.slane %v3145, 1
        %v3147 = vmax.f32 %v3145, %v3146
        %s3148 = vtos %v3147
        %v3149 = vstv %s3148
        %v3150 = vsub.f32 %v3136, %v3149
        %v3151 = vmul.f32 %v3150, 1.442695
        %v3152 = vpow.pop %v3151
        %3153 = vxpose.xlu0.b32.start [1/16] %v3152, 128
        %3154 = vxpose.xlu0.b32.cont [2/16] 0.0, 128
        %3155 = vxpose.xlu0.b32.cont [3/16] 0.0, 128
        %3156 = vxpose.xlu0.b32.cont [4/16] 0.0, 128
        %3157 = vxpose.xlu0.b32.cont [5/16] 0.0, 128
        %3158 = vxpose.xlu0.b32.cont [6/16] 0.0, 128
        %3159 = vxpose.xlu0.b32.cont [7/16] 0.0, 128
        %3160 = vxpose.xlu0.b32.cont [8/16] 0.0, 128
        %3161 = vxpose.xlu0.b32.cont [9/16] 0.0, 128
        %3162 = vxpose.xlu0.b32.cont [10/16] 0.0, 128
        %3163 = vxpose.xlu0.b32.cont [11/16] 0.0, 128
        %3164 = vxpose.xlu0.b32.cont [12/16] 0.0, 128
        %3165 = vxpose.xlu0.b32.cont [13/16] 0.0, 128
        %3166 = vxpose.xlu0.b32.cont [14/16] 0.0, 128
        %3167 = vxpose.xlu0.b32.cont [15/16] 0.0, 128
        %3168 = vxpose.xlu0.b32.end [16/16] 0.0, 128
        %v3169 = vpop.trf.xlu0
        %v3170 = vpop.trf.xlu0
        %v3171 = vpop.trf.xlu0
        %v3172 = vpop.trf.xlu0
        %v3173 = vpop.trf.xlu0
        %v3174 = vpop.trf.xlu0
        %v3175 = vpop.trf.xlu0
        %v3176 = vpop.trf.xlu0
        %v3177 = vpop.trf.xlu0
        %v3178 = vpop.trf.xlu0
        %v3179 = vpop.trf.xlu0
        %v3180 = vpop.trf.xlu0
        %v3181 = vpop.trf.xlu0
        %v3182 = vpop.trf.xlu0
        %v3183 = vpop.trf.xlu0
        %v3184 = vpop.trf.xlu0
        %v3186 = vsel %vm451, %v3169, 0
        %3188 = vmatprep.subr.mxu0 0.0
        %3189 = vmatpush1.msra.mxu0 0.0
        %3190 = vmatprep.subr.mxu0 0.0
        %3191 = vmatpush1.msra.mxu0 0.0
        %3192 = vmatprep.subr.mxu0 0.0
        %3193 = vmatpush1.msra.mxu0 0.0
        %3194 = vmatprep.subr.mxu0 0.0
        %3195 = vmatpush1.msra.mxu0 0.0
        %3196 = vmatprep.subr.mxu0 0.0
        %3197 = vmatpush1.msra.mxu0 0.0
        %3198 = vmatprep.subr.mxu0 0.0
        %3199 = vmatpush1.msra.mxu0 0.0
        %3200 = vmatprep.subr.mxu0 0.0
        %3201 = vmatpush1.msra.mxu0 0.0
        %3202 = vmatprep.subr.mxu0 0.0
        %3203 = vmatpush1.msra.mxu0 0.0
        %3204 = vmatprep.subr.mxu0 0.0
        %3205 = vmatpush1.msra.mxu0 0.0
        %3206 = vmatprep.subr.mxu0 0.0
        %3207 = vmatpush1.msra.mxu0 0.0
        %3208 = vmatprep.subr.mxu0 0.0
        %3209 = vmatpush1.msra.mxu0 0.0
        %3210 = vmatprep.subr.mxu0 0.0
        %3211 = vmatpush1.msra.mxu0 0.0
        %3212 = vmatprep.subr.mxu0 0.0
        %3213 = vmatpush1.msra.mxu0 0.0
        %3214 = vmatprep.subr.mxu0 0.0
        %3215 = vmatpush1.msra.mxu0 0.0
        %3216 = vmatprep.subr.mxu0 0.0
        %3217 = vmatpush1.msra.mxu0 0.0
        %3218 = vmatprep.subr.mxu0 %v394
        %3219 = vmatpush1.msra.mxu0 %v393
        %3220 = vmatprep.subr.mxu0 0.0
        %3221 = vmatpush2.msra.mxu0 0.0
        %3222 = vmatprep.subr.mxu0 0.0
        %3223 = vmatpush2.msra.mxu0 0.0
        %3224 = vmatprep.subr.mxu0 0.0
        %3225 = vmatpush2.msra.mxu0 0.0
        %3226 = vmatprep.subr.mxu0 0.0
        %3227 = vmatpush2.msra.mxu0 0.0
        %3228 = vmatprep.subr.mxu0 0.0
        %3229 = vmatpush2.msra.mxu0 0.0
        %3230 = vmatprep.subr.mxu0 0.0
        %3231 = vmatpush2.msra.mxu0 0.0
        %3232 = vmatprep.subr.mxu0 0.0
        %3233 = vmatpush2.msra.mxu0 0.0
        %3234 = vmatprep.subr.mxu0 0.0
        %3235 = vmatpush2.msra.mxu0 0.0
        %3236 = vmatprep.subr.mxu0 0.0
        %3237 = vmatpush2.msra.mxu0 0.0
        %3238 = vmatprep.subr.mxu0 0.0
        %3239 = vmatpush2.msra.mxu0 0.0
        %3240 = vmatprep.subr.mxu0 0.0
        %3241 = vmatpush2.msra.mxu0 0.0
        %3242 = vmatprep.subr.mxu0 0.0
        %3243 = vmatpush2.msra.mxu0 0.0
        %3244 = vmatprep.subr.mxu0 0.0
        %3245 = vmatpush2.msra.mxu0 0.0
        %3246 = vmatprep.subr.mxu0 0.0
        %3247 = vmatpush2.msra.mxu0 0.0
        %3248 = vmatprep.subr.mxu0 0.0
        %3249 = vmatpush2.msra.mxu0 0.0
        %3250 = vmatprep.subr.mxu0 0.0
        %3251 = vmatpush2.msra.mxu0 0.0
        %3252 = vmatprep.mubr.f32.mxu0 0.0
        %3253 = vmatmul.mubr.f32.gmra.mxu0 %v3186
        %v3254 = vpop.f32.mrf.mxu0
        %v3255 = vadd.f32 0.0, %v3254
        %v3256 = vpop.f32.mrf.mxu0
        %v3257 = vadd.f32 0.0, %v3256
        %3258 = vdwg.mxu0
        %v3259 = vsel %vm451, %v3152, 0.0
        %3260 = vadd.xlane.f32.xlu0 %v3259
        %v3261 = vpop.xlane.xlu0 %3260
        %v3262 = vrot.slane %v3261, 4
        %v3263 = vadd.f32 %v3261, %v3262
        %v3264 = vrot.slane %v3263, 2
        %v3265 = vadd.f32 %v3263, %v3264
        %v3266 = vrot.slane %v3265, 1
        %v3267 = vadd.f32 %v3265, %v3266
        %s3268 = vtos %v3267
        %v3269 = vstv %s3268
        %v3270 = vrcp.pop %v3269
        %s3271 = vtos %v3270
        %v3272 = vstv %s3271
        %v3273 = vmul.f32 %v3255, %v3272
        %v3274 = vmul.f32 %v3257, %v3272
        %v3277 = vrot.slane %v1677, 2
        %v3278 = vrot.slane %v1678, 2
        %3281 = vxpose.xlu0.c.b16.start [1/8] %v3277, 128
        %3282 = vxpose.xlu0.c.b16.cont [2/8] 0, 128
        %3283 = vxpose.xlu0.c.b16.cont [3/8] 0, 128
        %3284 = vxpose.xlu0.c.b16.cont [4/8] 0, 128
        %3285 = vxpose.xlu0.c.b16.cont [5/8] 0, 128
        %3286 = vxpose.xlu0.c.b16.cont [6/8] 0, 128
        %3287 = vxpose.xlu0.c.b16.cont [7/8] 0, 128
        %3288 = vxpose.xlu0.c.b16.end [8/8] 0, 128
        %v3289 = vpop.trf.xlu0
        %v3290 = vpop.trf.xlu0
        %v3291 = vpop.trf.xlu0
        %v3292 = vpop.trf.xlu0
        %v3293 = vpop.trf.xlu0
        %v3294 = vpop.trf.xlu0
        %v3295 = vpop.trf.xlu0
        %v3296 = vpop.trf.xlu0
        %3297 = vxpose.xlu0.c.b16.start [1/8] %v3278, 128
        %3298 = vxpose.xlu0.c.b16.cont [2/8] 0, 128
        %3299 = vxpose.xlu0.c.b16.cont [3/8] 0, 128
        %3300 = vxpose.xlu0.c.b16.cont [4/8] 0, 128
        %3301 = vxpose.xlu0.c.b16.cont [5/8] 0, 128
        %3302 = vxpose.xlu0.c.b16.cont [6/8] 0, 128
        %3303 = vxpose.xlu0.c.b16.cont [7/8] 0, 128
        %3304 = vxpose.xlu0.c.b16.end [8/8] 0, 128
        %v3305 = vpop.trf.xlu0
        %v3306 = vpop.trf.xlu0
        %v3307 = vpop.trf.xlu0
        %v3308 = vpop.trf.xlu0
        %v3309 = vpop.trf.xlu0
        %v3310 = vpop.trf.xlu0
        %v3311 = vpop.trf.xlu0
        %v3312 = vpop.trf.xlu0
        %v3314 = vsel %vm2048, %v3289, 0
        %v3317 = vsel %vm2048, %v3290, 0
        %v3320 = vsel %vm2048, %v3291, 0
        %v3323 = vsel %vm2048, %v3292, 0
        %v3326 = vsel %vm2048, %v3293, 0
        %v3329 = vsel %vm2048, %v3294, 0
        %v3332 = vsel %vm2048, %v3295, 0
        %v3335 = vsel %vm2048, %v3296, 0
        %v3338 = vsel %vm2048, %v3305, 0
        %v3341 = vsel %vm2048, %v3306, 0
        %v3344 = vsel %vm2048, %v3307, 0
        %v3347 = vsel %vm2048, %v3308, 0
        %v3350 = vsel %vm2048, %v3309, 0
        %v3353 = vsel %vm2048, %v3310, 0
        %v3356 = vsel %vm2048, %v3311, 0
        %v3359 = vsel %vm2048, %v3312, 0
        %v3362 = vsel %vm2097, %v1677, 0
        %3364 = vmatprep.subr.bf16.mxu0 0
        %3365 = vmatpush1.bf16.msra.mxu0 0
        %3366 = vmatprep.subr.bf16.mxu0 0
        %3367 = vmatpush1.bf16.msra.mxu0 0
        %3368 = vmatprep.subr.bf16.mxu0 0
        %3369 = vmatpush1.bf16.msra.mxu0 0
        %3370 = vmatprep.subr.bf16.mxu0 0
        %3371 = vmatpush1.bf16.msra.mxu0 0
        %3372 = vmatprep.subr.bf16.mxu0 0
        %3373 = vmatpush1.bf16.msra.mxu0 0
        %3374 = vmatprep.subr.bf16.mxu0 0
        %3375 = vmatpush1.bf16.msra.mxu0 0
        %3376 = vmatprep.subr.bf16.mxu0 0
        %3377 = vmatpush1.bf16.msra.mxu0 0
        %3378 = vmatprep.subr.bf16.mxu0 0
        %3379 = vmatpush1.bf16.msra.mxu0 %v3362
        %3380 = vmatprep.subr.bf16.mxu0 0
        %3381 = vmatpush2.bf16.msra.mxu0 0
        %3382 = vmatprep.subr.bf16.mxu0 0
        %3383 = vmatpush2.bf16.msra.mxu0 0
        %3384 = vmatprep.subr.bf16.mxu0 0
        %3385 = vmatpush2.bf16.msra.mxu0 0
        %3386 = vmatprep.subr.bf16.mxu0 0
        %3387 = vmatpush2.bf16.msra.mxu0 0
        %3388 = vmatprep.subr.bf16.mxu0 0
        %3389 = vmatpush2.bf16.msra.mxu0 0
        %3390 = vmatprep.subr.bf16.mxu0 0
        %3391 = vmatpush2.bf16.msra.mxu0 0
        %3392 = vmatprep.subr.bf16.mxu0 0
        %3393 = vmatpush2.bf16.msra.mxu0 0
        %3394 = vmatprep.subr.bf16.mxu0 0
        %3395 = vmatpush2.bf16.msra.mxu0 0
        %3396 = vmatprep.mubr.bf16.mxu0 0
        %3397 = vmatmul.mubr.bf16.gmra.mxu0 %v3314
        %v3398 = vpop.f32.mrf.mxu0
        %v3399 = vadd.f32 0.0, %v3398
        %v3400 = vpop.f32.mrf.mxu0
        %v3401 = vpop.f32.mrf.mxu0
        %v3402 = vadd.f32 0.0, %v3401
        %v3403 = vpop.f32.mrf.mxu0
        %3404 = vmatprep.mubr.bf16.mxu0 0
        %3405 = vmatmul.mubr.bf16.gmra.mxu0 %v3317
        %v3406 = vpop.f32.mrf.mxu0
        %v3407 = vadd.f32 0.0, %v3406
        %v3408 = vpop.f32.mrf.mxu0
        %v3409 = vpop.f32.mrf.mxu0
        %v3410 = vadd.f32 0.0, %v3409
        %v3411 = vpop.f32.mrf.mxu0
        %3412 = vmatprep.mubr.bf16.mxu0 0
        %3413 = vmatmul.mubr.bf16.gmra.mxu0 %v3320
        %v3414 = vpop.f32.mrf.mxu0
        %v3415 = vadd.f32 0.0, %v3414
        %v3416 = vpop.f32.mrf.mxu0
        %v3417 = vpop.f32.mrf.mxu0
        %v3418 = vadd.f32 0.0, %v3417
        %v3419 = vpop.f32.mrf.mxu0
        %3420 = vmatprep.mubr.bf16.mxu0 0
        %3421 = vmatmul.mubr.bf16.gmra.mxu0 %v3323
        %v3422 = vpop.f32.mrf.mxu0
        %v3423 = vadd.f32 0.0, %v3422
        %v3424 = vpop.f32.mrf.mxu0
        %v3425 = vpop.f32.mrf.mxu0
        %v3426 = vadd.f32 0.0, %v3425
        %v3427 = vpop.f32.mrf.mxu0
        %3428 = vmatprep.mubr.bf16.mxu0 0
        %3429 = vmatmul.mubr.bf16.gmra.mxu0 %v3326
        %v3430 = vpop.f32.mrf.mxu0
        %v3431 = vadd.f32 0.0, %v3430
        %v3432 = vpop.f32.mrf.mxu0
        %v3433 = vpop.f32.mrf.mxu0
        %v3434 = vadd.f32 0.0, %v3433
        %v3435 = vpop.f32.mrf.mxu0
        %3436 = vmatprep.mubr.bf16.mxu0 0
        %3437 = vmatmul.mubr.bf16.gmra.mxu0 %v3329
        %v3438 = vpop.f32.mrf.mxu0
        %v3439 = vadd.f32 0.0, %v3438
        %v3440 = vpop.f32.mrf.mxu0
        %v3441 = vpop.f32.mrf.mxu0
        %v3442 = vadd.f32 0.0, %v3441
        %v3443 = vpop.f32.mrf.mxu0
        %3444 = vmatprep.mubr.bf16.mxu0 0
        %3445 = vmatmul.mubr.bf16.gmra.mxu0 %v3332
        %v3446 = vpop.f32.mrf.mxu0
        %v3447 = vadd.f32 0.0, %v3446
        %v3448 = vpop.f32.mrf.mxu0
        %v3449 = vpop.f32.mrf.mxu0
        %v3450 = vadd.f32 0.0, %v3449
        %v3451 = vpop.f32.mrf.mxu0
        %3452 = vmatprep.mubr.bf16.mxu0 0
        %3453 = vmatmul.mubr.bf16.gmra.mxu0 %v3335
        %v3454 = vpop.f32.mrf.mxu0
        %v3455 = vadd.f32 0.0, %v3454
        %v3456 = vpop.f32.mrf.mxu0
        %v3457 = vpop.f32.mrf.mxu0
        %v3458 = vadd.f32 0.0, %v3457
        %v3459 = vpop.f32.mrf.mxu0
        %3460 = vmatprep.mubr.bf16.mxu0 0
        %3461 = vmatmul.mubr.bf16.gmra.mxu0 %v3338
        %v3462 = vpop.f32.mrf.mxu0
        %v3463 = vadd.f32 0.0, %v3462
        %v3464 = vpop.f32.mrf.mxu0
        %v3465 = vpop.f32.mrf.mxu0
        %v3466 = vadd.f32 0.0, %v3465
        %v3467 = vpop.f32.mrf.mxu0
        %3468 = vmatprep.mubr.bf16.mxu0 0
        %3469 = vmatmul.mubr.bf16.gmra.mxu0 %v3341
        %v3470 = vpop.f32.mrf.mxu0
        %v3471 = vadd.f32 0.0, %v3470
        %v3472 = vpop.f32.mrf.mxu0
        %v3473 = vpop.f32.mrf.mxu0
        %v3474 = vadd.f32 0.0, %v3473
        %v3475 = vpop.f32.mrf.mxu0
        %3476 = vmatprep.mubr.bf16.mxu0 0
        %3477 = vmatmul.mubr.bf16.gmra.mxu0 %v3344
        %v3478 = vpop.f32.mrf.mxu0
        %v3479 = vadd.f32 0.0, %v3478
        %v3480 = vpop.f32.mrf.mxu0
        %v3481 = vpop.f32.mrf.mxu0
        %v3482 = vadd.f32 0.0, %v3481
        %v3483 = vpop.f32.mrf.mxu0
        %3484 = vmatprep.mubr.bf16.mxu0 0
        %3485 = vmatmul.mubr.bf16.gmra.mxu0 %v3347
        %v3486 = vpop.f32.mrf.mxu0
        %v3487 = vadd.f32 0.0, %v3486
        %v3488 = vpop.f32.mrf.mxu0
        %v3489 = vpop.f32.mrf.mxu0
        %v3490 = vadd.f32 0.0, %v3489
        %v3491 = vpop.f32.mrf.mxu0
        %3492 = vmatprep.mubr.bf16.mxu0 0
        %3493 = vmatmul.mubr.bf16.gmra.mxu0 %v3350
        %v3494 = vpop.f32.mrf.mxu0
        %v3495 = vadd.f32 0.0, %v3494
        %v3496 = vpop.f32.mrf.mxu0
        %v3497 = vpop.f32.mrf.mxu0
        %v3498 = vadd.f32 0.0, %v3497
        %v3499 = vpop.f32.mrf.mxu0
        %3500 = vmatprep.mubr.bf16.mxu0 0
        %3501 = vmatmul.mubr.bf16.gmra.mxu0 %v3353
        %v3502 = vpop.f32.mrf.mxu0
        %v3503 = vadd.f32 0.0, %v3502
        %v3504 = vpop.f32.mrf.mxu0
        %v3505 = vpop.f32.mrf.mxu0
        %v3506 = vadd.f32 0.0, %v3505
        %v3507 = vpop.f32.mrf.mxu0
        %3508 = vmatprep.mubr.bf16.mxu0 0
        %3509 = vmatmul.mubr.bf16.gmra.mxu0 %v3356
        %v3510 = vpop.f32.mrf.mxu0
        %v3511 = vadd.f32 0.0, %v3510
        %v3512 = vpop.f32.mrf.mxu0
        %v3513 = vpop.f32.mrf.mxu0
        %v3514 = vadd.f32 0.0, %v3513
        %v3515 = vpop.f32.mrf.mxu0
        %3516 = vmatprep.mubr.bf16.mxu0 0
        %3517 = vmatmul.mubr.bf16.gmra.mxu0 %v3359
        %v3518 = vpop.f32.mrf.mxu0
        %v3519 = vadd.f32 0.0, %v3518
        %v3520 = vpop.f32.mrf.mxu0
        %v3521 = vpop.f32.mrf.mxu0
        %v3522 = vadd.f32 0.0, %v3521
        %v3523 = vpop.f32.mrf.mxu0
        %3524 = vdwg.mxu0
        %v3525 = vmax.f32 %v3399, %v3415
        %v3526 = vmax.f32 %v3402, %v3418
        %v3527 = vmax.f32 %v3407, %v3423
        %v3528 = vmax.f32 %v3410, %v3426
        %v3529 = vmax.f32 %v3525, %v3431
        %v3530 = vmax.f32 %v3526, %v3434
        %v3531 = vmax.f32 %v3527, %v3439
        %v3532 = vmax.f32 %v3528, %v3442
        %v3533 = vmax.f32 %v3529, %v3447
        %v3534 = vmax.f32 %v3530, %v3450
        %v3535 = vmax.f32 %v3531, %v3455
        %v3536 = vmax.f32 %v3532, %v3458
        %v3537 = vmax.f32 %v3533, %v3463
        %v3538 = vmax.f32 %v3534, %v3466
        %v3539 = vmax.f32 %v3535, %v3471
        %v3540 = vmax.f32 %v3536, %v3474
        %v3541 = vmax.f32 %v3537, %v3479
        %v3542 = vmax.f32 %v3538, %v3482
        %v3543 = vmax.f32 %v3539, %v3487
        %v3544 = vmax.f32 %v3540, %v3490
        %v3545 = vmax.f32 %v3541, %v3495
        %v3546 = vmax.f32 %v3542, %v3498
        %v3547 = vmax.f32 %v3543, %v3503
        %v3548 = vmax.f32 %v3544, %v3506
        %v3549 = vmax.f32 %v3545, %v3511
        %v3550 = vmax.f32 %v3546, %v3514
        %v3551 = vmax.f32 %v3547, %v3519
        %v3552 = vmax.f32 %v3548, %v3522
        %v3553 = vmax.f32 %v3549, %v3550
        %v3554 = vmax.f32 %v3551, %v3552
        %v3555 = vmax.f32 %v3553, %v3554
        %3556 = vmax.xlane.f32.xlu0 %v3555
        %v3557 = vpop.xlane.xlu0 %3556
        %v3558 = vrot.slane %v3557, 4
        %v3559 = vmax.f32 %v3557, %v3558
        %v3560 = vrot.slane %v3559, 2
        %v3561 = vmax.f32 %v3559, %v3560
        %v3562 = vrot.slane %v3561, 1
        %v3563 = vmax.f32 %v3561, %v3562
        %s3564 = vtos %v3563
        %v3565 = vstv %s3564
        %v3566 = vsub.f32 %v3399, %v3565
        %v3567 = vsub.f32 %v3402, %v3565
        %v3568 = vsub.f32 %v3407, %v3565
        %v3569 = vsub.f32 %v3410, %v3565
        %v3570 = vsub.f32 %v3415, %v3565
        %v3571 = vsub.f32 %v3418, %v3565
        %v3572 = vsub.f32 %v3423, %v3565
        %v3573 = vsub.f32 %v3426, %v3565
        %v3574 = vsub.f32 %v3431, %v3565
        %v3575 = vsub.f32 %v3434, %v3565
        %v3576 = vsub.f32 %v3439, %v3565
        %v3577 = vsub.f32 %v3442, %v3565
        %v3578 = vsub.f32 %v3447, %v3565
        %v3579 = vsub.f32 %v3450, %v3565
        %v3580 = vsub.f32 %v3455, %v3565
        %v3581 = vsub.f32 %v3458, %v3565
        %v3582 = vsub.f32 %v3463, %v3565
        %v3583 = vsub.f32 %v3466, %v3565
        %v3584 = vsub.f32 %v3471, %v3565
        %v3585 = vsub.f32 %v3474, %v3565
        %v3586 = vsub.f32 %v3479, %v3565
        %v3587 = vsub.f32 %v3482, %v3565
        %v3588 = vsub.f32 %v3487, %v3565
        %v3589 = vsub.f32 %v3490, %v3565
        %v3590 = vsub.f32 %v3495, %v3565
        %v3591 = vsub.f32 %v3498, %v3565
        %v3592 = vsub.f32 %v3503, %v3565
        %v3593 = vsub.f32 %v3506, %v3565
        %v3594 = vsub.f32 %v3511, %v3565
        %v3595 = vsub.f32 %v3514, %v3565
        %v3596 = vsub.f32 %v3519, %v3565
        %v3597 = vsub.f32 %v3522, %v3565
        %v3598 = vmul.f32 %v3566, 1.442695
        %v3599 = vpow.pop %v3598
        %v3600 = vmul.f32 %v3567, 1.442695
        %v3601 = vpow.pop %v3600
        %v3602 = vmul.f32 %v3568, 1.442695
        %v3603 = vpow.pop %v3602
        %v3604 = vmul.f32 %v3569, 1.442695
        %v3605 = vpow.pop %v3604
        %v3606 = vmul.f32 %v3570, 1.442695
        %v3607 = vpow.pop %v3606
        %v3608 = vmul.f32 %v3571, 1.442695
        %v3609 = vpow.pop %v3608
        %v3610 = vmul.f32 %v3572, 1.442695
        %v3611 = vpow.pop %v3610
        %v3612 = vmul.f32 %v3573, 1.442695
        %v3613 = vpow.pop %v3612
        %v3614 = vmul.f32 %v3574, 1.442695
        %v3615 = vpow.pop %v3614
        %v3616 = vmul.f32 %v3575, 1.442695
        %v3617 = vpow.pop %v3616
        %v3618 = vmul.f32 %v3576, 1.442695
        %v3619 = vpow.pop %v3618
        %v3620 = vmul.f32 %v3577, 1.442695
        %v3621 = vpow.pop %v3620
        %v3622 = vmul.f32 %v3578, 1.442695
        %v3623 = vpow.pop %v3622
        %v3624 = vmul.f32 %v3579, 1.442695
        %v3625 = vpow.pop %v3624
        %v3626 = vmul.f32 %v3580, 1.442695
        %v3627 = vpow.pop %v3626
        %v3628 = vmul.f32 %v3581, 1.442695
        %v3629 = vpow.pop %v3628
        %v3630 = vmul.f32 %v3582, 1.442695
        %v3631 = vpow.pop %v3630
        %v3632 = vmul.f32 %v3583, 1.442695
        %v3633 = vpow.pop %v3632
        %v3634 = vmul.f32 %v3584, 1.442695
        %v3635 = vpow.pop %v3634
        %v3636 = vmul.f32 %v3585, 1.442695
        %v3637 = vpow.pop %v3636
        %v3638 = vmul.f32 %v3586, 1.442695
        %v3639 = vpow.pop %v3638
        %v3640 = vmul.f32 %v3587, 1.442695
        %v3641 = vpow.pop %v3640
        %v3642 = vmul.f32 %v3588, 1.442695
        %v3643 = vpow.pop %v3642
        %v3644 = vmul.f32 %v3589, 1.442695
        %v3645 = vpow.pop %v3644
        %v3646 = vmul.f32 %v3590, 1.442695
        %v3647 = vpow.pop %v3646
        %v3648 = vmul.f32 %v3591, 1.442695
        %v3649 = vpow.pop %v3648
        %v3650 = vmul.f32 %v3592, 1.442695
        %v3651 = vpow.pop %v3650
        %v3652 = vmul.f32 %v3593, 1.442695
        %v3653 = vpow.pop %v3652
        %v3654 = vmul.f32 %v3594, 1.442695
        %v3655 = vpow.pop %v3654
        %v3656 = vmul.f32 %v3595, 1.442695
        %v3657 = vpow.pop %v3656
        %v3658 = vmul.f32 %v3596, 1.442695
        %v3659 = vpow.pop %v3658
        %v3660 = vmul.f32 %v3597, 1.442695
        %v3661 = vpow.pop %v3660
        %v3662 = vpack.c.bf16 %v3601, %v3599
        %v3663 = vpack.c.bf16 %v3605, %v3603
        %v3664 = vpack.c.bf16 %v3609, %v3607
        %v3665 = vpack.c.bf16 %v3613, %v3611
        %v3666 = vpack.c.bf16 %v3617, %v3615
        %v3667 = vpack.c.bf16 %v3621, %v3619
        %v3668 = vpack.c.bf16 %v3625, %v3623
        %v3669 = vpack.c.bf16 %v3629, %v3627
        %v3670 = vpack.c.bf16 %v3633, %v3631
        %v3671 = vpack.c.bf16 %v3637, %v3635
        %v3672 = vpack.c.bf16 %v3641, %v3639
        %v3673 = vpack.c.bf16 %v3645, %v3643
        %v3674 = vpack.c.bf16 %v3649, %v3647
        %v3675 = vpack.c.bf16 %v3653, %v3651
        %v3676 = vpack.c.bf16 %v3657, %v3655
        %v3677 = vpack.c.bf16 %v3661, %v3659
        %3678 = vmatprep.subr.bf16.mxu0 0
        %3679 = vmatpush1.bf16.msra.mxu0 %v3669
        %3680 = vmatprep.subr.bf16.mxu0 0
        %3681 = vmatpush1.bf16.msra.mxu0 %v3668
        %3682 = vmatprep.subr.bf16.mxu0 0
        %3683 = vmatpush1.bf16.msra.mxu0 %v3667
        %3684 = vmatprep.subr.bf16.mxu0 0
        %3685 = vmatpush1.bf16.msra.mxu0 %v3666
        %3686 = vmatprep.subr.bf16.mxu0 0
        %3687 = vmatpush1.bf16.msra.mxu0 %v3665
        %3688 = vmatprep.subr.bf16.mxu0 0
        %3689 = vmatpush1.bf16.msra.mxu0 %v3664
        %3690 = vmatprep.subr.bf16.mxu0 0
        %3691 = vmatpush1.bf16.msra.mxu0 %v3663
        %3692 = vmatprep.subr.bf16.mxu0 0
        %3693 = vmatpush1.bf16.msra.mxu0 %v3662
        %3694 = vmatprep.subr.bf16.mxu0 0
        %3695 = vmatpush2.bf16.msra.mxu0 %v3677
        %3696 = vmatprep.subr.bf16.mxu0 0
        %3697 = vmatpush2.bf16.msra.mxu0 %v3676
        %3698 = vmatprep.subr.bf16.mxu0 0
        %3699 = vmatpush2.bf16.msra.mxu0 %v3675
        %3700 = vmatprep.subr.bf16.mxu0 0
        %3701 = vmatpush2.bf16.msra.mxu0 %v3674
        %3702 = vmatprep.subr.bf16.mxu0 0
        %3703 = vmatpush2.bf16.msra.mxu0 %v3673
        %3704 = vmatprep.subr.bf16.mxu0 0
        %3705 = vmatpush2.bf16.msra.mxu0 %v3672
        %3706 = vmatprep.subr.bf16.mxu0 0
        %3707 = vmatpush2.bf16.msra.mxu0 %v3671
        %3708 = vmatprep.subr.bf16.mxu0 0
        %3709 = vmatpush2.bf16.msra.mxu0 %v3670
        %3710 = vmatprep.mubr.bf16.mxu0 %v1674
        %3711 = vmatmul.mubr.bf16.gmra.mxu0 %v1673
        %v3712 = vpop.f32.mrf.mxu0
        %v3713 = vadd.f32 0.0, %v3712
        %v3714 = vpop.f32.mrf.mxu0
        %v3715 = vpop.f32.mrf.mxu0
        %v3716 = vpop.f32.mrf.mxu0
        %3717 = vdwg.mxu0
        %v3718 = vmul.f32 %v3713, %v1641
        %v3719 = vsel %vm1666, %v3718, 0.0
        %3720 = vadd.xlane.f32.xlu0 %v3719
        %v3721 = vpop.xlane.xlu0 %3720
        %v3722 = vrot.slane %v3721, 4
        %v3723 = vadd.f32 %v3721, %v3722
        %v3724 = vrot.slane %v3723, 2
        %v3725 = vadd.f32 %v3723, %v3724
        %v3726 = vrot.slane %v3725, 1
        %v3727 = vadd.f32 %v3725, %v3726
        %s3728 = vtos %v3727
        %v3730 = vsel %vm2097, %v1678, 0
        %3732 = vmatprep.subr.bf16.mxu0 0
        %3733 = vmatpush1.bf16.msra.mxu0 0
        %3734 = vmatprep.subr.bf16.mxu0 0
        %3735 = vmatpush1.bf16.msra.mxu0 0
        %3736 = vmatprep.subr.bf16.mxu0 0
        %3737 = vmatpush1.bf16.msra.mxu0 0
        %3738 = vmatprep.subr.bf16.mxu0 0
        %3739 = vmatpush1.bf16.msra.mxu0 0
        %3740 = vmatprep.subr.bf16.mxu0 0
        %3741 = vmatpush1.bf16.msra.mxu0 0
        %3742 = vmatprep.subr.bf16.mxu0 0
        %3743 = vmatpush1.bf16.msra.mxu0 0
        %3744 = vmatprep.subr.bf16.mxu0 0
        %3745 = vmatpush1.bf16.msra.mxu0 0
        %3746 = vmatprep.subr.bf16.mxu0 0
        %3747 = vmatpush1.bf16.msra.mxu0 %v3730
        %3748 = vmatprep.subr.bf16.mxu0 0
        %3749 = vmatpush2.bf16.msra.mxu0 0
        %3750 = vmatprep.subr.bf16.mxu0 0
        %3751 = vmatpush2.bf16.msra.mxu0 0
        %3752 = vmatprep.subr.bf16.mxu0 0
        %3753 = vmatpush2.bf16.msra.mxu0 0
        %3754 = vmatprep.subr.bf16.mxu0 0
        %3755 = vmatpush2.bf16.msra.mxu0 0
        %3756 = vmatprep.subr.bf16.mxu0 0
        %3757 = vmatpush2.bf16.msra.mxu0 0
        %3758 = vmatprep.subr.bf16.mxu0 0
        %3759 = vmatpush2.bf16.msra.mxu0 0
        %3760 = vmatprep.subr.bf16.mxu0 0
        %3761 = vmatpush2.bf16.msra.mxu0 0
        %3762 = vmatprep.subr.bf16.mxu0 0
        %3763 = vmatpush2.bf16.msra.mxu0 0
        %3764 = vmatprep.mubr.bf16.mxu0 0
        %3765 = vmatmul.mubr.bf16.gmra.mxu0 %v3314
        %v3766 = vpop.f32.mrf.mxu0
        %v3767 = vadd.f32 0.0, %v3766
        %v3768 = vpop.f32.mrf.mxu0
        %v3769 = vpop.f32.mrf.mxu0
        %v3770 = vadd.f32 0.0, %v3769
        %v3771 = vpop.f32.mrf.mxu0
        %3772 = vmatprep.mubr.bf16.mxu0 0
        %3773 = vmatmul.mubr.bf16.gmra.mxu0 %v3317
        %v3774 = vpop.f32.mrf.mxu0
        %v3775 = vadd.f32 0.0, %v3774
        %v3776 = vpop.f32.mrf.mxu0
        %v3777 = vpop.f32.mrf.mxu0
        %v3778 = vadd.f32 0.0, %v3777
        %v3779 = vpop.f32.mrf.mxu0
        %3780 = vmatprep.mubr.bf16.mxu0 0
        %3781 = vmatmul.mubr.bf16.gmra.mxu0 %v3320
        %v3782 = vpop.f32.mrf.mxu0
        %v3783 = vadd.f32 0.0, %v3782
        %v3784 = vpop.f32.mrf.mxu0
        %v3785 = vpop.f32.mrf.mxu0
        %v3786 = vadd.f32 0.0, %v3785
        %v3787 = vpop.f32.mrf.mxu0
        %3788 = vmatprep.mubr.bf16.mxu0 0
        %3789 = vmatmul.mubr.bf16.gmra.mxu0 %v3323
        %v3790 = vpop.f32.mrf.mxu0
        %v3791 = vadd.f32 0.0, %v3790
        %v3792 = vpop.f32.mrf.mxu0
        %v3793 = vpop.f32.mrf.mxu0
        %v3794 = vadd.f32 0.0, %v3793
        %v3795 = vpop.f32.mrf.mxu0
        %3796 = vmatprep.mubr.bf16.mxu0 0
        %3797 = vmatmul.mubr.bf16.gmra.mxu0 %v3326
        %v3798 = vpop.f32.mrf.mxu0
        %v3799 = vadd.f32 0.0, %v3798
        %v3800 = vpop.f32.mrf.mxu0
        %v3801 = vpop.f32.mrf.mxu0
        %v3802 = vadd.f32 0.0, %v3801
        %v3803 = vpop.f32.mrf.mxu0
        %3804 = vmatprep.mubr.bf16.mxu0 0
        %3805 = vmatmul.mubr.bf16.gmra.mxu0 %v3329
        %v3806 = vpop.f32.mrf.mxu0
        %v3807 = vadd.f32 0.0, %v3806
        %v3808 = vpop.f32.mrf.mxu0
        %v3809 = vpop.f32.mrf.mxu0
        %v3810 = vadd.f32 0.0, %v3809
        %v3811 = vpop.f32.mrf.mxu0
        %3812 = vmatprep.mubr.bf16.mxu0 0
        %3813 = vmatmul.mubr.bf16.gmra.mxu0 %v3332
        %v3814 = vpop.f32.mrf.mxu0
        %v3815 = vadd.f32 0.0, %v3814
        %v3816 = vpop.f32.mrf.mxu0
        %v3817 = vpop.f32.mrf.mxu0
        %v3818 = vadd.f32 0.0, %v3817
        %v3819 = vpop.f32.mrf.mxu0
        %3820 = vmatprep.mubr.bf16.mxu0 0
        %3821 = vmatmul.mubr.bf16.gmra.mxu0 %v3335
        %v3822 = vpop.f32.mrf.mxu0
        %v3823 = vadd.f32 0.0, %v3822
        %v3824 = vpop.f32.mrf.mxu0
        %v3825 = vpop.f32.mrf.mxu0
        %v3826 = vadd.f32 0.0, %v3825
        %v3827 = vpop.f32.mrf.mxu0
        %3828 = vmatprep.mubr.bf16.mxu0 0
        %3829 = vmatmul.mubr.bf16.gmra.mxu0 %v3338
        %v3830 = vpop.f32.mrf.mxu0
        %v3831 = vadd.f32 0.0, %v3830
        %v3832 = vpop.f32.mrf.mxu0
        %v3833 = vpop.f32.mrf.mxu0
        %v3834 = vadd.f32 0.0, %v3833
        %v3835 = vpop.f32.mrf.mxu0
        %3836 = vmatprep.mubr.bf16.mxu0 0
        %3837 = vmatmul.mubr.bf16.gmra.mxu0 %v3341
        %v3838 = vpop.f32.mrf.mxu0
        %v3839 = vadd.f32 0.0, %v3838
        %v3840 = vpop.f32.mrf.mxu0
        %v3841 = vpop.f32.mrf.mxu0
        %v3842 = vadd.f32 0.0, %v3841
        %v3843 = vpop.f32.mrf.mxu0
        %3844 = vmatprep.mubr.bf16.mxu0 0
        %3845 = vmatmul.mubr.bf16.gmra.mxu0 %v3344
        %v3846 = vpop.f32.mrf.mxu0
        %v3847 = vadd.f32 0.0, %v3846
        %v3848 = vpop.f32.mrf.mxu0
        %v3849 = vpop.f32.mrf.mxu0
        %v3850 = vadd.f32 0.0, %v3849
        %v3851 = vpop.f32.mrf.mxu0
        %3852 = vmatprep.mubr.bf16.mxu0 0
        %3853 = vmatmul.mubr.bf16.gmra.mxu0 %v3347
        %v3854 = vpop.f32.mrf.mxu0
        %v3855 = vadd.f32 0.0, %v3854
        %v3856 = vpop.f32.mrf.mxu0
        %v3857 = vpop.f32.mrf.mxu0
        %v3858 = vadd.f32 0.0, %v3857
        %v3859 = vpop.f32.mrf.mxu0
        %3860 = vmatprep.mubr.bf16.mxu0 0
        %3861 = vmatmul.mubr.bf16.gmra.mxu0 %v3350
        %v3862 = vpop.f32.mrf.mxu0
        %v3863 = vadd.f32 0.0, %v3862
        %v3864 = vpop.f32.mrf.mxu0
        %v3865 = vpop.f32.mrf.mxu0
        %v3866 = vadd.f32 0.0, %v3865
        %v3867 = vpop.f32.mrf.mxu0
        %3868 = vmatprep.mubr.bf16.mxu0 0
        %3869 = vmatmul.mubr.bf16.gmra.mxu0 %v3353
        %v3870 = vpop.f32.mrf.mxu0
        %v3871 = vadd.f32 0.0, %v3870
        %v3872 = vpop.f32.mrf.mxu0
        %v3873 = vpop.f32.mrf.mxu0
        %v3874 = vadd.f32 0.0, %v3873
        %v3875 = vpop.f32.mrf.mxu0
        %3876 = vmatprep.mubr.bf16.mxu0 0
        %3877 = vmatmul.mubr.bf16.gmra.mxu0 %v3356
        %v3878 = vpop.f32.mrf.mxu0
        %v3879 = vadd.f32 0.0, %v3878
        %v3880 = vpop.f32.mrf.mxu0
        %v3881 = vpop.f32.mrf.mxu0
        %v3882 = vadd.f32 0.0, %v3881
        %v3883 = vpop.f32.mrf.mxu0
        %3884 = vmatprep.mubr.bf16.mxu0 0
        %3885 = vmatmul.mubr.bf16.gmra.mxu0 %v3359
        %v3886 = vpop.f32.mrf.mxu0
        %v3887 = vadd.f32 0.0, %v3886
        %v3888 = vpop.f32.mrf.mxu0
        %v3889 = vpop.f32.mrf.mxu0
        %v3890 = vadd.f32 0.0, %v3889
        %v3891 = vpop.f32.mrf.mxu0
        %3892 = vdwg.mxu0
        %v3893 = vmax.f32 %v3767, %v3783
        %v3894 = vmax.f32 %v3770, %v3786
        %v3895 = vmax.f32 %v3775, %v3791
        %v3896 = vmax.f32 %v3778, %v3794
        %v3897 = vmax.f32 %v3893, %v3799
        %v3898 = vmax.f32 %v3894, %v3802
        %v3899 = vmax.f32 %v3895, %v3807
        %v3900 = vmax.f32 %v3896, %v3810
        %v3901 = vmax.f32 %v3897, %v3815
        %v3902 = vmax.f32 %v3898, %v3818
        %v3903 = vmax.f32 %v3899, %v3823
        %v3904 = vmax.f32 %v3900, %v3826
        %v3905 = vmax.f32 %v3901, %v3831
        %v3906 = vmax.f32 %v3902, %v3834
        %v3907 = vmax.f32 %v3903, %v3839
        %v3908 = vmax.f32 %v3904, %v3842
        %v3909 = vmax.f32 %v3905, %v3847
        %v3910 = vmax.f32 %v3906, %v3850
        %v3911 = vmax.f32 %v3907, %v3855
        %v3912 = vmax.f32 %v3908, %v3858
        %v3913 = vmax.f32 %v3909, %v3863
        %v3914 = vmax.f32 %v3910, %v3866
        %v3915 = vmax.f32 %v3911, %v3871
        %v3916 = vmax.f32 %v3912, %v3874
        %v3917 = vmax.f32 %v3913, %v3879
        %v3918 = vmax.f32 %v3914, %v3882
        %v3919 = vmax.f32 %v3915, %v3887
        %v3920 = vmax.f32 %v3916, %v3890
        %v3921 = vmax.f32 %v3917, %v3918
        %v3922 = vmax.f32 %v3919, %v3920
        %v3923 = vmax.f32 %v3921, %v3922
        %3924 = vmax.xlane.f32.xlu0 %v3923
        %v3925 = vpop.xlane.xlu0 %3924
        %v3926 = vrot.slane %v3925, 4
        %v3927 = vmax.f32 %v3925, %v3926
        %v3928 = vrot.slane %v3927, 2
        %v3929 = vmax.f32 %v3927, %v3928
        %v3930 = vrot.slane %v3929, 1
        %v3931 = vmax.f32 %v3929, %v3930
        %s3932 = vtos %v3931
        %v3933 = vstv %s3932
        %v3934 = vsub.f32 %v3767, %v3933
        %v3935 = vsub.f32 %v3770, %v3933
        %v3936 = vsub.f32 %v3775, %v3933
        %v3937 = vsub.f32 %v3778, %v3933
        %v3938 = vsub.f32 %v3783, %v3933
        %v3939 = vsub.f32 %v3786, %v3933
        %v3940 = vsub.f32 %v3791, %v3933
        %v3941 = vsub.f32 %v3794, %v3933
        %v3942 = vsub.f32 %v3799, %v3933
        %v3943 = vsub.f32 %v3802, %v3933
        %v3944 = vsub.f32 %v3807, %v3933
        %v3945 = vsub.f32 %v3810, %v3933
        %v3946 = vsub.f32 %v3815, %v3933
        %v3947 = vsub.f32 %v3818, %v3933
        %v3948 = vsub.f32 %v3823, %v3933
        %v3949 = vsub.f32 %v3826, %v3933
        %v3950 = vsub.f32 %v3831, %v3933
        %v3951 = vsub.f32 %v3834, %v3933
        %v3952 = vsub.f32 %v3839, %v3933
        %v3953 = vsub.f32 %v3842, %v3933
        %v3954 = vsub.f32 %v3847, %v3933
        %v3955 = vsub.f32 %v3850, %v3933
        %v3956 = vsub.f32 %v3855, %v3933
        %v3957 = vsub.f32 %v3858, %v3933
        %v3958 = vsub.f32 %v3863, %v3933
        %v3959 = vsub.f32 %v3866, %v3933
        %v3960 = vsub.f32 %v3871, %v3933
        %v3961 = vsub.f32 %v3874, %v3933
        %v3962 = vsub.f32 %v3879, %v3933
        %v3963 = vsub.f32 %v3882, %v3933
        %v3964 = vsub.f32 %v3887, %v3933
        %v3965 = vsub.f32 %v3890, %v3933
        %v3966 = vmul.f32 %v3934, 1.442695
        %v3967 = vpow.pop %v3966
        %v3968 = vmul.f32 %v3935, 1.442695
        %v3969 = vpow.pop %v3968
        %v3970 = vmul.f32 %v3936, 1.442695
        %v3971 = vpow.pop %v3970
        %v3972 = vmul.f32 %v3937, 1.442695
        %v3973 = vpow.pop %v3972
        %v3974 = vmul.f32 %v3938, 1.442695
        %v3975 = vpow.pop %v3974
        %v3976 = vmul.f32 %v3939, 1.442695
        %v3977 = vpow.pop %v3976
        %v3978 = vmul.f32 %v3940, 1.442695
        %v3979 = vpow.pop %v3978
        %v3980 = vmul.f32 %v3941, 1.442695
        %v3981 = vpow.pop %v3980
        %v3982 = vmul.f32 %v3942, 1.442695
        %v3983 = vpow.pop %v3982
        %v3984 = vmul.f32 %v3943, 1.442695
        %v3985 = vpow.pop %v3984
        %v3986 = vmul.f32 %v3944, 1.442695
        %v3987 = vpow.pop %v3986
        %v3988 = vmul.f32 %v3945, 1.442695
        %v3989 = vpow.pop %v3988
        %v3990 = vmul.f32 %v3946, 1.442695
        %v3991 = vpow.pop %v3990
        %v3992 = vmul.f32 %v3947, 1.442695
        %v3993 = vpow.pop %v3992
        %v3994 = vmul.f32 %v3948, 1.442695
        %v3995 = vpow.pop %v3994
        %v3996 = vmul.f32 %v3949, 1.442695
        %v3997 = vpow.pop %v3996
        %v3998 = vmul.f32 %v3950, 1.442695
        %v3999 = vpow.pop %v3998
        %v4000 = vmul.f32 %v3951, 1.442695
        %v4001 = vpow.pop %v4000
        %v4002 = vmul.f32 %v3952, 1.442695
        %v4003 = vpow.pop %v4002
        %v4004 = vmul.f32 %v3953, 1.442695
        %v4005 = vpow.pop %v4004
        %v4006 = vmul.f32 %v3954, 1.442695
        %v4007 = vpow.pop %v4006
        %v4008 = vmul.f32 %v3955, 1.442695
        %v4009 = vpow.pop %v4008
        %v4010 = vmul.f32 %v3956, 1.442695
        %v4011 = vpow.pop %v4010
        %v4012 = vmul.f32 %v3957, 1.442695
        %v4013 = vpow.pop %v4012
        %v4014 = vmul.f32 %v3958, 1.442695
        %v4015 = vpow.pop %v4014
        %v4016 = vmul.f32 %v3959, 1.442695
        %v4017 = vpow.pop %v4016
        %v4018 = vmul.f32 %v3960, 1.442695
        %v4019 = vpow.pop %v4018
        %v4020 = vmul.f32 %v3961, 1.442695
        %v4021 = vpow.pop %v4020
        %v4022 = vmul.f32 %v3962, 1.442695
        %v4023 = vpow.pop %v4022
        %v4024 = vmul.f32 %v3963, 1.442695
        %v4025 = vpow.pop %v4024
        %v4026 = vmul.f32 %v3964, 1.442695
        %v4027 = vpow.pop %v4026
        %v4028 = vmul.f32 %v3965, 1.442695
        %v4029 = vpow.pop %v4028
        %v4030 = vpack.c.bf16 %v3969, %v3967
        %v4031 = vpack.c.bf16 %v3973, %v3971
        %v4032 = vpack.c.bf16 %v3977, %v3975
        %v4033 = vpack.c.bf16 %v3981, %v3979
        %v4034 = vpack.c.bf16 %v3985, %v3983
        %v4035 = vpack.c.bf16 %v3989, %v3987
        %v4036 = vpack.c.bf16 %v3993, %v3991
        %v4037 = vpack.c.bf16 %v3997, %v3995
        %v4038 = vpack.c.bf16 %v4001, %v3999
        %v4039 = vpack.c.bf16 %v4005, %v4003
        %v4040 = vpack.c.bf16 %v4009, %v4007
        %v4041 = vpack.c.bf16 %v4013, %v4011
        %v4042 = vpack.c.bf16 %v4017, %v4015
        %v4043 = vpack.c.bf16 %v4021, %v4019
        %v4044 = vpack.c.bf16 %v4025, %v4023
        %v4045 = vpack.c.bf16 %v4029, %v4027
        %4046 = vmatprep.subr.bf16.mxu0 0
        %4047 = vmatpush1.bf16.msra.mxu0 %v4037
        %4048 = vmatprep.subr.bf16.mxu0 0
        %4049 = vmatpush1.bf16.msra.mxu0 %v4036
        %4050 = vmatprep.subr.bf16.mxu0 0
        %4051 = vmatpush1.bf16.msra.mxu0 %v4035
        %4052 = vmatprep.subr.bf16.mxu0 0
        %4053 = vmatpush1.bf16.msra.mxu0 %v4034
        %4054 = vmatprep.subr.bf16.mxu0 0
        %4055 = vmatpush1.bf16.msra.mxu0 %v4033
        %4056 = vmatprep.subr.bf16.mxu0 0
        %4057 = vmatpush1.bf16.msra.mxu0 %v4032
        %4058 = vmatprep.subr.bf16.mxu0 0
        %4059 = vmatpush1.bf16.msra.mxu0 %v4031
        %4060 = vmatprep.subr.bf16.mxu0 0
        %4061 = vmatpush1.bf16.msra.mxu0 %v4030
        %4062 = vmatprep.subr.bf16.mxu0 0
        %4063 = vmatpush2.bf16.msra.mxu0 %v4045
        %4064 = vmatprep.subr.bf16.mxu0 0
        %4065 = vmatpush2.bf16.msra.mxu0 %v4044
        %4066 = vmatprep.subr.bf16.mxu0 0
        %4067 = vmatpush2.bf16.msra.mxu0 %v4043
        %4068 = vmatprep.subr.bf16.mxu0 0
        %4069 = vmatpush2.bf16.msra.mxu0 %v4042
        %4070 = vmatprep.subr.bf16.mxu0 0
        %4071 = vmatpush2.bf16.msra.mxu0 %v4041
        %4072 = vmatprep.subr.bf16.mxu0 0
        %4073 = vmatpush2.bf16.msra.mxu0 %v4040
        %4074 = vmatprep.subr.bf16.mxu0 0
        %4075 = vmatpush2.bf16.msra.mxu0 %v4039
        %4076 = vmatprep.subr.bf16.mxu0 0
        %4077 = vmatpush2.bf16.msra.mxu0 %v4038
        %4078 = vmatprep.mubr.bf16.mxu0 %v1674
        %4079 = vmatmul.mubr.bf16.gmra.mxu0 %v1673
        %v4080 = vpop.f32.mrf.mxu0
        %v4081 = vadd.f32 0.0, %v4080
        %v4082 = vpop.f32.mrf.mxu0
        %v4083 = vpop.f32.mrf.mxu0
        %v4084 = vpop.f32.mrf.mxu0
        %4085 = vdwg.mxu0
        %v4086 = vmul.f32 %v4081, %v1645
        %v4087 = vsel %vm1666, %v4086, 0.0
        %4088 = vadd.xlane.f32.xlu0 %v4087
        %v4089 = vpop.xlane.xlu0 %4088
        %v4090 = vrot.slane %v4089, 4
        %v4091 = vadd.f32 %v4089, %v4090
        %v4092 = vrot.slane %v4091, 2
        %v4093 = vadd.f32 %v4091, %v4092
        %v4094 = vrot.slane %v4093, 1
        %v4095 = vadd.f32 %v4093, %v4094
        %s4096 = vtos %v4095
        %s4097 = smax.f32 %s3564, %s3932
        %s4098 = ssub.f32 %s3564, %s4097
        %v4099 = vstv %s4098
        %v4100 = vmul.f32 %v4099, 1.442695
        %v4101 = vpow.pop %v4100
        %s4102 = vtos %v4101
        %s4103 = ssub.f32 %s3932, %s4097
        %v4104 = vstv %s4103
        %v4105 = vmul.f32 %v4104, 1.442695
        %v4106 = vpow.pop %v4105
        %s4107 = vtos %v4106
        %s4108 = smul.f32 %s3728, %s4102
        %s4109 = smul.f32 %s4096, %s4107
        %s4110 = sadd.f32 %s4108, %s4109
        %v4111 = vstv %s4110
        %v4112 = vrcp.pop %v4111
        %s4113 = vtos %v4112
        %s4114 = smul.f32 %s4102, %s4113
        %v4115 = vstv %s4114
        %v4116 = vmul.f32 %v3713, %v4115
        %s4117 = smul.f32 %s4107, %s4113
        %v4118 = vstv %s4117
        %v4119 = vmul.f32 %v4081, %v4118
        %v4120 = vpack.c.bf16 %v4116, %v4116
        %v4121 = vpack.c.bf16 %v4119, %v4119
        %v4123 = vshrl.u32 %v4120, 16
        %v4125 = vshll.u32 %v4120, 16
        %v4127 = vrot.slane %v4125, 1
        %v4128 = vor.u32 %v4123, %v4127
        %v4130 = vshrl.u32 %v4121, 16
        %v4132 = vshll.u32 %v4121, 16
        %v4134 = vrot.slane %v4132, 1
        %v4135 = vor.u32 %v4130, %v4134
        %v4137 = vsel %vm2097, %v4128, 0
        %v4140 = vsel %vm2097, %v4135, 0
        %4142 = vmatprep.subr.bf16.mxu0 0
        %4143 = vmatpush1.bf16.msra.mxu0 0
        %4144 = vmatprep.subr.bf16.mxu0 0
        %4145 = vmatpush1.bf16.msra.mxu0 0
        %4146 = vmatprep.subr.bf16.mxu0 0
        %4147 = vmatpush1.bf16.msra.mxu0 0
        %4148 = vmatprep.subr.bf16.mxu0 0
        %4149 = vmatpush1.bf16.msra.mxu0 0
        %4150 = vmatprep.subr.bf16.mxu0 0
        %4151 = vmatpush1.bf16.msra.mxu0 0
        %4152 = vmatprep.subr.bf16.mxu0 0
        %4153 = vmatpush1.bf16.msra.mxu0 0
        %4154 = vmatprep.subr.bf16.mxu0 0
        %4155 = vmatpush1.bf16.msra.mxu0 0
        %4156 = vmatprep.subr.bf16.mxu0 %v4140
        %4157 = vmatpush1.bf16.msra.mxu0 %v4137
        %4158 = vmatprep.subr.bf16.mxu0 0
        %4159 = vmatpush2.bf16.msra.mxu0 0
        %4160 = vmatprep.subr.bf16.mxu0 0
        %4161 = vmatpush2.bf16.msra.mxu0 0
        %4162 = vmatprep.subr.bf16.mxu0 0
        %4163 = vmatpush2.bf16.msra.mxu0 0
        %4164 = vmatprep.subr.bf16.mxu0 0
        %4165 = vmatpush2.bf16.msra.mxu0 0
        %4166 = vmatprep.subr.bf16.mxu0 0
        %4167 = vmatpush2.bf16.msra.mxu0 0
        %4168 = vmatprep.subr.bf16.mxu0 0
        %4169 = vmatpush2.bf16.msra.mxu0 0
        %4170 = vmatprep.subr.bf16.mxu0 0
        %4171 = vmatpush2.bf16.msra.mxu0 0
        %4172 = vmatprep.subr.bf16.mxu0 0
        %4173 = vmatpush2.bf16.msra.mxu0 0
        %4174 = vmatprep.mubr.bf16.mxu0 0
        %4175 = vmatmul.mubr.bf16.gmra.mxu0 %v2879
        %v4176 = vpop.f32.mrf.mxu0
        %v4177 = vadd.f32 %v2862, %v4176
        %v4178 = vpop.f32.mrf.mxu0
        %v4179 = vadd.f32 %v2862, %v4178
        %v4180 = vpop.f32.mrf.mxu0
        %v4181 = vpop.f32.mrf.mxu0
        %4182 = vdwg.mxu0
        %v4183 = vadd.f32 %v3058, 1.0
        %v4184 = vmul.f32 %v2929, %v4183
        %v4185 = vadd.f32 %v1626, 1.0
        %v4186 = vadd.f32 %v1628, 1.0
        %4188 = vset.pattern.permute.xlu0 0
        %4189 = vperm.xlu0 %4188, %v4184
        %v4190 = vpop.permute.xlu0 %4189
        %v4192 = vlaneseq
        %v4193 = vshrl.u32 %v4192, 7
        %v4194 = vsub.s32 4, %v4193
        %v4195 = vrot.slane %v4185, %v4194
        %v4196 = vlaneseq
        %v4197 = vshrl.u32 %v4196, 7
        %v4198 = vsub.s32 4, %v4197
        %v4199 = vrot.slane %v4186, %v4198
        %v4200 = vmul.f32 %v4190, %v4195
        %v4201 = vmul.f32 %v4190, %v4199
        %v4202 = vadd.f32 %v4200, %v2948
        %v4203 = vadd.f32 %v4201, %v2948
        %v4204 = vadd.f32 %v3273, 1.0
        %v4205 = vadd.f32 %v3274, 1.0
        %v4206 = vmul.f32 %v4204, %v4177
        %v4207 = vmul.f32 %v4205, %v4179
        %v4208 = vadd.f32 %v4202, %v4206
        %v4209 = vadd.f32 %v4203, %v4207
        %v4210 = vmul.f32 %v393, %v4208
        %v4211 = vmul.f32 %v394, %v4209
        %4212 = vst [vmem:[%s382 + $0x10] sm:$0xff] %v4210
        %4213 = vst [vmem:[%s382 + $0x18] sm:$0xff] %v4211
        %s4214 = sand.u32 %s249, 1
        %s4215 = scalar_lea.sflag [#allocation4], %s4214
        %s4216 = sand.u32 %s249, 1
        %s4217 = smul.addr %s4216, 32
        %s4218 = scalar_lea.vmem [#allocation7], %s4217
        // Predicated region
        $region69: #{tpu_custom_call.1} parent=59 // pred_check
          %p4219 = pneg %p259
        $region70: #{tpu_custom_call.1} parent=59 // pred_check_branch
          %4221 = sbr.rel (%p4219) target = $region72
        $region71: #{tpu_custom_call.1} parent=59 // pred_region
          %s4222 = smul.u32 4, %s26
          %s4224 = ssub.s32 512, 512
          %4225 = vsyncadd %s4215, %s4224
          %s4226 = smul.addr %s4222, 128
          %s4227 = scalar_lea.hbm %s10, %s4226
          %s4229 = sshll.u32 %s4218, 4
          %s4230 = int_to_ptr.vmem [resolvable:$true] %s4229
          %4232 = dma.vmem_to_hbm [thread:$0]  %s4230, 512, %s4227, %s4215
        $region72: #{tpu_custom_call.1} parent=59 // pred_fallthru
          _
      $region60: #{tpu_custom_call.1} parent=5 // pred_fallthru
        _
      %p4233 = scmp.le.s32.totalorder 2, %s21
      // Predicated region
      $region73: #{tpu_custom_call.1} parent=5 // pred_check
        %p4234 = pneg %p4233
      $region74: #{tpu_custom_call.1} parent=5 // pred_check_branch
        %4236 = sbr.rel (%p4234) target = $region76
      $region75: #{tpu_custom_call.1} parent=5 // pred_region
        %s4237 = ssub.s32 %s21, 2
        // Predicated region
        $region77: #{tpu_custom_call.1} parent=75 // pred_check
          %p4238 = pneg %p265
        $region78: #{tpu_custom_call.1} parent=75 // pred_check_branch
          %4240 = sbr.rel (%p4238) target = $region80
        $region79: #{tpu_custom_call.1} parent=75 // pred_region
          %s4241 = sand.u32 %s250, 1
          %s4242 = scalar_lea.sflag [#allocation4], %s4241
          %s4243 = sand.u32 %s250, 1
          %s4244 = smul.addr %s4243, 32
          %s4245 = scalar_lea.vmem [#allocation7], %s4244
          %4246 = dma.done %s4242, 512
        $region80: #{tpu_custom_call.1} parent=75 // pred_fallthru
          _
      $region76: #{tpu_custom_call.1} parent=5 // pred_fallthru
        _
    $region6: #{tpu_custom_call.1} parent=1 // loop_footer
      %s25 = sadd.s32 1, %s21
    $region7: #{tpu_custom_call.1} parent=1 // loop_footer_branch
      %20 = sbr.rel target = $region3
    $region8: #{tpu_custom_call.1} parent=1 // loop_exit
      _
    %4247 = vsyncpa [#allocation3], 1
    %s4248 = scalar_lea.sflag [#allocation3], 1
    %4249 = vsyncpa %s4248, 1
    %4250 = vsyncpa [#allocation4], 1
    %s4251 = scalar_lea.sflag [#allocation4], 1
    %4252 = vsyncpa %s4251, 1
    %4253 = vsyncpa [#allocation5], 1
    %s4254 = scalar_lea.sflag [#allocation5], 1
    %4255 = vsyncpa %s4254, 1

</llo_original>
